<compile_context>
chip_gen: v7x
topology: tpu7x:2x2x1
jax: 0.10.0
libtpu: 0.0.40
codegen_flags: <defaults>
</compile_context>

<pallas_src>
import jax
import jax.numpy as jnp
from jax.experimental import pallas as pl
from jax.experimental.pallas import tpu as pltpu

# ----------------------------- model config --------------------------------
B = 2            # batch
S = 8            # sequence length
H = 32           # hidden size
NH = 4           # num attention heads
D = H // NH      # head dim
MLP = 4 * H      # mlp hidden
LAYERS = 2       # transformer layers
VOCAB = 64       # vocab size
LORA_R = 4
LORA_ALPHA = 8
LORA_SCALE = LORA_ALPHA / LORA_R
LN_EPS = 1e-5
NEG_INF = -1e9
ATTN_SCALE = float(D) ** -0.5


# ------------------------------ fused kernel --------------------------------
def _layernorm(x, g, b):
    mu = jnp.mean(x, axis=-1, keepdims=True)
    var = jnp.mean((x - mu) ** 2, axis=-1, keepdims=True)
    return (x - mu) * jax.lax.rsqrt(var + LN_EPS) * g + b


def encoder_kernel(mask_ref, x0_ref,
                   ln1g_ref, ln1b_ref, qkvw_ref, qkvb_ref, ow_ref, ob_ref,
                   ln2g_ref, ln2b_ref, f1w_ref, f1b_ref, f2w_ref, f2b_ref,
                   lnfg_ref, lnfb_ref,
                   o_ref, attn_scr):
    """One grid step == one transformer layer. o_ref is the VMEM-resident
    residual stream [B*S, H]; final LayerNorm is applied at the last step."""
    layer = pl.program_id(0)

    @pl.when(layer == 0)
    def _init():
        o_ref[...] = x0_ref[...]

    x = o_ref[...]                                           # [B*S, H] f32

    # ---- self-attention block (pre-LN) ----
    xn = _layernorm(x, ln1g_ref[0], ln1b_ref[0])

    # fused QKV projection (LoRA already merged into q/v weights)
    qkv = jnp.dot(xn, qkvw_ref[0],
                  preferred_element_type=jnp.float32) + qkvb_ref[0]  # [B*S, 3H]
    q = qkv[:, 0:H] * ATTN_SCALE
    k = qkv[:, H:2 * H]
    v = qkv[:, 2 * H:3 * H]

    # attention bias computed in-kernel (causal + key padding), no HBM tensor
    qi = jax.lax.broadcasted_iota(jnp.int32, (S, S), 0)
    ki = jax.lax.broadcasted_iota(jnp.int32, (S, S), 1)
    causal = jnp.where(ki > qi, NEG_INF, 0.0)                # [S, S]
    pad = (1.0 - mask_ref[...]) * NEG_INF                    # [B, S]

    ow = ow_ref[0]                                           # [H, H]
    for b in range(B):                                       # static unroll
        bias_b = causal + pad[b:b + 1, :]                    # [S, S]
        out_b = None
        for h in range(NH):                                  # static unroll
            qh = q[b * S:(b + 1) * S, h * D:(h + 1) * D]     # [S, D]
            kh = k[b * S:(b + 1) * S, h * D:(h + 1) * D]
            vh = v[b * S:(b + 1) * S, h * D:(h + 1) * D]
            s = jnp.einsum("qd,kd->qk", qh, kh,
                           preferred_element_type=jnp.float32) + bias_b
            m = jnp.max(s, axis=-1, keepdims=True)
            p = jnp.exp(s - m)
            p = p * pl.reciprocal(jnp.sum(p, axis=-1, keepdims=True),
                                  approx=True)
            ctx = jnp.dot(p, vh, preferred_element_type=jnp.float32)   # [S, D]
            # o_proj folded per-head: concat(heads) @ Wo == sum_h ctx_h @ Wo[hD:(h+1)D]
            part = jnp.dot(ctx, ow[h * D:(h + 1) * D, :],
                           preferred_element_type=jnp.float32)         # [S, H]
            out_b = part if out_b is None else out_b + part
        attn_scr[pl.ds(b * S, S), :] = out_b

    # o_proj bias + residual (fused)
    x = x + attn_scr[...] + ob_ref[0]

    # ---- MLP block (pre-LN, quick-GELU), residual fused ----
    xn2 = _layernorm(x, ln2g_ref[0], ln2b_ref[0])
    hdn = jnp.dot(xn2, f1w_ref[0],
                  preferred_element_type=jnp.float32) + f1b_ref[0]
    hdn = hdn * jax.nn.sigmoid(1.702 * hdn)                  # CLIP quick_gelu
    x = x + jnp.dot(hdn, f2w_ref[0],
                    preferred_element_type=jnp.float32) + f2b_ref[0]

    o_ref[...] = x

    @pl.when(layer == pl.num_programs(0) - 1)
    def _final():
        o_ref[...] = _layernorm(x, lnfg_ref[...], lnfb_ref[...])


# ------------------------------ parameter init ------------------------------
def init_params(key):
    def nrm(key, shape, std=0.02):
        return jax.random.normal(key, shape, jnp.float32) * std

    keys = jax.random.split(key, 4 + LAYERS)
    params = {
        "tok_emb": nrm(keys[0], (VOCAB, H)),
        "pos_emb": nrm(keys[1], (S, H)),
        "lnf_g": jnp.ones((1, H), jnp.float32),
        "lnf_b": jnp.zeros((1, H), jnp.float32),
        "layers": [],
    }
    for li in range(LAYERS):
        k = jax.random.split(keys[4 + li], 12)
        layer = {
            "ln1_g": jnp.ones((1, H), jnp.float32),
            "ln1_b": jnp.zeros((1, H), jnp.float32),
            "ln2_g": jnp.ones((1, H), jnp.float32),
            "ln2_b": jnp.zeros((1, H), jnp.float32),
            "q_w": nrm(k[0], (H, H)), "q_b": jnp.zeros((1, H), jnp.float32),
            "k_w": nrm(k[1], (H, H)), "k_b": jnp.zeros((1, H), jnp.float32),
            "v_w": nrm(k[2], (H, H)), "v_b": jnp.zeros((1, H), jnp.float32),
            "o_w": nrm(k[3], (H, H)), "o_b": jnp.zeros((1, H), jnp.float32),
            # LoRA adapters (target_modules = ["q_proj", "v_proj"]).
            # NOTE: real LoRA inits B=0; nonzero here so the adapter path matters.
            "q_la": nrm(k[4], (H, LORA_R)), "q_lb": nrm(k[5], (LORA_R, H)),
            "v_la": nrm(k[6], (H, LORA_R)), "v_lb": nrm(k[7], (LORA_R, H)),
            "fc1_w": nrm(k[8], (H, MLP)), "fc1_b": jnp.zeros((1, MLP), jnp.float32),
            "fc2_w": nrm(k[9], (MLP, H)), "fc2_b": jnp.zeros((1, H), jnp.float32),
        }
        params["layers"].append(layer)
    return params


# ------------------------------- forward pass --------------------------------
def _stack(params, name):
    return jnp.stack([lyr[name] for lyr in params["layers"]])


def _merged_qkv(params):
    def merged(lyr, w, a, b):
        return lyr[w] + LORA_SCALE * (lyr[a] @ lyr[b])      # inference-time LoRA merge
    qkv_w = jnp.stack([
        jnp.concatenate([merged(l, "q_w", "q_la", "q_lb"),
                         l["k_w"],
                         merged(l, "v_w", "v_la", "v_lb")], axis=1)
        for l in params["layers"]])                          # [L, H, 3H]
    qkv_b = jnp.stack([
        jnp.concatenate([l["q_b"], l["k_b"], l["v_b"]], axis=1)
        for l in params["layers"]])                          # [L, 1, 3H]
    return qkv_w, qkv_b


def text_encoder_forward(params, input_ids, attention_mask):
    # TODO(synk): embedding lookup is a gather; kept in plain JAX glue.
    x0 = (params["tok_emb"][input_ids] + params["pos_emb"][None, :, :]
          ).reshape(B * S, H)
    mask_f = attention_mask.astype(jnp.float32)

    qkv_w, qkv_b = _merged_qkv(params)
    ln1_g, ln1_b = _stack(params, "ln1_g"), _stack(params, "ln1_b")
    ln2_g, ln2_b = _stack(params, "ln2_g"), _stack(params, "ln2_b")
    o_w, o_b = _stack(params, "o_w"), _stack(params, "o_b")
    fc1_w, fc1_b = _stack(params, "fc1_w"), _stack(params, "fc1_b")
    fc2_w, fc2_b = _stack(params, "fc2_w"), _stack(params, "fc2_b")

    def _const(shape):                       # resident across all layers
        return pl.BlockSpec(shape, lambda l: (0, 0))

    def _per_layer(arr):                     # [L, r, c] -> one layer per step
        return pl.BlockSpec((1,) + arr.shape[1:], lambda l: (l, 0, 0))

    grid_spec = pltpu.PrefetchScalarGridSpec(
        num_scalar_prefetch=0,
        grid=(LAYERS,),
        in_specs=[
            _const((B, S)),                  # attention mask
            _const((B * S, H)),              # initial embeddings
            _per_layer(ln1_g), _per_layer(ln1_b),
            _per_layer(qkv_w), _per_layer(qkv_b),
            _per_layer(o_w), _per_layer(o_b),
            _per_layer(ln2_g), _per_layer(ln2_b),
            _per_layer(fc1_w), _per_layer(fc1_b),
            _per_layer(fc2_w), _per_layer(fc2_b),
            _const((1, H)), _const((1, H)),  # final layernorm
        ],
        out_specs=pl.BlockSpec((B * S, H), lambda l: (0, 0)),
        scratch_shapes=[pltpu.VMEM((B * S, H), jnp.float32)],
    )

    out = pl.pallas_call(
        encoder_kernel,
        out_shape=jax.ShapeDtypeStruct((B * S, H), jnp.float32),
        grid_spec=grid_spec,
        compiler_params=pltpu.CompilerParams(
            dimension_semantics=("arbitrary",)),
    )(mask_f, x0,
      ln1_g, ln1_b, qkv_w, qkv_b, o_w, o_b,
      ln2_g, ln2_b, fc1_w, fc1_b, fc2_w, fc2_b,
      params["lnf_g"], params["lnf_b"])

    return out.reshape(B, S, H)              # last_hidden_state


# ---------------------------------- main -------------------------------------
if __name__ == "__main__":
    key = jax.random.PRNGKey(0)
    pkey, ikey = jax.random.split(key)
    params = init_params(pkey)

    input_ids = jax.random.randint(ikey, (B, S), 0, VOCAB, dtype=jnp.int32)
    attention_mask = jnp.ones((B, S), jnp.int32).at[1, -2:].set(0)  # pad last 2 of row 1

    fwd = jax.jit(text_encoder_forward)
    out = jax.block_until_ready(fwd(params, input_ids, attention_mask))

    assert out.shape == (B, S, H), out.shape
    assert bool(jnp.all(jnp.isfinite(out)))
    print("KERNEL_OK")
</pallas_src>

<mosaic_0001>
module attributes {stable_mosaic.version = 11 : i64} {
  func.func @encoder_kernel(%arg0: i32, %arg1: memref<2x8xf32, #tpu.memory_space<vmem>>, %arg2: memref<16x32xf32, #tpu.memory_space<vmem>>, %arg3: memref<1x1x32xf32, #tpu.memory_space<vmem>>, %arg4: memref<1x1x32xf32, #tpu.memory_space<vmem>>, %arg5: memref<1x32x96xf32, #tpu.memory_space<vmem>>, %arg6: memref<1x1x96xf32, #tpu.memory_space<vmem>>, %arg7: memref<1x32x32xf32, #tpu.memory_space<vmem>>, %arg8: memref<1x1x32xf32, #tpu.memory_space<vmem>>, %arg9: memref<1x1x32xf32, #tpu.memory_space<vmem>>, %arg10: memref<1x1x32xf32, #tpu.memory_space<vmem>>, %arg11: memref<1x32x128xf32, #tpu.memory_space<vmem>>, %arg12: memref<1x1x128xf32, #tpu.memory_space<vmem>>, %arg13: memref<1x128x32xf32, #tpu.memory_space<vmem>>, %arg14: memref<1x1x32xf32, #tpu.memory_space<vmem>>, %arg15: memref<1x32xf32, #tpu.memory_space<vmem>>, %arg16: memref<1x32xf32, #tpu.memory_space<vmem>>, %arg17: memref<16x32xf32, #tpu.memory_space<vmem>>, %arg18: memref<16x32xf32, #tpu.memory_space<vmem>>) attributes {dimension_semantics = [#tpu.dimension_semantics<arbitrary>], iteration_bounds = array<i64: 2>, scalar_prefetch = 0 : i64, scratch_operands = 1 : i64, tpu.core_type = #tpu.core_type<tc>, window_params = [{pipeline_mode = #tpu.pipeline_mode<synchronous>, transform_indices = @transform_0, window_bounds = array<i64: 2, 8>}, {pipeline_mode = #tpu.pipeline_mode<synchronous>, transform_indices = @transform_1, window_bounds = array<i64: 16, 32>}, {transform_indices = @transform_2, window_bounds = array<i64: 1, 1, 32>}, {transform_indices = @transform_3, window_bounds = array<i64: 1, 1, 32>}, {transform_indices = @transform_4, window_bounds = array<i64: 1, 32, 96>}, {transform_indices = @transform_5, window_bounds = array<i64: 1, 1, 96>}, {transform_indices = @transform_6, window_bounds = array<i64: 1, 32, 32>}, {transform_indices = @transform_7, window_bounds = array<i64: 1, 1, 32>}, {transform_indices = @transform_8, window_bounds = array<i64: 1, 1, 32>}, {transform_indices = @transform_9, window_bounds = array<i64: 1, 1, 32>}, {transform_indices = @transform_10, window_bounds = array<i64: 1, 32, 128>}, {transform_indices = @transform_11, window_bounds = array<i64: 1, 1, 128>}, {transform_indices = @transform_12, window_bounds = array<i64: 1, 128, 32>}, {transform_indices = @transform_13, window_bounds = array<i64: 1, 1, 32>}, {pipeline_mode = #tpu.pipeline_mode<synchronous>, transform_indices = @transform_14, window_bounds = array<i64: 1, 32>}, {pipeline_mode = #tpu.pipeline_mode<synchronous>, transform_indices = @transform_15, window_bounds = array<i64: 1, 32>}, {pipeline_mode = #tpu.pipeline_mode<synchronous>, transform_indices = @transform_16, window_bounds = array<i64: 16, 32>}]} {
    %c0_i32 = arith.constant 0 : i32
    %0 = arith.cmpi eq, %arg0, %c0_i32 : i32
    %1 = arith.extui %0 : i1 to i32
    %c0_i32_0 = arith.constant 0 : i32
    %2 = arith.cmpi ne, %1, %c0_i32_0 : i32
    scf.if %2 {
      %c0_107 = arith.constant 0 : index
      %c0_108 = arith.constant 0 : index
      %272 = vector.load %arg2[%c0_107, %c0_108] : memref<16x32xf32, #tpu.memory_space<vmem>>, vector<16x32xf32>
      %c0_109 = arith.constant 0 : index
      %c0_110 = arith.constant 0 : index
      %273 = vector.load %arg17[%c0_109, %c0_110] : memref<16x32xf32, #tpu.memory_space<vmem>>, vector<16x32xf32>
      tpu.vector_store %arg17[%c0_109, %c0_110], %272 {strides = array<i32>} : memref<16x32xf32, #tpu.memory_space<vmem>>, vector<16x32xf32>,
    } else {
    }
    %c0 = arith.constant 0 : index
    %c0_1 = arith.constant 0 : index
    %3 = vector.load %arg17[%c0, %c0_1] : memref<16x32xf32, #tpu.memory_space<vmem>>, vector<16x32xf32>
    %c0_2 = arith.constant 0 : index
    %c0_3 = arith.constant 0 : index
    %c0_4 = arith.constant 0 : index
    %4 = vector.load %arg3[%c0_2, %c0_3, %c0_4] : memref<1x1x32xf32, #tpu.memory_space<vmem>>, vector<1x1x32xf32>
    %5 = vector.shape_cast %4 : vector<1x1x32xf32> to vector<1x32xf32>
    %c0_5 = arith.constant 0 : index
    %c0_6 = arith.constant 0 : index
    %c0_7 = arith.constant 0 : index
    %6 = vector.load %arg4[%c0_5, %c0_6, %c0_7] : memref<1x1x32xf32, #tpu.memory_space<vmem>>, vector<1x1x32xf32>
    %7 = vector.shape_cast %6 : vector<1x1x32xf32> to vector<1x32xf32>
    %cst = arith.constant dense<0.000000e+00> : vector<16xf32>
    %8 = vector.multi_reduction <add>, %3, %cst [1] : vector<16x32xf32> to vector<16xf32>
    %9 = vector.shape_cast %8 : vector<16xf32> to vector<16x1xf32>
    %cst_8 = arith.constant 3.200000e+01 : f32
    %10 = vector.broadcast %cst_8 : f32 to vector<16x1xf32>
    %11 = arith.divf %9, %10 : vector<16x1xf32>
    %12 = vector.broadcast %11 : vector<16x1xf32> to vector<16x32xf32>
    %13 = arith.subf %3, %12 : vector<16x32xf32>
    %14 = arith.mulf %13, %13 : vector<16x32xf32>
    %cst_9 = arith.constant dense<0.000000e+00> : vector<16xf32>
    %15 = vector.multi_reduction <add>, %14, %cst_9 [1] : vector<16x32xf32> to vector<16xf32>
    %16 = vector.shape_cast %15 : vector<16xf32> to vector<16x1xf32>
    %cst_10 = arith.constant 3.200000e+01 : f32
    %17 = vector.broadcast %cst_10 : f32 to vector<16x1xf32>
    %18 = arith.divf %16, %17 : vector<16x1xf32>
    %19 = vector.broadcast %11 : vector<16x1xf32> to vector<16x32xf32>
    %20 = arith.subf %3, %19 : vector<16x32xf32>
    %cst_11 = arith.constant 9.99999974E-6 : f32
    %21 = vector.broadcast %cst_11 : f32 to vector<16x1xf32>
    %22 = arith.addf %18, %21 : vector<16x1xf32>
    %23 = math.rsqrt %22 : vector<16x1xf32>
    %24 = vector.broadcast %23 : vector<16x1xf32> to vector<16x32xf32>
    %25 = arith.mulf %20, %24 : vector<16x32xf32>
    %26 = vector.broadcast %5 : vector<1x32xf32> to vector<16x32xf32>
    %27 = arith.mulf %25, %26 : vector<16x32xf32>
    %28 = vector.broadcast %7 : vector<1x32xf32> to vector<16x32xf32>
    %29 = arith.addf %27, %28 : vector<16x32xf32>
    %c0_12 = arith.constant 0 : index
    %c0_13 = arith.constant 0 : index
    %c0_14 = arith.constant 0 : index
    %30 = vector.load %arg5[%c0_12, %c0_13, %c0_14] : memref<1x32x96xf32, #tpu.memory_space<vmem>>, vector<1x32x96xf32>
    %31 = vector.shape_cast %30 : vector<1x32x96xf32> to vector<32x96xf32>
    %cst_15 = arith.constant dense<0.000000e+00> : vector<16x96xf32>
    %32 = tpu.matmul %29, %31, %cst_15 {dimension_numbers = #tpu.dot_dimension_numbers<[1], [0], [0], [1], [0, 0, 1, 1], [], []>} : vector<16x32xf32>, vector<32x96xf32>, vector<16x96xf32> -> vector<16x96xf32>
    %c0_16 = arith.constant 0 : index
    %c0_17 = arith.constant 0 : index
    %c0_18 = arith.constant 0 : index
    %33 = vector.load %arg6[%c0_16, %c0_17, %c0_18] : memref<1x1x96xf32, #tpu.memory_space<vmem>>, vector<1x1x96xf32>
    %34 = vector.shape_cast %33 : vector<1x1x96xf32> to vector<1x96xf32>
    %35 = vector.broadcast %34 : vector<1x96xf32> to vector<16x96xf32>
    %36 = arith.addf %32, %35 : vector<16x96xf32>
    %37 = vector.extract_strided_slice %36 {offsets = [0, 0], sizes = [16, 32], strides = [1, 1]} : vector<16x96xf32> to vector<16x32xf32>
    %cst_19 = arith.constant 0.353553385 : f32
    %38 = vector.broadcast %cst_19 : f32 to vector<16x32xf32>
    %39 = arith.mulf %37, %38 : vector<16x32xf32>
    %40 = vector.extract_strided_slice %36 {offsets = [0, 32], sizes = [16, 32], strides = [1, 1]} : vector<16x96xf32> to vector<16x32xf32>
    %41 = vector.extract_strided_slice %36 {offsets = [0, 64], sizes = [16, 32], strides = [1, 1]} : vector<16x96xf32> to vector<16x32xf32>
    %42 = tpu.iota {dimensions = array<i32: 0>} : vector<8x8xi32>
    %43 = tpu.iota {dimensions = array<i32: 1>} : vector<8x8xi32>
    %44 = arith.cmpi sgt, %43, %42 : vector<8x8xi32>
    %cst_20 = arith.constant -1.000000e+09 : f32
    %cst_21 = arith.constant 0.000000e+00 : f32
    %45 = vector.broadcast %cst_20 : f32 to vector<8x8xf32>
    %46 = vector.broadcast %cst_21 : f32 to vector<8x8xf32>
    %47 = arith.select %44, %45, %46 : vector<8x8xi1>, vector<8x8xf32>
    %c0_22 = arith.constant 0 : index
    %c0_23 = arith.constant 0 : index
    %48 = vector.load %arg1[%c0_22, %c0_23] : memref<2x8xf32, #tpu.memory_space<vmem>>, vector<2x8xf32>
    %cst_24 = arith.constant 1.000000e+00 : f32
    %49 = vector.broadcast %cst_24 : f32 to vector<2x8xf32>
    %50 = arith.subf %49, %48 : vector<2x8xf32>
    %cst_25 = arith.constant -1.000000e+09 : f32
    %51 = vector.broadcast %cst_25 : f32 to vector<2x8xf32>
    %52 = arith.mulf %50, %51 : vector<2x8xf32>
    %c0_26 = arith.constant 0 : index
    %c0_27 = arith.constant 0 : index
    %c0_28 = arith.constant 0 : index
    %53 = vector.load %arg7[%c0_26, %c0_27, %c0_28] : memref<1x32x32xf32, #tpu.memory_space<vmem>>, vector<1x32x32xf32>
    %54 = vector.shape_cast %53 : vector<1x32x32xf32> to vector<32x32xf32>
    %55 = vector.extract_strided_slice %52 {offsets = [0, 0], sizes = [1, 8], strides = [1, 1]} : vector<2x8xf32> to vector<1x8xf32>
    %56 = vector.broadcast %55 : vector<1x8xf32> to vector<8x8xf32>
    %57 = arith.addf %47, %56 : vector<8x8xf32>
    %58 = vector.extract_strided_slice %39 {offsets = [0, 0], sizes = [8, 8], strides = [1, 1]} : vector<16x32xf32> to vector<8x8xf32>
    %59 = vector.extract_strided_slice %40 {offsets = [0, 0], sizes = [8, 8], strides = [1, 1]} : vector<16x32xf32> to vector<8x8xf32>
    %60 = vector.extract_strided_slice %41 {offsets = [0, 0], sizes = [8, 8], strides = [1, 1]} : vector<16x32xf32> to vector<8x8xf32>
    "tpu.trace_start"() <{level = 10 : i32, message = "qd,kd->qk"}> : () -> ()
    %cst_29 = arith.constant dense<0.000000e+00> : vector<8x8xf32>
    %61 = tpu.matmul %58, %59, %cst_29 {dimension_numbers = #tpu.dot_dimension_numbers<[1], [1], [0], [0], [0, 0, 1, 0], [], []>} : vector<8x8xf32>, vector<8x8xf32>, vector<8x8xf32> -> vector<8x8xf32>
    "tpu.trace_stop"() : () -> ()
    %62 = arith.addf %61, %57 : vector<8x8xf32>
    %cst_30 = arith.constant dense<0xFF800000> : vector<8xf32>
    %63 = vector.multi_reduction <maximumf>, %62, %cst_30 [1] : vector<8x8xf32> to vector<8xf32>
    %64 = vector.shape_cast %63 : vector<8xf32> to vector<8x1xf32>
    %65 = vector.broadcast %64 : vector<8x1xf32> to vector<8x8xf32>
    %66 = arith.subf %62, %65 : vector<8x8xf32>
    %67 = math.exp %66 : vector<8x8xf32>
    %cst_31 = arith.constant dense<0.000000e+00> : vector<8xf32>
    %68 = vector.multi_reduction <add>, %67, %cst_31 [1] : vector<8x8xf32> to vector<8xf32>
    %69 = vector.shape_cast %68 : vector<8xf32> to vector<8x1xf32>
    %70 = tpu.reciprocal %69 {approx = true} : vector<8x1xf32> -> vector<8x1xf32>
    %71 = vector.broadcast %70 : vector<8x1xf32> to vector<8x8xf32>
    %72 = arith.mulf %67, %71 : vector<8x8xf32>
    %cst_32 = arith.constant dense<0.000000e+00> : vector<8x8xf32>
    %73 = tpu.matmul %72, %60, %cst_32 {dimension_numbers = #tpu.dot_dimension_numbers<[1], [0], [0], [1], [0, 0, 1, 1], [], []>} : vector<8x8xf32>, vector<8x8xf32>, vector<8x8xf32> -> vector<8x8xf32>
    %74 = vector.extract_strided_slice %54 {offsets = [0, 0], sizes = [8, 32], strides = [1, 1]} : vector<32x32xf32> to vector<8x32xf32>
    %cst_33 = arith.constant dense<0.000000e+00> : vector<8x32xf32>
    %75 = tpu.matmul %73, %74, %cst_33 {dimension_numbers = #tpu.dot_dimension_numbers<[1], [0], [0], [1], [0, 0, 1, 1], [], []>} : vector<8x8xf32>, vector<8x32xf32>, vector<8x32xf32> -> vector<8x32xf32>
    %76 = vector.extract_strided_slice %39 {offsets = [0, 8], sizes = [8, 8], strides = [1, 1]} : vector<16x32xf32> to vector<8x8xf32>
    %77 = vector.extract_strided_slice %40 {offsets = [0, 8], sizes = [8, 8], strides = [1, 1]} : vector<16x32xf32> to vector<8x8xf32>
    %78 = vector.extract_strided_slice %41 {offsets = [0, 8], sizes = [8, 8], strides = [1, 1]} : vector<16x32xf32> to vector<8x8xf32>
    "tpu.trace_start"() <{level = 10 : i32, message = "qd,kd->qk"}> : () -> ()
    %cst_34 = arith.constant dense<0.000000e+00> : vector<8x8xf32>
    %79 = tpu.matmul %76, %77, %cst_34 {dimension_numbers = #tpu.dot_dimension_numbers<[1], [1], [0], [0], [0, 0, 1, 0], [], []>} : vector<8x8xf32>, vector<8x8xf32>, vector<8x8xf32> -> vector<8x8xf32>
    "tpu.trace_stop"() : () -> ()
    %80 = arith.addf %79, %57 : vector<8x8xf32>
    %cst_35 = arith.constant dense<0xFF800000> : vector<8xf32>
    %81 = vector.multi_reduction <maximumf>, %80, %cst_35 [1] : vector<8x8xf32> to vector<8xf32>
    %82 = vector.shape_cast %81 : vector<8xf32> to vector<8x1xf32>
    %83 = vector.broadcast %82 : vector<8x1xf32> to vector<8x8xf32>
    %84 = arith.subf %80, %83 : vector<8x8xf32>
    %85 = math.exp %84 : vector<8x8xf32>
    %cst_36 = arith.constant dense<0.000000e+00> : vector<8xf32>
    %86 = vector.multi_reduction <add>, %85, %cst_36 [1] : vector<8x8xf32> to vector<8xf32>
    %87 = vector.shape_cast %86 : vector<8xf32> to vector<8x1xf32>
    %88 = tpu.reciprocal %87 {approx = true} : vector<8x1xf32> -> vector<8x1xf32>
    %89 = vector.broadcast %88 : vector<8x1xf32> to vector<8x8xf32>
    %90 = arith.mulf %85, %89 : vector<8x8xf32>
    %cst_37 = arith.constant dense<0.000000e+00> : vector<8x8xf32>
    %91 = tpu.matmul %90, %78, %cst_37 {dimension_numbers = #tpu.dot_dimension_numbers<[1], [0], [0], [1], [0, 0, 1, 1], [], []>} : vector<8x8xf32>, vector<8x8xf32>, vector<8x8xf32> -> vector<8x8xf32>
    %92 = vector.extract_strided_slice %54 {offsets = [8, 0], sizes = [8, 32], strides = [1, 1]} : vector<32x32xf32> to vector<8x32xf32>
    %cst_38 = arith.constant dense<0.000000e+00> : vector<8x32xf32>
    %93 = tpu.matmul %91, %92, %cst_38 {dimension_numbers = #tpu.dot_dimension_numbers<[1], [0], [0], [1], [0, 0, 1, 1], [], []>} : vector<8x8xf32>, vector<8x32xf32>, vector<8x32xf32> -> vector<8x32xf32>
    %94 = arith.addf %75, %93 : vector<8x32xf32>
    %95 = vector.extract_strided_slice %39 {offsets = [0, 16], sizes = [8, 8], strides = [1, 1]} : vector<16x32xf32> to vector<8x8xf32>
    %96 = vector.extract_strided_slice %40 {offsets = [0, 16], sizes = [8, 8], strides = [1, 1]} : vector<16x32xf32> to vector<8x8xf32>
    %97 = vector.extract_strided_slice %41 {offsets = [0, 16], sizes = [8, 8], strides = [1, 1]} : vector<16x32xf32> to vector<8x8xf32>
    "tpu.trace_start"() <{level = 10 : i32, message = "qd,kd->qk"}> : () -> ()
    %cst_39 = arith.constant dense<0.000000e+00> : vector<8x8xf32>
    %98 = tpu.matmul %95, %96, %cst_39 {dimension_numbers = #tpu.dot_dimension_numbers<[1], [1], [0], [0], [0, 0, 1, 0], [], []>} : vector<8x8xf32>, vector<8x8xf32>, vector<8x8xf32> -> vector<8x8xf32>
    "tpu.trace_stop"() : () -> ()
    %99 = arith.addf %98, %57 : vector<8x8xf32>
    %cst_40 = arith.constant dense<0xFF800000> : vector<8xf32>
    %100 = vector.multi_reduction <maximumf>, %99, %cst_40 [1] : vector<8x8xf32> to vector<8xf32>
    %101 = vector.shape_cast %100 : vector<8xf32> to vector<8x1xf32>
    %102 = vector.broadcast %101 : vector<8x1xf32> to vector<8x8xf32>
    %103 = arith.subf %99, %102 : vector<8x8xf32>
    %104 = math.exp %103 : vector<8x8xf32>
    %cst_41 = arith.constant dense<0.000000e+00> : vector<8xf32>
    %105 = vector.multi_reduction <add>, %104, %cst_41 [1] : vector<8x8xf32> to vector<8xf32>
    %106 = vector.shape_cast %105 : vector<8xf32> to vector<8x1xf32>
    %107 = tpu.reciprocal %106 {approx = true} : vector<8x1xf32> -> vector<8x1xf32>
    %108 = vector.broadcast %107 : vector<8x1xf32> to vector<8x8xf32>
    %109 = arith.mulf %104, %108 : vector<8x8xf32>
    %cst_42 = arith.constant dense<0.000000e+00> : vector<8x8xf32>
    %110 = tpu.matmul %109, %97, %cst_42 {dimension_numbers = #tpu.dot_dimension_numbers<[1], [0], [0], [1], [0, 0, 1, 1], [], []>} : vector<8x8xf32>, vector<8x8xf32>, vector<8x8xf32> -> vector<8x8xf32>
    %111 = vector.extract_strided_slice %54 {offsets = [16, 0], sizes = [8, 32], strides = [1, 1]} : vector<32x32xf32> to vector<8x32xf32>
    %cst_43 = arith.constant dense<0.000000e+00> : vector<8x32xf32>
    %112 = tpu.matmul %110, %111, %cst_43 {dimension_numbers = #tpu.dot_dimension_numbers<[1], [0], [0], [1], [0, 0, 1, 1], [], []>} : vector<8x8xf32>, vector<8x32xf32>, vector<8x32xf32> -> vector<8x32xf32>
    %113 = arith.addf %94, %112 : vector<8x32xf32>
    %114 = vector.extract_strided_slice %39 {offsets = [0, 24], sizes = [8, 8], strides = [1, 1]} : vector<16x32xf32> to vector<8x8xf32>
    %115 = vector.extract_strided_slice %40 {offsets = [0, 24], sizes = [8, 8], strides = [1, 1]} : vector<16x32xf32> to vector<8x8xf32>
    %116 = vector.extract_strided_slice %41 {offsets = [0, 24], sizes = [8, 8], strides = [1, 1]} : vector<16x32xf32> to vector<8x8xf32>
    "tpu.trace_start"() <{level = 10 : i32, message = "qd,kd->qk"}> : () -> ()
    %cst_44 = arith.constant dense<0.000000e+00> : vector<8x8xf32>
    %117 = tpu.matmul %114, %115, %cst_44 {dimension_numbers = #tpu.dot_dimension_numbers<[1], [1], [0], [0], [0, 0, 1, 0], [], []>} : vector<8x8xf32>, vector<8x8xf32>, vector<8x8xf32> -> vector<8x8xf32>
    "tpu.trace_stop"() : () -> ()
    %118 = arith.addf %117, %57 : vector<8x8xf32>
    %cst_45 = arith.constant dense<0xFF800000> : vector<8xf32>
    %119 = vector.multi_reduction <maximumf>, %118, %cst_45 [1] : vector<8x8xf32> to vector<8xf32>
    %120 = vector.shape_cast %119 : vector<8xf32> to vector<8x1xf32>
    %121 = vector.broadcast %120 : vector<8x1xf32> to vector<8x8xf32>
    %122 = arith.subf %118, %121 : vector<8x8xf32>
    %123 = math.exp %122 : vector<8x8xf32>
    %cst_46 = arith.constant dense<0.000000e+00> : vector<8xf32>
    %124 = vector.multi_reduction <add>, %123, %cst_46 [1] : vector<8x8xf32> to vector<8xf32>
    %125 = vector.shape_cast %124 : vector<8xf32> to vector<8x1xf32>
    %126 = tpu.reciprocal %125 {approx = true} : vector<8x1xf32> -> vector<8x1xf32>
    %127 = vector.broadcast %126 : vector<8x1xf32> to vector<8x8xf32>
    %128 = arith.mulf %123, %127 : vector<8x8xf32>
    %cst_47 = arith.constant dense<0.000000e+00> : vector<8x8xf32>
    %129 = tpu.matmul %128, %116, %cst_47 {dimension_numbers = #tpu.dot_dimension_numbers<[1], [0], [0], [1], [0, 0, 1, 1], [], []>} : vector<8x8xf32>, vector<8x8xf32>, vector<8x8xf32> -> vector<8x8xf32>
    %130 = vector.extract_strided_slice %54 {offsets = [24, 0], sizes = [8, 32], strides = [1, 1]} : vector<32x32xf32> to vector<8x32xf32>
    %cst_48 = arith.constant dense<0.000000e+00> : vector<8x32xf32>
    %131 = tpu.matmul %129, %130, %cst_48 {dimension_numbers = #tpu.dot_dimension_numbers<[1], [0], [0], [1], [0, 0, 1, 1], [], []>} : vector<8x8xf32>, vector<8x32xf32>, vector<8x32xf32> -> vector<8x32xf32>
    %132 = arith.addf %113, %131 : vector<8x32xf32>
    %c0_49 = arith.constant 0 : index
    %c0_50 = arith.constant 0 : index
    %133 = vector.load %arg18[%c0_49, %c0_50] : memref<16x32xf32, #tpu.memory_space<vmem>>, vector<8x32xf32>
    tpu.vector_store %arg18[%c0_49, %c0_50], %132 {strides = array<i32>} : memref<16x32xf32, #tpu.memory_space<vmem>>, vector<8x32xf32>,
    %134 = vector.extract_strided_slice %52 {offsets = [1, 0], sizes = [1, 8], strides = [1, 1]} : vector<2x8xf32> to vector<1x8xf32>
    %135 = vector.broadcast %134 : vector<1x8xf32> to vector<8x8xf32>
    %136 = arith.addf %47, %135 : vector<8x8xf32>
    %137 = vector.extract_strided_slice %39 {offsets = [8, 0], sizes = [8, 8], strides = [1, 1]} : vector<16x32xf32> to vector<8x8xf32>
    %138 = vector.extract_strided_slice %40 {offsets = [8, 0], sizes = [8, 8], strides = [1, 1]} : vector<16x32xf32> to vector<8x8xf32>
    %139 = vector.extract_strided_slice %41 {offsets = [8, 0], sizes = [8, 8], strides = [1, 1]} : vector<16x32xf32> to vector<8x8xf32>
    "tpu.trace_start"() <{level = 10 : i32, message = "qd,kd->qk"}> : () -> ()
    %cst_51 = arith.constant dense<0.000000e+00> : vector<8x8xf32>
    %140 = tpu.matmul %137, %138, %cst_51 {dimension_numbers = #tpu.dot_dimension_numbers<[1], [1], [0], [0], [0, 0, 1, 0], [], []>} : vector<8x8xf32>, vector<8x8xf32>, vector<8x8xf32> -> vector<8x8xf32>
    "tpu.trace_stop"() : () -> ()
    %141 = arith.addf %140, %136 : vector<8x8xf32>
    %cst_52 = arith.constant dense<0xFF800000> : vector<8xf32>
    %142 = vector.multi_reduction <maximumf>, %141, %cst_52 [1] : vector<8x8xf32> to vector<8xf32>
    %143 = vector.shape_cast %142 : vector<8xf32> to vector<8x1xf32>
    %144 = vector.broadcast %143 : vector<8x1xf32> to vector<8x8xf32>
    %145 = arith.subf %141, %144 : vector<8x8xf32>
    %146 = math.exp %145 : vector<8x8xf32>
    %cst_53 = arith.constant dense<0.000000e+00> : vector<8xf32>
    %147 = vector.multi_reduction <add>, %146, %cst_53 [1] : vector<8x8xf32> to vector<8xf32>
    %148 = vector.shape_cast %147 : vector<8xf32> to vector<8x1xf32>
    %149 = tpu.reciprocal %148 {approx = true} : vector<8x1xf32> -> vector<8x1xf32>
    %150 = vector.broadcast %149 : vector<8x1xf32> to vector<8x8xf32>
    %151 = arith.mulf %146, %150 : vector<8x8xf32>
    %cst_54 = arith.constant dense<0.000000e+00> : vector<8x8xf32>
    %152 = tpu.matmul %151, %139, %cst_54 {dimension_numbers = #tpu.dot_dimension_numbers<[1], [0], [0], [1], [0, 0, 1, 1], [], []>} : vector<8x8xf32>, vector<8x8xf32>, vector<8x8xf32> -> vector<8x8xf32>
    %153 = vector.extract_strided_slice %54 {offsets = [0, 0], sizes = [8, 32], strides = [1, 1]} : vector<32x32xf32> to vector<8x32xf32>
    %cst_55 = arith.constant dense<0.000000e+00> : vector<8x32xf32>
    %154 = tpu.matmul %152, %153, %cst_55 {dimension_numbers = #tpu.dot_dimension_numbers<[1], [0], [0], [1], [0, 0, 1, 1], [], []>} : vector<8x8xf32>, vector<8x32xf32>, vector<8x32xf32> -> vector<8x32xf32>
    %155 = vector.extract_strided_slice %39 {offsets = [8, 8], sizes = [8, 8], strides = [1, 1]} : vector<16x32xf32> to vector<8x8xf32>
    %156 = vector.extract_strided_slice %40 {offsets = [8, 8], sizes = [8, 8], strides = [1, 1]} : vector<16x32xf32> to vector<8x8xf32>
    %157 = vector.extract_strided_slice %41 {offsets = [8, 8], sizes = [8, 8], strides = [1, 1]} : vector<16x32xf32> to vector<8x8xf32>
    "tpu.trace_start"() <{level = 10 : i32, message = "qd,kd->qk"}> : () -> ()
    %cst_56 = arith.constant dense<0.000000e+00> : vector<8x8xf32>
    %158 = tpu.matmul %155, %156, %cst_56 {dimension_numbers = #tpu.dot_dimension_numbers<[1], [1], [0], [0], [0, 0, 1, 0], [], []>} : vector<8x8xf32>, vector<8x8xf32>, vector<8x8xf32> -> vector<8x8xf32>
    "tpu.trace_stop"() : () -> ()
    %159 = arith.addf %158, %136 : vector<8x8xf32>
    %cst_57 = arith.constant dense<0xFF800000> : vector<8xf32>
    %160 = vector.multi_reduction <maximumf>, %159, %cst_57 [1] : vector<8x8xf32> to vector<8xf32>
    %161 = vector.shape_cast %160 : vector<8xf32> to vector<8x1xf32>
    %162 = vector.broadcast %161 : vector<8x1xf32> to vector<8x8xf32>
    %163 = arith.subf %159, %162 : vector<8x8xf32>
    %164 = math.exp %163 : vector<8x8xf32>
    %cst_58 = arith.constant dense<0.000000e+00> : vector<8xf32>
    %165 = vector.multi_reduction <add>, %164, %cst_58 [1] : vector<8x8xf32> to vector<8xf32>
    %166 = vector.shape_cast %165 : vector<8xf32> to vector<8x1xf32>
    %167 = tpu.reciprocal %166 {approx = true} : vector<8x1xf32> -> vector<8x1xf32>
    %168 = vector.broadcast %167 : vector<8x1xf32> to vector<8x8xf32>
    %169 = arith.mulf %164, %168 : vector<8x8xf32>
    %cst_59 = arith.constant dense<0.000000e+00> : vector<8x8xf32>
    %170 = tpu.matmul %169, %157, %cst_59 {dimension_numbers = #tpu.dot_dimension_numbers<[1], [0], [0], [1], [0, 0, 1, 1], [], []>} : vector<8x8xf32>, vector<8x8xf32>, vector<8x8xf32> -> vector<8x8xf32>
    %171 = vector.extract_strided_slice %54 {offsets = [8, 0], sizes = [8, 32], strides = [1, 1]} : vector<32x32xf32> to vector<8x32xf32>
    %cst_60 = arith.constant dense<0.000000e+00> : vector<8x32xf32>
    %172 = tpu.matmul %170, %171, %cst_60 {dimension_numbers = #tpu.dot_dimension_numbers<[1], [0], [0], [1], [0, 0, 1, 1], [], []>} : vector<8x8xf32>, vector<8x32xf32>, vector<8x32xf32> -> vector<8x32xf32>
    %173 = arith.addf %154, %172 : vector<8x32xf32>
    %174 = vector.extract_strided_slice %39 {offsets = [8, 16], sizes = [8, 8], strides = [1, 1]} : vector<16x32xf32> to vector<8x8xf32>
    %175 = vector.extract_strided_slice %40 {offsets = [8, 16], sizes = [8, 8], strides = [1, 1]} : vector<16x32xf32> to vector<8x8xf32>
    %176 = vector.extract_strided_slice %41 {offsets = [8, 16], sizes = [8, 8], strides = [1, 1]} : vector<16x32xf32> to vector<8x8xf32>
    "tpu.trace_start"() <{level = 10 : i32, message = "qd,kd->qk"}> : () -> ()
    %cst_61 = arith.constant dense<0.000000e+00> : vector<8x8xf32>
    %177 = tpu.matmul %174, %175, %cst_61 {dimension_numbers = #tpu.dot_dimension_numbers<[1], [1], [0], [0], [0, 0, 1, 0], [], []>} : vector<8x8xf32>, vector<8x8xf32>, vector<8x8xf32> -> vector<8x8xf32>
    "tpu.trace_stop"() : () -> ()
    %178 = arith.addf %177, %136 : vector<8x8xf32>
    %cst_62 = arith.constant dense<0xFF800000> : vector<8xf32>
    %179 = vector.multi_reduction <maximumf>, %178, %cst_62 [1] : vector<8x8xf32> to vector<8xf32>
    %180 = vector.shape_cast %179 : vector<8xf32> to vector<8x1xf32>
    %181 = vector.broadcast %180 : vector<8x1xf32> to vector<8x8xf32>
    %182 = arith.subf %178, %181 : vector<8x8xf32>
    %183 = math.exp %182 : vector<8x8xf32>
    %cst_63 = arith.constant dense<0.000000e+00> : vector<8xf32>
    %184 = vector.multi_reduction <add>, %183, %cst_63 [1] : vector<8x8xf32> to vector<8xf32>
    %185 = vector.shape_cast %184 : vector<8xf32> to vector<8x1xf32>
    %186 = tpu.reciprocal %185 {approx = true} : vector<8x1xf32> -> vector<8x1xf32>
    %187 = vector.broadcast %186 : vector<8x1xf32> to vector<8x8xf32>
    %188 = arith.mulf %183, %187 : vector<8x8xf32>
    %cst_64 = arith.constant dense<0.000000e+00> : vector<8x8xf32>
    %189 = tpu.matmul %188, %176, %cst_64 {dimension_numbers = #tpu.dot_dimension_numbers<[1], [0], [0], [1], [0, 0, 1, 1], [], []>} : vector<8x8xf32>, vector<8x8xf32>, vector<8x8xf32> -> vector<8x8xf32>
    %190 = vector.extract_strided_slice %54 {offsets = [16, 0], sizes = [8, 32], strides = [1, 1]} : vector<32x32xf32> to vector<8x32xf32>
    %cst_65 = arith.constant dense<0.000000e+00> : vector<8x32xf32>
    %191 = tpu.matmul %189, %190, %cst_65 {dimension_numbers = #tpu.dot_dimension_numbers<[1], [0], [0], [1], [0, 0, 1, 1], [], []>} : vector<8x8xf32>, vector<8x32xf32>, vector<8x32xf32> -> vector<8x32xf32>
    %192 = arith.addf %173, %191 : vector<8x32xf32>
    %193 = vector.extract_strided_slice %39 {offsets = [8, 24], sizes = [8, 8], strides = [1, 1]} : vector<16x32xf32> to vector<8x8xf32>
    %194 = vector.extract_strided_slice %40 {offsets = [8, 24], sizes = [8, 8], strides = [1, 1]} : vector<16x32xf32> to vector<8x8xf32>
    %195 = vector.extract_strided_slice %41 {offsets = [8, 24], sizes = [8, 8], strides = [1, 1]} : vector<16x32xf32> to vector<8x8xf32>
    "tpu.trace_start"() <{level = 10 : i32, message = "qd,kd->qk"}> : () -> ()
    %cst_66 = arith.constant dense<0.000000e+00> : vector<8x8xf32>
    %196 = tpu.matmul %193, %194, %cst_66 {dimension_numbers = #tpu.dot_dimension_numbers<[1], [1], [0], [0], [0, 0, 1, 0], [], []>} : vector<8x8xf32>, vector<8x8xf32>, vector<8x8xf32> -> vector<8x8xf32>
    "tpu.trace_stop"() : () -> ()
    %197 = arith.addf %196, %136 : vector<8x8xf32>
    %cst_67 = arith.constant dense<0xFF800000> : vector<8xf32>
    %198 = vector.multi_reduction <maximumf>, %197, %cst_67 [1] : vector<8x8xf32> to vector<8xf32>
    %199 = vector.shape_cast %198 : vector<8xf32> to vector<8x1xf32>
    %200 = vector.broadcast %199 : vector<8x1xf32> to vector<8x8xf32>
    %201 = arith.subf %197, %200 : vector<8x8xf32>
    %202 = math.exp %201 : vector<8x8xf32>
    %cst_68 = arith.constant dense<0.000000e+00> : vector<8xf32>
    %203 = vector.multi_reduction <add>, %202, %cst_68 [1] : vector<8x8xf32> to vector<8xf32>
    %204 = vector.shape_cast %203 : vector<8xf32> to vector<8x1xf32>
    %205 = tpu.reciprocal %204 {approx = true} : vector<8x1xf32> -> vector<8x1xf32>
    %206 = vector.broadcast %205 : vector<8x1xf32> to vector<8x8xf32>
    %207 = arith.mulf %202, %206 : vector<8x8xf32>
    %cst_69 = arith.constant dense<0.000000e+00> : vector<8x8xf32>
    %208 = tpu.matmul %207, %195, %cst_69 {dimension_numbers = #tpu.dot_dimension_numbers<[1], [0], [0], [1], [0, 0, 1, 1], [], []>} : vector<8x8xf32>, vector<8x8xf32>, vector<8x8xf32> -> vector<8x8xf32>
    %209 = vector.extract_strided_slice %54 {offsets = [24, 0], sizes = [8, 32], strides = [1, 1]} : vector<32x32xf32> to vector<8x32xf32>
    %cst_70 = arith.constant dense<0.000000e+00> : vector<8x32xf32>
    %210 = tpu.matmul %208, %209, %cst_70 {dimension_numbers = #tpu.dot_dimension_numbers<[1], [0], [0], [1], [0, 0, 1, 1], [], []>} : vector<8x8xf32>, vector<8x32xf32>, vector<8x32xf32> -> vector<8x32xf32>
    %211 = arith.addf %192, %210 : vector<8x32xf32>
    %c8 = arith.constant 8 : index
    %c0_71 = arith.constant 0 : index
    %212 = vector.load %arg18[%c8, %c0_71] : memref<16x32xf32, #tpu.memory_space<vmem>>, vector<8x32xf32>
    tpu.vector_store %arg18[%c8, %c0_71], %211 {strides = array<i32>} : memref<16x32xf32, #tpu.memory_space<vmem>>, vector<8x32xf32>,
    %c0_72 = arith.constant 0 : index
    %c0_73 = arith.constant 0 : index
    %213 = vector.load %arg18[%c0_72, %c0_73] : memref<16x32xf32, #tpu.memory_space<vmem>>, vector<16x32xf32>
    %214 = arith.addf %3, %213 : vector<16x32xf32>
    %c0_74 = arith.constant 0 : index
    %c0_75 = arith.constant 0 : index
    %c0_76 = arith.constant 0 : index
    %215 = vector.load %arg8[%c0_74, %c0_75, %c0_76] : memref<1x1x32xf32, #tpu.memory_space<vmem>>, vector<1x1x32xf32>
    %216 = vector.shape_cast %215 : vector<1x1x32xf32> to vector<1x32xf32>
    %217 = vector.broadcast %216 : vector<1x32xf32> to vector<16x32xf32>
    %218 = arith.addf %214, %217 : vector<16x32xf32>
    %c0_77 = arith.constant 0 : index
    %c0_78 = arith.constant 0 : index
    %c0_79 = arith.constant 0 : index
    %219 = vector.load %arg9[%c0_77, %c0_78, %c0_79] : memref<1x1x32xf32, #tpu.memory_space<vmem>>, vector<1x1x32xf32>
    %220 = vector.shape_cast %219 : vector<1x1x32xf32> to vector<1x32xf32>
    %c0_80 = arith.constant 0 : index
    %c0_81 = arith.constant 0 : index
    %c0_82 = arith.constant 0 : index
    %221 = vector.load %arg10[%c0_80, %c0_81, %c0_82] : memref<1x1x32xf32, #tpu.memory_space<vmem>>, vector<1x1x32xf32>
    %222 = vector.shape_cast %221 : vector<1x1x32xf32> to vector<1x32xf32>
    %cst_83 = arith.constant dense<0.000000e+00> : vector<16xf32>
    %223 = vector.multi_reduction <add>, %218, %cst_83 [1] : vector<16x32xf32> to vector<16xf32>
    %224 = vector.shape_cast %223 : vector<16xf32> to vector<16x1xf32>
    %cst_84 = arith.constant 3.200000e+01 : f32
    %225 = vector.broadcast %cst_84 : f32 to vector<16x1xf32>
    %226 = arith.divf %224, %225 : vector<16x1xf32>
    %227 = vector.broadcast %226 : vector<16x1xf32> to vector<16x32xf32>
    %228 = arith.subf %218, %227 : vector<16x32xf32>
    %229 = arith.mulf %228, %228 : vector<16x32xf32>
    %cst_85 = arith.constant dense<0.000000e+00> : vector<16xf32>
    %230 = vector.multi_reduction <add>, %229, %cst_85 [1] : vector<16x32xf32> to vector<16xf32>
    %231 = vector.shape_cast %230 : vector<16xf32> to vector<16x1xf32>
    %cst_86 = arith.constant 3.200000e+01 : f32
    %232 = vector.broadcast %cst_86 : f32 to vector<16x1xf32>
    %233 = arith.divf %231, %232 : vector<16x1xf32>
    %234 = vector.broadcast %226 : vector<16x1xf32> to vector<16x32xf32>
    %235 = arith.subf %218, %234 : vector<16x32xf32>
    %cst_87 = arith.constant 9.99999974E-6 : f32
    %236 = vector.broadcast %cst_87 : f32 to vector<16x1xf32>
    %237 = arith.addf %233, %236 : vector<16x1xf32>
    %238 = math.rsqrt %237 : vector<16x1xf32>
    %239 = vector.broadcast %238 : vector<16x1xf32> to vector<16x32xf32>
    %240 = arith.mulf %235, %239 : vector<16x32xf32>
    %241 = vector.broadcast %220 : vector<1x32xf32> to vector<16x32xf32>
    %242 = arith.mulf %240, %241 : vector<16x32xf32>
    %243 = vector.broadcast %222 : vector<1x32xf32> to vector<16x32xf32>
    %244 = arith.addf %242, %243 : vector<16x32xf32>
    %c0_88 = arith.constant 0 : index
    %c0_89 = arith.constant 0 : index
    %c0_90 = arith.constant 0 : index
    %245 = vector.load %arg11[%c0_88, %c0_89, %c0_90] : memref<1x32x128xf32, #tpu.memory_space<vmem>>, vector<1x32x128xf32>
    %246 = vector.shape_cast %245 : vector<1x32x128xf32> to vector<32x128xf32>
    %cst_91 = arith.constant dense<0.000000e+00> : vector<16x128xf32>
    %247 = tpu.matmul %244, %246, %cst_91 {dimension_numbers = #tpu.dot_dimension_numbers<[1], [0], [0], [1], [0, 0, 1, 1], [], []>} : vector<16x32xf32>, vector<32x128xf32>, vector<16x128xf32> -> vector<16x128xf32>
    %c0_92 = arith.constant 0 : index
    %c0_93 = arith.constant 0 : index
    %c0_94 = arith.constant 0 : index
    %248 = vector.load %arg12[%c0_92, %c0_93, %c0_94] : memref<1x1x128xf32, #tpu.memory_space<vmem>>, vector<1x1x128xf32>
    %249 = vector.shape_cast %248 : vector<1x1x128xf32> to vector<1x128xf32>
    %250 = vector.broadcast %249 : vector<1x128xf32> to vector<16x128xf32>
    %251 = arith.addf %247, %250 : vector<16x128xf32>
    %cst_95 = arith.constant 1.702000e+00 : f32
    %252 = vector.broadcast %cst_95 : f32 to vector<16x128xf32>
    %253 = arith.mulf %252, %251 : vector<16x128xf32>
    %254 = arith.negf %253 : vector<16x128xf32>
    %255 = math.exp %254 : vector<16x128xf32>
    %cst_96 = arith.constant 1.000000e+00 : f32
    %256 = vector.broadcast %cst_96 : f32 to vector<16x128xf32>
    %257 = arith.addf %256, %255 : vector<16x128xf32>
    %258 = arith.divf %256, %257 : vector<16x128xf32>
    %259 = arith.mulf %251, %258 : vector<16x128xf32>
    %c0_97 = arith.constant 0 : index
    %c0_98 = arith.constant 0 : index
    %c0_99 = arith.constant 0 : index
    %260 = vector.load %arg13[%c0_97, %c0_98, %c0_99] : memref<1x128x32xf32, #tpu.memory_space<vmem>>, vector<1x128x32xf32>
    %261 = vector.shape_cast %260 : vector<1x128x32xf32> to vector<128x32xf32>
    %cst_100 = arith.constant dense<0.000000e+00> : vector<16x32xf32>
    %262 = tpu.matmul %259, %261, %cst_100 {dimension_numbers = #tpu.dot_dimension_numbers<[1], [0], [0], [1], [0, 0, 1, 1], [], []>} : vector<16x128xf32>, vector<128x32xf32>, vector<16x32xf32> -> vector<16x32xf32>
    %263 = arith.addf %218, %262 : vector<16x32xf32>
    %c0_101 = arith.constant 0 : index
    %c0_102 = arith.constant 0 : index
    %c0_103 = arith.constant 0 : index
    %264 = vector.load %arg14[%c0_101, %c0_102, %c0_103] : memref<1x1x32xf32, #tpu.memory_space<vmem>>, vector<1x1x32xf32>
    %265 = vector.shape_cast %264 : vector<1x1x32xf32> to vector<1x32xf32>
    %266 = vector.broadcast %265 : vector<1x32xf32> to vector<16x32xf32>
    %267 = arith.addf %263, %266 : vector<16x32xf32>
    %c0_104 = arith.constant 0 : index
    %c0_105 = arith.constant 0 : index
    %268 = vector.load %arg17[%c0_104, %c0_105] : memref<16x32xf32, #tpu.memory_space<vmem>>, vector<16x32xf32>
    tpu.vector_store %arg17[%c0_104, %c0_105], %267 {strides = array<i32>} : memref<16x32xf32, #tpu.memory_space<vmem>>, vector<16x32xf32>,
    %c1_i32 = arith.constant 1 : i32
    %269 = arith.cmpi eq, %arg0, %c1_i32 : i32
    %270 = arith.extui %269 : i1 to i32
    %c0_i32_106 = arith.constant 0 : i32
    %271 = arith.cmpi ne, %270, %c0_i32_106 : i32
    scf.if %271 {
      %c0_107 = arith.constant 0 : index
      %c0_108 = arith.constant 0 : index
      %272 = vector.load %arg15[%c0_107, %c0_108] : memref<1x32xf32, #tpu.memory_space<vmem>>, vector<1x32xf32>
      %c0_109 = arith.constant 0 : index
      %c0_110 = arith.constant 0 : index
      %273 = vector.load %arg16[%c0_109, %c0_110] : memref<1x32xf32, #tpu.memory_space<vmem>>, vector<1x32xf32>
      %cst_111 = arith.constant dense<0.000000e+00> : vector<16xf32>
      %274 = vector.multi_reduction <add>, %267, %cst_111 [1] : vector<16x32xf32> to vector<16xf32>
      %275 = vector.shape_cast %274 : vector<16xf32> to vector<16x1xf32>
      %cst_112 = arith.constant 3.200000e+01 : f32
      %276 = vector.broadcast %cst_112 : f32 to vector<16x1xf32>
      %277 = arith.divf %275, %276 : vector<16x1xf32>
      %278 = vector.broadcast %277 : vector<16x1xf32> to vector<16x32xf32>
      %279 = arith.subf %267, %278 : vector<16x32xf32>
      %280 = arith.mulf %279, %279 : vector<16x32xf32>
      %cst_113 = arith.constant dense<0.000000e+00> : vector<16xf32>
      %281 = vector.multi_reduction <add>, %280, %cst_113 [1] : vector<16x32xf32> to vector<16xf32>
      %282 = vector.shape_cast %281 : vector<16xf32> to vector<16x1xf32>
      %cst_114 = arith.constant 3.200000e+01 : f32
      %283 = vector.broadcast %cst_114 : f32 to vector<16x1xf32>
      %284 = arith.divf %282, %283 : vector<16x1xf32>
      %285 = vector.broadcast %277 : vector<16x1xf32> to vector<16x32xf32>
      %286 = arith.subf %267, %285 : vector<16x32xf32>
      %cst_115 = arith.constant 9.99999974E-6 : f32
      %287 = vector.broadcast %cst_115 : f32 to vector<16x1xf32>
      %288 = arith.addf %284, %287 : vector<16x1xf32>
      %289 = math.rsqrt %288 : vector<16x1xf32>
      %290 = vector.broadcast %289 : vector<16x1xf32> to vector<16x32xf32>
      %291 = arith.mulf %286, %290 : vector<16x32xf32>
      %292 = vector.broadcast %272 : vector<1x32xf32> to vector<16x32xf32>
      %293 = arith.mulf %291, %292 : vector<16x32xf32>
      %294 = vector.broadcast %273 : vector<1x32xf32> to vector<16x32xf32>
      %295 = arith.addf %293, %294 : vector<16x32xf32>
      %c0_116 = arith.constant 0 : index
      %c0_117 = arith.constant 0 : index
      %296 = vector.load %arg17[%c0_116, %c0_117] : memref<16x32xf32, #tpu.memory_space<vmem>>, vector<16x32xf32>
      tpu.vector_store %arg17[%c0_116, %c0_117], %295 {strides = array<i32>} : memref<16x32xf32, #tpu.memory_space<vmem>>, vector<16x32xf32>,
    } else {
    }
    return
  }
  func.func @transform_0(%arg0: i32) -> (i32, i32) {
    %c0_i32 = arith.constant 0 : i32
    %c0_i32_0 = arith.constant 0 : i32
    %c0_i32_1 = arith.constant 0 : i32
    return %c0_i32, %c0_i32_0 : i32, i32
  }
  func.func @transform_1(%arg0: i32) -> (i32, i32) {
    %c0_i32 = arith.constant 0 : i32
    %c0_i32_0 = arith.constant 0 : i32
    %c0_i32_1 = arith.constant 0 : i32
    return %c0_i32, %c0_i32_0 : i32, i32
  }
  func.func @transform_2(%arg0: i32) -> (i32, i32, i32) {
    %c0_i32 = arith.constant 0 : i32
    %c0_i32_0 = arith.constant 0 : i32
    %c0_i32_1 = arith.constant 0 : i32
    return %arg0, %c0_i32, %c0_i32_0 : i32, i32, i32
  }
  func.func @transform_3(%arg0: i32) -> (i32, i32, i32) {
    %c0_i32 = arith.constant 0 : i32
    %c0_i32_0 = arith.constant 0 : i32
    %c0_i32_1 = arith.constant 0 : i32
    return %arg0, %c0_i32, %c0_i32_0 : i32, i32, i32
  }
  func.func @transform_4(%arg0: i32) -> (i32, i32, i32) {
    %c0_i32 = arith.constant 0 : i32
    %c0_i32_0 = arith.constant 0 : i32
    %c0_i32_1 = arith.constant 0 : i32
    return %arg0, %c0_i32, %c0_i32_0 : i32, i32, i32
  }
  func.func @transform_5(%arg0: i32) -> (i32, i32, i32) {
    %c0_i32 = arith.constant 0 : i32
    %c0_i32_0 = arith.constant 0 : i32
    %c0_i32_1 = arith.constant 0 : i32
    return %arg0, %c0_i32, %c0_i32_0 : i32, i32, i32
  }
  func.func @transform_6(%arg0: i32) -> (i32, i32, i32) {
    %c0_i32 = arith.constant 0 : i32
    %c0_i32_0 = arith.constant 0 : i32
    %c0_i32_1 = arith.constant 0 : i32
    return %arg0, %c0_i32, %c0_i32_0 : i32, i32, i32
  }
  func.func @transform_7(%arg0: i32) -> (i32, i32, i32) {
    %c0_i32 = arith.constant 0 : i32
    %c0_i32_0 = arith.constant 0 : i32
    %c0_i32_1 = arith.constant 0 : i32
    return %arg0, %c0_i32, %c0_i32_0 : i32, i32, i32
  }
  func.func @transform_8(%arg0: i32) -> (i32, i32, i32) {
    %c0_i32 = arith.constant 0 : i32
    %c0_i32_0 = arith.constant 0 : i32
    %c0_i32_1 = arith.constant 0 : i32
    return %arg0, %c0_i32, %c0_i32_0 : i32, i32, i32
  }
  func.func @transform_9(%arg0: i32) -> (i32, i32, i32) {
    %c0_i32 = arith.constant 0 : i32
    %c0_i32_0 = arith.constant 0 : i32
    %c0_i32_1 = arith.constant 0 : i32
    return %arg0, %c0_i32, %c0_i32_0 : i32, i32, i32
  }
  func.func @transform_10(%arg0: i32) -> (i32, i32, i32) {
    %c0_i32 = arith.constant 0 : i32
    %c0_i32_0 = arith.constant 0 : i32
    %c0_i32_1 = arith.constant 0 : i32
    return %arg0, %c0_i32, %c0_i32_0 : i32, i32, i32
  }
  func.func @transform_11(%arg0: i32) -> (i32, i32, i32) {
    %c0_i32 = arith.constant 0 : i32
    %c0_i32_0 = arith.constant 0 : i32
    %c0_i32_1 = arith.constant 0 : i32
    return %arg0, %c0_i32, %c0_i32_0 : i32, i32, i32
  }
  func.func @transform_12(%arg0: i32) -> (i32, i32, i32) {
    %c0_i32 = arith.constant 0 : i32
    %c0_i32_0 = arith.constant 0 : i32
    %c0_i32_1 = arith.constant 0 : i32
    return %arg0, %c0_i32, %c0_i32_0 : i32, i32, i32
  }
  func.func @transform_13(%arg0: i32) -> (i32, i32, i32) {
    %c0_i32 = arith.constant 0 : i32
    %c0_i32_0 = arith.constant 0 : i32
    %c0_i32_1 = arith.constant 0 : i32
    return %arg0, %c0_i32, %c0_i32_0 : i32, i32, i32
  }
  func.func @transform_14(%arg0: i32) -> (i32, i32) {
    %c0_i32 = arith.constant 0 : i32
    %c0_i32_0 = arith.constant 0 : i32
    %c0_i32_1 = arith.constant 0 : i32
    return %c0_i32, %c0_i32_0 : i32, i32
  }
  func.func @transform_15(%arg0: i32) -> (i32, i32) {
    %c0_i32 = arith.constant 0 : i32
    %c0_i32_0 = arith.constant 0 : i32
    %c0_i32_1 = arith.constant 0 : i32
    return %c0_i32, %c0_i32_0 : i32, i32
  }
  func.func @transform_16(%arg0: i32) -> (i32, i32) {
    %c0_i32 = arith.constant 0 : i32
    %c0_i32_0 = arith.constant 0 : i32
    %c0_i32_1 = arith.constant 0 : i32
    return %c0_i32, %c0_i32_0 : i32, i32
  }
}

</mosaic_0001>

<llo_original>
// kernel: text_encoder_forward.1
$region0: #{text_encoder_forward.1}
  #allocation0 [shape = 'u32[]', space=smem, size = 0x4, offset = 0x4, fixed_abs, tag = 'smem constant byte address 0x4 - core index']
  #allocation1 [shape = 'u32[144,128]{1,0:T(1,128)}', space=vmem, size = 0x12000, scoped, tag = 'internal scratch']
  #allocation2 [shape = 'f32[16,32]{1,0:T(8,128)}', space=vmem, size = 0x2000, scoped, tag = 'scratch operand']
  %s0 = inlined_call_operand.vmem [shape: f32[2,8], index: 0, kind: input, shape index: {}]
  %s1 = inlined_call_operand.vmem [shape: f32[16,32], index: 1, kind: input, shape index: {}]
  %s2 = inlined_call_operand.vmem [shape: f32[2,1,32], index: 2, kind: input, shape index: {}]
  %s3 = inlined_call_operand.vmem [shape: f32[2,1,32], index: 3, kind: input, shape index: {}]
  %s4 = inlined_call_operand.vmem [shape: f32[2,32,96], index: 4, kind: input, shape index: {}]
  %s5 = inlined_call_operand.vmem [shape: f32[2,1,96], index: 5, kind: input, shape index: {}]
  %s6 = inlined_call_operand.vmem [shape: f32[2,32,32], index: 6, kind: input, shape index: {}]
  %s7 = inlined_call_operand.vmem [shape: f32[2,1,32], index: 7, kind: input, shape index: {}]
  %s8 = inlined_call_operand.vmem [shape: f32[2,1,32], index: 8, kind: input, shape index: {}]
  %s9 = inlined_call_operand.vmem [shape: f32[2,1,32], index: 9, kind: input, shape index: {}]
  %s10 = inlined_call_operand.vmem [shape: f32[2,32,128], index: 10, kind: input, shape index: {}]
  %s11 = inlined_call_operand.vmem [shape: f32[2,1,128], index: 11, kind: input, shape index: {}]
  %s12 = inlined_call_operand.vmem [shape: f32[2,128,32], index: 12, kind: input, shape index: {}]
  %s13 = inlined_call_operand.vmem [shape: f32[2,1,32], index: 13, kind: input, shape index: {}]
  %s14 = inlined_call_operand.vmem [shape: f32[1,32], index: 14, kind: input, shape index: {}]
  %s15 = inlined_call_operand.vmem [shape: f32[1,32], index: 15, kind: input, shape index: {}]
  %s16 = inlined_call_operand.hbm [shape: f32[16,32], index: 16, kind: output, shape index: {}]
  %s17 = sld [smem:[#allocation0]]
  $region105: #{text_encoder_forward.1} parent=0
    _
  %s19 = ssub.s32 1, %s17
  %s20 = scalar_select 0, %s19, %s17
  $region1: #{text_encoder_forward.1} parent=0
    #allocation3 [shape = 'u8[8192]{0}', space=vmem, size = 0x2000, scoped, tag = 'output window, operand 0, single buffered']
    #allocation4 [shape = 's32[2]{0}', space=sflag, size = 0x8, scoped, tag = 'scoped memory for text_encoder_forward.1']
    %21 = vsyncpa [#allocation4], 0
    loop: start=0, step=1, limit=4
    $region2: #{text_encoder_forward.1} parent=1 // loop_pre_header
      _
    $region3: #{text_encoder_forward.1} parent=1 // loop_header
      %s23 = sphi 0, %s27
      %p24 = scmp.ge.s32.totalorder %s23, 4
      %s31 = sphi 0, %s31
      %s33 = sphi 0, %s31
      %s34 = sphi 0, %s33
      %s48 = sphi 0, %s34
      %s52 = sphi 0, %s52
      %s54 = sphi 0, %s52
      %s55 = sphi 0, %s54
      %s69 = sphi 0, %s55
      %s75 = sphi 0, %s77
      %s78 = sphi 0, %s75
      %s79 = sphi 0, %s78
      %s95 = sphi 0, %s79
      %s101 = sphi 0, %s103
      %s104 = sphi 0, %s101
      %s105 = sphi 0, %s104
      %s121 = sphi 0, %s105
      %s127 = sphi 0, %s129
      %s130 = sphi 0, %s127
      %s131 = sphi 0, %s130
      %s147 = sphi 0, %s131
      %s153 = sphi 0, %s155
      %s156 = sphi 0, %s153
      %s157 = sphi 0, %s156
      %s173 = sphi 0, %s157
      %s179 = sphi 0, %s181
      %s182 = sphi 0, %s179
      %s183 = sphi 0, %s182
      %s199 = sphi 0, %s183
      %s205 = sphi 0, %s207
      %s208 = sphi 0, %s205
      %s209 = sphi 0, %s208
      %s225 = sphi 0, %s209
      %s231 = sphi 0, %s233
      %s234 = sphi 0, %s231
      %s235 = sphi 0, %s234
      %s251 = sphi 0, %s235
      %s257 = sphi 0, %s259
      %s260 = sphi 0, %s257
      %s261 = sphi 0, %s260
      %s277 = sphi 0, %s261
      %s283 = sphi 0, %s285
      %s286 = sphi 0, %s283
      %s287 = sphi 0, %s286
      %s303 = sphi 0, %s287
      %s309 = sphi 0, %s311
      %s312 = sphi 0, %s309
      %s313 = sphi 0, %s312
      %s329 = sphi 0, %s313
      %s335 = sphi 0, %s337
      %s338 = sphi 0, %s335
      %s339 = sphi 0, %s338
      %s355 = sphi 0, %s339
      %s361 = sphi 0, %s363
      %s364 = sphi 0, %s361
      %s365 = sphi 0, %s364
      %s381 = sphi 0, %s365
      %s385 = sphi 0, %s385
      %s387 = sphi 0, %s385
      %s388 = sphi 0, %s387
      %s402 = sphi 0, %s388
      %s406 = sphi 0, %s406
      %s408 = sphi 0, %s406
      %s409 = sphi 0, %s408
      %s423 = sphi 0, %s409
      %s427 = sphi 0, %s427
      %s429 = sphi 0, %s427
      %s430 = sphi 0, %s429
      %s444 = sphi 0, %s430
    $region4: #{text_encoder_forward.1} parent=1 // loop_header_branch
      %26 = sbr.rel (%p24) target = $region8
    $region5: #{text_encoder_forward.1} parent=1 // loop_body
      %s28 = ssub.s32 %s23, 1
      %s29 = ssub.s32 %s23, 2
      %s30 = sadd.s32 %s23, 1
      %s32 = sadd.s32 %s31, 1
      %p35 = scmp.eq.s32.totalorder %s23, 1
      %p36 = scmp.ne.s32.totalorder %s31, %s33
      %p37 = scmp.eq.s32.totalorder %s23, 0
      %p38 = por %p36, %p37
      %p39 = scmp.ne.s32.totalorder %s31, %s33
      %p40 = scmp.eq.s32.totalorder %s28, 1
      %p41 = por %p39, %p40
      %p42 = scmp.ne.s32.totalorder %s33, %s34
      %p43 = scmp.eq.s32.totalorder %s28, 0
      %p44 = por %p42, %p43
      %p45 = scmp.ne.s32.totalorder %s33, %s34
      %p46 = scmp.eq.s32.totalorder %s29, 1
      %p47 = por %p45, %p46
      %p49 = scmp.ne.s32.totalorder %s34, %s48
      %p50 = scmp.eq.s32.totalorder %s29, 0
      %p51 = por %p49, %p50
      %s53 = sadd.s32 %s52, 1
      %p56 = scmp.eq.s32.totalorder %s23, 1
      %p57 = scmp.ne.s32.totalorder %s52, %s54
      %p58 = scmp.eq.s32.totalorder %s23, 0
      %p59 = por %p57, %p58
      %p60 = scmp.ne.s32.totalorder %s52, %s54
      %p61 = scmp.eq.s32.totalorder %s28, 1
      %p62 = por %p60, %p61
      %p63 = scmp.ne.s32.totalorder %s54, %s55
      %p64 = scmp.eq.s32.totalorder %s28, 0
      %p65 = por %p63, %p64
      %p66 = scmp.ne.s32.totalorder %s54, %s55
      %p67 = scmp.eq.s32.totalorder %s29, 1
      %p68 = por %p66, %p67
      %p70 = scmp.ne.s32.totalorder %s55, %s69
      %p71 = scmp.eq.s32.totalorder %s29, 0
      %p72 = por %p70, %p71
      %s73 = ssub.s32 %s23, %s30
      %p74 = scmp.eq.s32.totalorder %s73, 0
      %s76 = sadd.s32 %s75, 1
      %s77 = scalar_select %p74, %s75, %s76
      %p80 = pneg %p74
      %p81 = scmp.eq.s32.totalorder %s23, 1
      %p82 = por %p80, %p81
      %p83 = scmp.ne.s32.totalorder %s75, %s78
      %p84 = scmp.eq.s32.totalorder %s23, 0
      %p85 = por %p83, %p84
      %p86 = scmp.ne.s32.totalorder %s75, %s78
      %p87 = scmp.eq.s32.totalorder %s28, 1
      %p88 = por %p86, %p87
      %p89 = scmp.ne.s32.totalorder %s78, %s79
      %p90 = scmp.eq.s32.totalorder %s28, 0
      %p91 = por %p89, %p90
      %p92 = scmp.ne.s32.totalorder %s78, %s79
      %p93 = scmp.eq.s32.totalorder %s29, 1
      %p94 = por %p92, %p93
      %p96 = scmp.ne.s32.totalorder %s79, %s95
      %p97 = scmp.eq.s32.totalorder %s29, 0
      %p98 = por %p96, %p97
      %s99 = ssub.s32 %s23, %s30
      %p100 = scmp.eq.s32.totalorder %s99, 0
      %s102 = sadd.s32 %s101, 1
      %s103 = scalar_select %p100, %s101, %s102
      %p106 = pneg %p100
      %p107 = scmp.eq.s32.totalorder %s23, 1
      %p108 = por %p106, %p107
      %p109 = scmp.ne.s32.totalorder %s101, %s104
      %p110 = scmp.eq.s32.totalorder %s23, 0
      %p111 = por %p109, %p110
      %p112 = scmp.ne.s32.totalorder %s101, %s104
      %p113 = scmp.eq.s32.totalorder %s28, 1
      %p114 = por %p112, %p113
      %p115 = scmp.ne.s32.totalorder %s104, %s105
      %p116 = scmp.eq.s32.totalorder %s28, 0
      %p117 = por %p115, %p116
      %p118 = scmp.ne.s32.totalorder %s104, %s105
      %p119 = scmp.eq.s32.totalorder %s29, 1
      %p120 = por %p118, %p119
      %p122 = scmp.ne.s32.totalorder %s105, %s121
      %p123 = scmp.eq.s32.totalorder %s29, 0
      %p124 = por %p122, %p123
      %s125 = ssub.s32 %s23, %s30
      %p126 = scmp.eq.s32.totalorder %s125, 0
      %s128 = sadd.s32 %s127, 1
      %s129 = scalar_select %p126, %s127, %s128
      %p132 = pneg %p126
      %p133 = scmp.eq.s32.totalorder %s23, 1
      %p134 = por %p132, %p133
      %p135 = scmp.ne.s32.totalorder %s127, %s130
      %p136 = scmp.eq.s32.totalorder %s23, 0
      %p137 = por %p135, %p136
      %p138 = scmp.ne.s32.totalorder %s127, %s130
      %p139 = scmp.eq.s32.totalorder %s28, 1
      %p140 = por %p138, %p139
      %p141 = scmp.ne.s32.totalorder %s130, %s131
      %p142 = scmp.eq.s32.totalorder %s28, 0
      %p143 = por %p141, %p142
      %p144 = scmp.ne.s32.totalorder %s130, %s131
      %p145 = scmp.eq.s32.totalorder %s29, 1
      %p146 = por %p144, %p145
      %p148 = scmp.ne.s32.totalorder %s131, %s147
      %p149 = scmp.eq.s32.totalorder %s29, 0
      %p150 = por %p148, %p149
      %s151 = ssub.s32 %s23, %s30
      %p152 = scmp.eq.s32.totalorder %s151, 0
      %s154 = sadd.s32 %s153, 1
      %s155 = scalar_select %p152, %s153, %s154
      %p158 = pneg %p152
      %p159 = scmp.eq.s32.totalorder %s23, 1
      %p160 = por %p158, %p159
      %p161 = scmp.ne.s32.totalorder %s153, %s156
      %p162 = scmp.eq.s32.totalorder %s23, 0
      %p163 = por %p161, %p162
      %p164 = scmp.ne.s32.totalorder %s153, %s156
      %p165 = scmp.eq.s32.totalorder %s28, 1
      %p166 = por %p164, %p165
      %p167 = scmp.ne.s32.totalorder %s156, %s157
      %p168 = scmp.eq.s32.totalorder %s28, 0
      %p169 = por %p167, %p168
      %p170 = scmp.ne.s32.totalorder %s156, %s157
      %p171 = scmp.eq.s32.totalorder %s29, 1
      %p172 = por %p170, %p171
      %p174 = scmp.ne.s32.totalorder %s157, %s173
      %p175 = scmp.eq.s32.totalorder %s29, 0
      %p176 = por %p174, %p175
      %s177 = ssub.s32 %s23, %s30
      %p178 = scmp.eq.s32.totalorder %s177, 0
      %s180 = sadd.s32 %s179, 1
      %s181 = scalar_select %p178, %s179, %s180
      %p184 = pneg %p178
      %p185 = scmp.eq.s32.totalorder %s23, 1
      %p186 = por %p184, %p185
      %p187 = scmp.ne.s32.totalorder %s179, %s182
      %p188 = scmp.eq.s32.totalorder %s23, 0
      %p189 = por %p187, %p188
      %p190 = scmp.ne.s32.totalorder %s179, %s182
      %p191 = scmp.eq.s32.totalorder %s28, 1
      %p192 = por %p190, %p191
      %p193 = scmp.ne.s32.totalorder %s182, %s183
      %p194 = scmp.eq.s32.totalorder %s28, 0
      %p195 = por %p193, %p194
      %p196 = scmp.ne.s32.totalorder %s182, %s183
      %p197 = scmp.eq.s32.totalorder %s29, 1
      %p198 = por %p196, %p197
      %p200 = scmp.ne.s32.totalorder %s183, %s199
      %p201 = scmp.eq.s32.totalorder %s29, 0
      %p202 = por %p200, %p201
      %s203 = ssub.s32 %s23, %s30
      %p204 = scmp.eq.s32.totalorder %s203, 0
      %s206 = sadd.s32 %s205, 1
      %s207 = scalar_select %p204, %s205, %s206
      %p210 = pneg %p204
      %p211 = scmp.eq.s32.totalorder %s23, 1
      %p212 = por %p210, %p211
      %p213 = scmp.ne.s32.totalorder %s205, %s208
      %p214 = scmp.eq.s32.totalorder %s23, 0
      %p215 = por %p213, %p214
      %p216 = scmp.ne.s32.totalorder %s205, %s208
      %p217 = scmp.eq.s32.totalorder %s28, 1
      %p218 = por %p216, %p217
      %p219 = scmp.ne.s32.totalorder %s208, %s209
      %p220 = scmp.eq.s32.totalorder %s28, 0
      %p221 = por %p219, %p220
      %p222 = scmp.ne.s32.totalorder %s208, %s209
      %p223 = scmp.eq.s32.totalorder %s29, 1
      %p224 = por %p222, %p223
      %p226 = scmp.ne.s32.totalorder %s209, %s225
      %p227 = scmp.eq.s32.totalorder %s29, 0
      %p228 = por %p226, %p227
      %s229 = ssub.s32 %s23, %s30
      %p230 = scmp.eq.s32.totalorder %s229, 0
      %s232 = sadd.s32 %s231, 1
      %s233 = scalar_select %p230, %s231, %s232
      %p236 = pneg %p230
      %p237 = scmp.eq.s32.totalorder %s23, 1
      %p238 = por %p236, %p237
      %p239 = scmp.ne.s32.totalorder %s231, %s234
      %p240 = scmp.eq.s32.totalorder %s23, 0
      %p241 = por %p239, %p240
      %p242 = scmp.ne.s32.totalorder %s231, %s234
      %p243 = scmp.eq.s32.totalorder %s28, 1
      %p244 = por %p242, %p243
      %p245 = scmp.ne.s32.totalorder %s234, %s235
      %p246 = scmp.eq.s32.totalorder %s28, 0
      %p247 = por %p245, %p246
      %p248 = scmp.ne.s32.totalorder %s234, %s235
      %p249 = scmp.eq.s32.totalorder %s29, 1
      %p250 = por %p248, %p249
      %p252 = scmp.ne.s32.totalorder %s235, %s251
      %p253 = scmp.eq.s32.totalorder %s29, 0
      %p254 = por %p252, %p253
      %s255 = ssub.s32 %s23, %s30
      %p256 = scmp.eq.s32.totalorder %s255, 0
      %s258 = sadd.s32 %s257, 1
      %s259 = scalar_select %p256, %s257, %s258
      %p262 = pneg %p256
      %p263 = scmp.eq.s32.totalorder %s23, 1
      %p264 = por %p262, %p263
      %p265 = scmp.ne.s32.totalorder %s257, %s260
      %p266 = scmp.eq.s32.totalorder %s23, 0
      %p267 = por %p265, %p266
      %p268 = scmp.ne.s32.totalorder %s257, %s260
      %p269 = scmp.eq.s32.totalorder %s28, 1
      %p270 = por %p268, %p269
      %p271 = scmp.ne.s32.totalorder %s260, %s261
      %p272 = scmp.eq.s32.totalorder %s28, 0
      %p273 = por %p271, %p272
      %p274 = scmp.ne.s32.totalorder %s260, %s261
      %p275 = scmp.eq.s32.totalorder %s29, 1
      %p276 = por %p274, %p275
      %p278 = scmp.ne.s32.totalorder %s261, %s277
      %p279 = scmp.eq.s32.totalorder %s29, 0
      %p280 = por %p278, %p279
      %s281 = ssub.s32 %s23, %s30
      %p282 = scmp.eq.s32.totalorder %s281, 0
      %s284 = sadd.s32 %s283, 1
      %s285 = scalar_select %p282, %s283, %s284
      %p288 = pneg %p282
      %p289 = scmp.eq.s32.totalorder %s23, 1
      %p290 = por %p288, %p289
      %p291 = scmp.ne.s32.totalorder %s283, %s286
      %p292 = scmp.eq.s32.totalorder %s23, 0
      %p293 = por %p291, %p292
      %p294 = scmp.ne.s32.totalorder %s283, %s286
      %p295 = scmp.eq.s32.totalorder %s28, 1
      %p296 = por %p294, %p295
      %p297 = scmp.ne.s32.totalorder %s286, %s287
      %p298 = scmp.eq.s32.totalorder %s28, 0
      %p299 = por %p297, %p298
      %p300 = scmp.ne.s32.totalorder %s286, %s287
      %p301 = scmp.eq.s32.totalorder %s29, 1
      %p302 = por %p300, %p301
      %p304 = scmp.ne.s32.totalorder %s287, %s303
      %p305 = scmp.eq.s32.totalorder %s29, 0
      %p306 = por %p304, %p305
      %s307 = ssub.s32 %s23, %s30
      %p308 = scmp.eq.s32.totalorder %s307, 0
      %s310 = sadd.s32 %s309, 1
      %s311 = scalar_select %p308, %s309, %s310
      %p314 = pneg %p308
      %p315 = scmp.eq.s32.totalorder %s23, 1
      %p316 = por %p314, %p315
      %p317 = scmp.ne.s32.totalorder %s309, %s312
      %p318 = scmp.eq.s32.totalorder %s23, 0
      %p319 = por %p317, %p318
      %p320 = scmp.ne.s32.totalorder %s309, %s312
      %p321 = scmp.eq.s32.totalorder %s28, 1
      %p322 = por %p320, %p321
      %p323 = scmp.ne.s32.totalorder %s312, %s313
      %p324 = scmp.eq.s32.totalorder %s28, 0
      %p325 = por %p323, %p324
      %p326 = scmp.ne.s32.totalorder %s312, %s313
      %p327 = scmp.eq.s32.totalorder %s29, 1
      %p328 = por %p326, %p327
      %p330 = scmp.ne.s32.totalorder %s313, %s329
      %p331 = scmp.eq.s32.totalorder %s29, 0
      %p332 = por %p330, %p331
      %s333 = ssub.s32 %s23, %s30
      %p334 = scmp.eq.s32.totalorder %s333, 0
      %s336 = sadd.s32 %s335, 1
      %s337 = scalar_select %p334, %s335, %s336
      %p340 = pneg %p334
      %p341 = scmp.eq.s32.totalorder %s23, 1
      %p342 = por %p340, %p341
      %p343 = scmp.ne.s32.totalorder %s335, %s338
      %p344 = scmp.eq.s32.totalorder %s23, 0
      %p345 = por %p343, %p344
      %p346 = scmp.ne.s32.totalorder %s335, %s338
      %p347 = scmp.eq.s32.totalorder %s28, 1
      %p348 = por %p346, %p347
      %p349 = scmp.ne.s32.totalorder %s338, %s339
      %p350 = scmp.eq.s32.totalorder %s28, 0
      %p351 = por %p349, %p350
      %p352 = scmp.ne.s32.totalorder %s338, %s339
      %p353 = scmp.eq.s32.totalorder %s29, 1
      %p354 = por %p352, %p353
      %p356 = scmp.ne.s32.totalorder %s339, %s355
      %p357 = scmp.eq.s32.totalorder %s29, 0
      %p358 = por %p356, %p357
      %s359 = ssub.s32 %s23, %s30
      %p360 = scmp.eq.s32.totalorder %s359, 0
      %s362 = sadd.s32 %s361, 1
      %s363 = scalar_select %p360, %s361, %s362
      %p366 = pneg %p360
      %p367 = scmp.eq.s32.totalorder %s23, 1
      %p368 = por %p366, %p367
      %p369 = scmp.ne.s32.totalorder %s361, %s364
      %p370 = scmp.eq.s32.totalorder %s23, 0
      %p371 = por %p369, %p370
      %p372 = scmp.ne.s32.totalorder %s361, %s364
      %p373 = scmp.eq.s32.totalorder %s28, 1
      %p374 = por %p372, %p373
      %p375 = scmp.ne.s32.totalorder %s364, %s365
      %p376 = scmp.eq.s32.totalorder %s28, 0
      %p377 = por %p375, %p376
      %p378 = scmp.ne.s32.totalorder %s364, %s365
      %p379 = scmp.eq.s32.totalorder %s29, 1
      %p380 = por %p378, %p379
      %p382 = scmp.ne.s32.totalorder %s365, %s381
      %p383 = scmp.eq.s32.totalorder %s29, 0
      %p384 = por %p382, %p383
      %s386 = sadd.s32 %s385, 1
      %p389 = scmp.eq.s32.totalorder %s23, 1
      %p390 = scmp.ne.s32.totalorder %s385, %s387
      %p391 = scmp.eq.s32.totalorder %s23, 0
      %p392 = por %p390, %p391
      %p393 = scmp.ne.s32.totalorder %s385, %s387
      %p394 = scmp.eq.s32.totalorder %s28, 1
      %p395 = por %p393, %p394
      %p396 = scmp.ne.s32.totalorder %s387, %s388
      %p397 = scmp.eq.s32.totalorder %s28, 0
      %p398 = por %p396, %p397
      %p399 = scmp.ne.s32.totalorder %s387, %s388
      %p400 = scmp.eq.s32.totalorder %s29, 1
      %p401 = por %p399, %p400
      %p403 = scmp.ne.s32.totalorder %s388, %s402
      %p404 = scmp.eq.s32.totalorder %s29, 0
      %p405 = por %p403, %p404
      %s407 = sadd.s32 %s406, 1
      %p410 = scmp.eq.s32.totalorder %s23, 1
      %p411 = scmp.ne.s32.totalorder %s406, %s408
      %p412 = scmp.eq.s32.totalorder %s23, 0
      %p413 = por %p411, %p412
      %p414 = scmp.ne.s32.totalorder %s406, %s408
      %p415 = scmp.eq.s32.totalorder %s28, 1
      %p416 = por %p414, %p415
      %p417 = scmp.ne.s32.totalorder %s408, %s409
      %p418 = scmp.eq.s32.totalorder %s28, 0
      %p419 = por %p417, %p418
      %p420 = scmp.ne.s32.totalorder %s408, %s409
      %p421 = scmp.eq.s32.totalorder %s29, 1
      %p422 = por %p420, %p421
      %p424 = scmp.ne.s32.totalorder %s409, %s423
      %p425 = scmp.eq.s32.totalorder %s29, 0
      %p426 = por %p424, %p425
      %s428 = sadd.s32 %s427, 1
      %p431 = scmp.eq.s32.totalorder %s23, 1
      %p432 = scmp.ne.s32.totalorder %s427, %s429
      %p433 = scmp.eq.s32.totalorder %s23, 0
      %p434 = por %p432, %p433
      %p435 = scmp.ne.s32.totalorder %s427, %s429
      %p436 = scmp.eq.s32.totalorder %s28, 1
      %p437 = por %p435, %p436
      %p438 = scmp.ne.s32.totalorder %s429, %s430
      %p439 = scmp.eq.s32.totalorder %s28, 0
      %p440 = por %p438, %p439
      %p441 = scmp.ne.s32.totalorder %s429, %s430
      %p442 = scmp.eq.s32.totalorder %s29, 1
      %p443 = por %p441, %p442
      %p445 = scmp.ne.s32.totalorder %s430, %s444
      %p446 = scmp.eq.s32.totalorder %s29, 0
      %p447 = por %p445, %p446
      %p448 = scmp.le.s32.totalorder 1, %s23
      %p449 = scmp.lt.s32.totalorder %s23, 3
      %p450 = pnand %p448, %p449
      %p451 = pneg %p450
      // Predicated region
      $region9: #{text_encoder_forward.1} parent=5 // pred_check
        _
      $region10: #{text_encoder_forward.1} parent=5 // pred_check_branch
        %453 = sbr.rel (%p450) target = $region12
      $region11: #{text_encoder_forward.1} parent=5 // pred_region
        %s454 = ssub.s32 %s23, 1
        // Predicated region
        $region13: #{text_encoder_forward.1} parent=11 // pred_check
          %p455 = pneg %p44
        $region14: #{text_encoder_forward.1} parent=11 // pred_check_branch
          %457 = sbr.rel (%p455) target = $region16
        $region15: #{text_encoder_forward.1} parent=11 // pred_region
          _
        $region16: #{text_encoder_forward.1} parent=11 // pred_fallthru
          _
        // Predicated region
        $region17: #{text_encoder_forward.1} parent=11 // pred_check
          %p458 = pneg %p65
        $region18: #{text_encoder_forward.1} parent=11 // pred_check_branch
          %460 = sbr.rel (%p458) target = $region20
        $region19: #{text_encoder_forward.1} parent=11 // pred_region
          _
        $region20: #{text_encoder_forward.1} parent=11 // pred_fallthru
          _
        // Predicated region
        $region21: #{text_encoder_forward.1} parent=11 // pred_check
          %p461 = pneg %p398
        $region22: #{text_encoder_forward.1} parent=11 // pred_check_branch
          %463 = sbr.rel (%p461) target = $region24
        $region23: #{text_encoder_forward.1} parent=11 // pred_region
          _
        $region24: #{text_encoder_forward.1} parent=11 // pred_fallthru
          _
        // Predicated region
        $region25: #{text_encoder_forward.1} parent=11 // pred_check
          %p464 = pneg %p419
        $region26: #{text_encoder_forward.1} parent=11 // pred_check_branch
          %466 = sbr.rel (%p464) target = $region28
        $region27: #{text_encoder_forward.1} parent=11 // pred_region
          _
        $region28: #{text_encoder_forward.1} parent=11 // pred_fallthru
          _
      $region12: #{text_encoder_forward.1} parent=5 // pred_fallthru
        _
      %p467 = scmp.lt.s32.totalorder %s23, 2
      // Predicated region
      $region29: #{text_encoder_forward.1} parent=5 // pred_check
        %p468 = pneg %p467
      $region30: #{text_encoder_forward.1} parent=5 // pred_check_branch
        %470 = sbr.rel (%p468) target = $region32
      $region31: #{text_encoder_forward.1} parent=5 // pred_region
        // Predicated region
        $region33: #{text_encoder_forward.1} parent=31 // pred_check
          %p471 = pneg %p85
        $region34: #{text_encoder_forward.1} parent=31 // pred_check_branch
          %473 = sbr.rel (%p471) target = $region36
        $region35: #{text_encoder_forward.1} parent=31 // pred_region
          %p474 = scmp.lt.s32.totalorder %s23, 1
          %s475 = scalar_select %p474, %s23, 1
          %s476 = scalar_lea.vmem %s2, %s475
        $region36: #{text_encoder_forward.1} parent=31 // pred_fallthru
          _
        // Predicated region
        $region37: #{text_encoder_forward.1} parent=31 // pred_check
          %p477 = pneg %p111
        $region38: #{text_encoder_forward.1} parent=31 // pred_check_branch
          %479 = sbr.rel (%p477) target = $region40
        $region39: #{text_encoder_forward.1} parent=31 // pred_region
          %p480 = scmp.lt.s32.totalorder %s23, 1
          %s481 = scalar_select %p480, %s23, 1
          %s482 = scalar_lea.vmem %s3, %s481
        $region40: #{text_encoder_forward.1} parent=31 // pred_fallthru
          _
        // Predicated region
        $region41: #{text_encoder_forward.1} parent=31 // pred_check
          %p483 = pneg %p137
        $region42: #{text_encoder_forward.1} parent=31 // pred_check_branch
          %485 = sbr.rel (%p483) target = $region44
        $region43: #{text_encoder_forward.1} parent=31 // pred_region
          %p486 = scmp.lt.s32.totalorder %s23, 1
          %s487 = scalar_select %p486, %s23, 1
          %s488 = smul.addr %s487, 4
          %s489 = smul.addr %s488, 8
          %s490 = scalar_lea.vmem %s4, %s489
        $region44: #{text_encoder_forward.1} parent=31 // pred_fallthru
          _
        // Predicated region
        $region45: #{text_encoder_forward.1} parent=31 // pred_check
          %p491 = pneg %p163
        $region46: #{text_encoder_forward.1} parent=31 // pred_check_branch
          %493 = sbr.rel (%p491) target = $region48
        $region47: #{text_encoder_forward.1} parent=31 // pred_region
          %p494 = scmp.lt.s32.totalorder %s23, 1
          %s495 = scalar_select %p494, %s23, 1
          %s496 = scalar_lea.vmem %s5, %s495
        $region48: #{text_encoder_forward.1} parent=31 // pred_fallthru
          _
        // Predicated region
        $region49: #{text_encoder_forward.1} parent=31 // pred_check
          %p497 = pneg %p189
        $region50: #{text_encoder_forward.1} parent=31 // pred_check_branch
          %499 = sbr.rel (%p497) target = $region52
        $region51: #{text_encoder_forward.1} parent=31 // pred_region
          %p500 = scmp.lt.s32.totalorder %s23, 1
          %s501 = scalar_select %p500, %s23, 1
          %s502 = smul.addr %s501, 4
          %s503 = smul.addr %s502, 8
          %s504 = scalar_lea.vmem %s6, %s503
        $region52: #{text_encoder_forward.1} parent=31 // pred_fallthru
          _
        // Predicated region
        $region53: #{text_encoder_forward.1} parent=31 // pred_check
          %p505 = pneg %p215
        $region54: #{text_encoder_forward.1} parent=31 // pred_check_branch
          %507 = sbr.rel (%p505) target = $region56
        $region55: #{text_encoder_forward.1} parent=31 // pred_region
          %p508 = scmp.lt.s32.totalorder %s23, 1
          %s509 = scalar_select %p508, %s23, 1
          %s510 = scalar_lea.vmem %s7, %s509
        $region56: #{text_encoder_forward.1} parent=31 // pred_fallthru
          _
        // Predicated region
        $region57: #{text_encoder_forward.1} parent=31 // pred_check
          %p511 = pneg %p241
        $region58: #{text_encoder_forward.1} parent=31 // pred_check_branch
          %513 = sbr.rel (%p511) target = $region60
        $region59: #{text_encoder_forward.1} parent=31 // pred_region
          %p514 = scmp.lt.s32.totalorder %s23, 1
          %s515 = scalar_select %p514, %s23, 1
          %s516 = scalar_lea.vmem %s8, %s515
        $region60: #{text_encoder_forward.1} parent=31 // pred_fallthru
          _
        // Predicated region
        $region61: #{text_encoder_forward.1} parent=31 // pred_check
          %p517 = pneg %p267
        $region62: #{text_encoder_forward.1} parent=31 // pred_check_branch
          %519 = sbr.rel (%p517) target = $region64
        $region63: #{text_encoder_forward.1} parent=31 // pred_region
          %p520 = scmp.lt.s32.totalorder %s23, 1
          %s521 = scalar_select %p520, %s23, 1
          %s522 = scalar_lea.vmem %s9, %s521
        $region64: #{text_encoder_forward.1} parent=31 // pred_fallthru
          _
        // Predicated region
        $region65: #{text_encoder_forward.1} parent=31 // pred_check
          %p523 = pneg %p293
        $region66: #{text_encoder_forward.1} parent=31 // pred_check_branch
          %525 = sbr.rel (%p523) target = $region68
        $region67: #{text_encoder_forward.1} parent=31 // pred_region
          %p526 = scmp.lt.s32.totalorder %s23, 1
          %s527 = scalar_select %p526, %s23, 1
          %s528 = smul.addr %s527, 4
          %s529 = smul.addr %s528, 8
          %s530 = scalar_lea.vmem %s10, %s529
        $region68: #{text_encoder_forward.1} parent=31 // pred_fallthru
          _
        // Predicated region
        $region69: #{text_encoder_forward.1} parent=31 // pred_check
          %p531 = pneg %p319
        $region70: #{text_encoder_forward.1} parent=31 // pred_check_branch
          %533 = sbr.rel (%p531) target = $region72
        $region71: #{text_encoder_forward.1} parent=31 // pred_region
          %p534 = scmp.lt.s32.totalorder %s23, 1
          %s535 = scalar_select %p534, %s23, 1
          %s536 = scalar_lea.vmem %s11, %s535
        $region72: #{text_encoder_forward.1} parent=31 // pred_fallthru
          _
        // Predicated region
        $region73: #{text_encoder_forward.1} parent=31 // pred_check
          %p537 = pneg %p345
        $region74: #{text_encoder_forward.1} parent=31 // pred_check_branch
          %539 = sbr.rel (%p537) target = $region76
        $region75: #{text_encoder_forward.1} parent=31 // pred_region
          %p540 = scmp.lt.s32.totalorder %s23, 1
          %s541 = scalar_select %p540, %s23, 1
          %s542 = smul.addr %s541, 16
          %s543 = smul.addr %s542, 8
          %s544 = scalar_lea.vmem %s12, %s543
        $region76: #{text_encoder_forward.1} parent=31 // pred_fallthru
          _
        // Predicated region
        $region77: #{text_encoder_forward.1} parent=31 // pred_check
          %p545 = pneg %p371
        $region78: #{text_encoder_forward.1} parent=31 // pred_check_branch
          %547 = sbr.rel (%p545) target = $region80
        $region79: #{text_encoder_forward.1} parent=31 // pred_region
          %p548 = scmp.lt.s32.totalorder %s23, 1
          %s549 = scalar_select %p548, %s23, 1
          %s550 = scalar_lea.vmem %s13, %s549
        $region80: #{text_encoder_forward.1} parent=31 // pred_fallthru
          _
      $region32: #{text_encoder_forward.1} parent=5 // pred_fallthru
        _
      %p551 = scmp.le.s32.totalorder 1, %s23
      %p552 = scmp.lt.s32.totalorder %s23, 3
      %p553 = pnand %p551, %p552
      %p554 = pneg %p553
      // Predicated region
      $region81: #{text_encoder_forward.1} parent=5 // pred_check
        _
      $region82: #{text_encoder_forward.1} parent=5 // pred_check_branch
        %556 = sbr.rel (%p553) target = $region84
      $region83: #{text_encoder_forward.1} parent=5 // pred_region
        %s557 = ssub.s32 %s23, 1
        %p558 = pneg %p44
        %p559 = pneg %p41
        %p560 = pneg %p65
        %p561 = pneg %p62
        %p562 = scmp.lt.s32.totalorder %s28, 1
        %s563 = scalar_select %p562, %s28, 1
        %s564 = scalar_lea.vmem %s2, %s563
        %p565 = pneg %p91
        %p566 = pneg %p88
        %p567 = scmp.lt.s32.totalorder %s28, 1
        %s568 = scalar_select %p567, %s28, 1
        %s569 = scalar_lea.vmem %s3, %s568
        %p570 = pneg %p117
        %p571 = pneg %p114
        %p572 = scmp.lt.s32.totalorder %s28, 1
        %s573 = scalar_select %p572, %s28, 1
        %s574 = smul.addr %s573, 4
        %s575 = smul.addr %s574, 8
        %s576 = scalar_lea.vmem %s4, %s575
        %p577 = pneg %p143
        %p578 = pneg %p140
        %p579 = scmp.lt.s32.totalorder %s28, 1
        %s580 = scalar_select %p579, %s28, 1
        %s581 = scalar_lea.vmem %s5, %s580
        %p582 = pneg %p169
        %p583 = pneg %p166
        %p584 = scmp.lt.s32.totalorder %s28, 1
        %s585 = scalar_select %p584, %s28, 1
        %s586 = smul.addr %s585, 4
        %s587 = smul.addr %s586, 8
        %s588 = scalar_lea.vmem %s6, %s587
        %p589 = pneg %p195
        %p590 = pneg %p192
        %p591 = scmp.lt.s32.totalorder %s28, 1
        %s592 = scalar_select %p591, %s28, 1
        %s593 = scalar_lea.vmem %s7, %s592
        %p594 = pneg %p221
        %p595 = pneg %p218
        %p596 = scmp.lt.s32.totalorder %s28, 1
        %s597 = scalar_select %p596, %s28, 1
        %s598 = scalar_lea.vmem %s8, %s597
        %p599 = pneg %p247
        %p600 = pneg %p244
        %p601 = scmp.lt.s32.totalorder %s28, 1
        %s602 = scalar_select %p601, %s28, 1
        %s603 = scalar_lea.vmem %s9, %s602
        %p604 = pneg %p273
        %p605 = pneg %p270
        %p606 = scmp.lt.s32.totalorder %s28, 1
        %s607 = scalar_select %p606, %s28, 1
        %s608 = smul.addr %s607, 4
        %s609 = smul.addr %s608, 8
        %s610 = scalar_lea.vmem %s10, %s609
        %p611 = pneg %p299
        %p612 = pneg %p296
        %p613 = scmp.lt.s32.totalorder %s28, 1
        %s614 = scalar_select %p613, %s28, 1
        %s615 = scalar_lea.vmem %s11, %s614
        %p616 = pneg %p325
        %p617 = pneg %p322
        %p618 = scmp.lt.s32.totalorder %s28, 1
        %s619 = scalar_select %p618, %s28, 1
        %s620 = smul.addr %s619, 16
        %s621 = smul.addr %s620, 8
        %s622 = scalar_lea.vmem %s12, %s621
        %p623 = pneg %p351
        %p624 = pneg %p348
        %p625 = scmp.lt.s32.totalorder %s28, 1
        %s626 = scalar_select %p625, %s28, 1
        %s627 = scalar_lea.vmem %s13, %s626
        %p628 = pneg %p377
        %p629 = pneg %p374
        %p630 = pneg %p398
        %p631 = pneg %p395
        %p632 = pneg %p419
        %p633 = pneg %p416
        %p634 = pneg %p440
        %p635 = pneg %p437
        %p636 = scmp.lt.s32.totalorder %s28, 1
        %s637 = scalar_select %p636, %s28, 1
        %s638 = scalar_lea.vmem %s2, %s637
        %p639 = scmp.lt.s32.totalorder %s28, 1
        %s640 = scalar_select %p639, %s28, 1
        %s641 = scalar_lea.vmem %s3, %s640
        %p642 = scmp.lt.s32.totalorder %s28, 1
        %s643 = scalar_select %p642, %s28, 1
        %s644 = smul.addr %s643, 4
        %s645 = smul.addr %s644, 8
        %s646 = scalar_lea.vmem %s4, %s645
        %p647 = scmp.lt.s32.totalorder %s28, 1
        %s648 = scalar_select %p647, %s28, 1
        %s649 = scalar_lea.vmem %s5, %s648
        %p650 = scmp.lt.s32.totalorder %s28, 1
        %s651 = scalar_select %p650, %s28, 1
        %s652 = smul.addr %s651, 4
        %s653 = smul.addr %s652, 8
        %s654 = scalar_lea.vmem %s6, %s653
        %p655 = scmp.lt.s32.totalorder %s28, 1
        %s656 = scalar_select %p655, %s28, 1
        %s657 = scalar_lea.vmem %s7, %s656
        %p658 = scmp.lt.s32.totalorder %s28, 1
        %s659 = scalar_select %p658, %s28, 1
        %s660 = scalar_lea.vmem %s8, %s659
        %p661 = scmp.lt.s32.totalorder %s28, 1
        %s662 = scalar_select %p661, %s28, 1
        %s663 = scalar_lea.vmem %s9, %s662
        %p664 = scmp.lt.s32.totalorder %s28, 1
        %s665 = scalar_select %p664, %s28, 1
        %s666 = smul.addr %s665, 4
        %s667 = smul.addr %s666, 8
        %s668 = scalar_lea.vmem %s10, %s667
        %p669 = scmp.lt.s32.totalorder %s28, 1
        %s670 = scalar_select %p669, %s28, 1
        %s671 = scalar_lea.vmem %s11, %s670
        %p672 = scmp.lt.s32.totalorder %s28, 1
        %s673 = scalar_select %p672, %s28, 1
        %s674 = smul.addr %s673, 16
        %s675 = smul.addr %s674, 8
        %s676 = scalar_lea.vmem %s12, %s675
        %p677 = scmp.lt.s32.totalorder %s28, 1
        %s678 = scalar_select %p677, %s28, 1
        %s679 = scalar_lea.vmem %s13, %s678
        %p680 = scmp.eq.s32.totalorder %s28, 0
        // Predicated region
        $region85: #{text_encoder_forward.1} parent=83 // pred_check
          %p681 = pneg %p680
        $region86: #{text_encoder_forward.1} parent=83 // pred_check_branch
          %683 = sbr.rel (%p681) target = $region88
        $region87: #{text_encoder_forward.1} parent=83 // pred_region
          %v684 = vld [vmem:[%s1] sm:$0xff]
          %v685 = vld [vmem:[%s1 + $0x8] sm:$0xff]
          %vm686 = vcmask 261120
          %687 = vst.msk [vmem:[#allocation3] sm:$0xff] %vm686, %v684
          %688 = vst.msk [vmem:[#allocation3 + $0x8] sm:$0xff] %vm686, %v685
        $region88: #{text_encoder_forward.1} parent=83 // pred_fallthru
          _
        %v689 = vld [vmem:[#allocation3] sm:$0xff]
        %v690 = vld [vmem:[#allocation3 + $0x8] sm:$0xff]
        %v691 = vld [vmem:[%s638] sm:$0x1]
        %v692 = vld [vmem:[%s641] sm:$0x1]
        %vm693 = vcmask 261120
        %v694 = vsel %vm693, %v689, 0.0
        %695 = vadd.xlane.f32.xlu0 %v694
        %v696 = vpop.xlane.xlu0 %695
        %v697 = vsel %vm693, %v690, 0.0
        %698 = vadd.xlane.f32.xlu0 %v697
        %v699 = vpop.xlane.xlu0 %698
        %v700 = vrcp.pop 32.0
        %v701 = vmul.f32 %v696, %v700
        %v702 = vmul.f32 %v699, %v700
        %v703 = vsub.f32 %v689, %v701
        %v704 = vsub.f32 %v690, %v702
        %v705 = vmul.f32 %v703, %v703
        %v706 = vmul.f32 %v704, %v704
        %v707 = vsel %vm693, %v705, 0.0
        %708 = vadd.xlane.f32.xlu0 %v707
        %v709 = vpop.xlane.xlu0 %708
        %v710 = vsel %vm693, %v706, 0.0
        %711 = vadd.xlane.f32.xlu0 %v710
        %v712 = vpop.xlane.xlu0 %711
        %v713 = vmul.f32 %v709, %v700
        %v714 = vmul.f32 %v712, %v700
        %v715 = vadd.f32 %v713, 1e-05
        %v716 = vadd.f32 %v714, 1e-05
        %v717 = vrsqrt.pop %v715
        %v718 = vrsqrt.pop %v716
        %v719 = vmul.f32 %v703, %v717
        %v720 = vmul.f32 %v704, %v718
        %v722 = vlaneseq
        %v723 = vshrl.u32 %v722, 7
        %v724 = vsub.s32 0, %v723
        %v725 = vrot.slane %v691, %v724
        %v727 = vmul.f32 %v719, %v725
        %v728 = vmul.f32 %v720, %v725
        %v730 = vlaneseq
        %v731 = vshrl.u32 %v730, 7
        %v732 = vsub.s32 0, %v731
        %v733 = vrot.slane %v692, %v732
        %v735 = vadd.f32 %v727, %v733
        %v736 = vadd.f32 %v728, %v733
        %v737 = vld [vmem:[%s646] sm:$0xff]
        %v738 = vld [vmem:[%s646 + $0x8] sm:$0xff]
        %v739 = vld [vmem:[%s646 + $0x10] sm:$0xff]
        %v740 = vld [vmem:[%s646 + $0x18] sm:$0xff]
        %v741 = vld [vmem:[%s649] sm:$0x1]
        %v743 = vlaneseq
        %v744 = vshrl.u32 %v743, 7
        %v745 = vsub.s32 0, %v744
        %v746 = vrot.slane %v741, %v745
        %v749 = vsel %vm693, %v735, 0
        %v752 = vsel %vm693, %v736, 0
        %754 = vmatprep.subr.mxu0 0.0
        %755 = vmatpush1.msra.mxu0 %v737
        %756 = vmatprep.subr.mxu0 0.0
        %757 = vmatpush1.msra.mxu0 %v738
        %758 = vmatprep.subr.mxu0 0.0
        %759 = vmatpush1.msra.mxu0 %v739
        %760 = vmatprep.subr.mxu0 0.0
        %761 = vmatpush1.msra.mxu0 %v740
        %762 = vmatprep.subr.mxu0 0.0
        %763 = vmatpush1.msra.mxu0 0.0
        %764 = vmatprep.subr.mxu0 0.0
        %765 = vmatpush1.msra.mxu0 0.0
        %766 = vmatprep.subr.mxu0 0.0
        %767 = vmatpush1.msra.mxu0 0.0
        %768 = vmatprep.subr.mxu0 0.0
        %769 = vmatpush1.msra.mxu0 0.0
        %770 = vmatprep.subr.mxu0 0.0
        %771 = vmatpush1.msra.mxu0 0.0
        %772 = vmatprep.subr.mxu0 0.0
        %773 = vmatpush1.msra.mxu0 0.0
        %774 = vmatprep.subr.mxu0 0.0
        %775 = vmatpush1.msra.mxu0 0.0
        %776 = vmatprep.subr.mxu0 0.0
        %777 = vmatpush1.msra.mxu0 0.0
        %778 = vmatprep.subr.mxu0 0.0
        %779 = vmatpush1.msra.mxu0 0.0
        %780 = vmatprep.subr.mxu0 0.0
        %781 = vmatpush1.msra.mxu0 0.0
        %782 = vmatprep.subr.mxu0 0.0
        %783 = vmatpush1.msra.mxu0 0.0
        %784 = vmatprep.subr.mxu0 0.0
        %785 = vmatpush1.msra.mxu0 0.0
        %786 = vmatprep.subr.mxu0 0.0
        %787 = vmatpush1.msra.mxu0 0.0
        %788 = vmatprep.subr.mxu0 0.0
        %789 = vmatpush1.msra.mxu0 0.0
        %790 = vmatprep.subr.mxu0 0.0
        %791 = vmatpush1.msra.mxu0 0.0
        %792 = vmatprep.subr.mxu0 0.0
        %793 = vmatpush1.msra.mxu0 0.0
        %794 = vmatprep.subr.mxu0 0.0
        %795 = vmatpush1.msra.mxu0 0.0
        %796 = vmatprep.subr.mxu0 0.0
        %797 = vmatpush1.msra.mxu0 0.0
        %798 = vmatprep.subr.mxu0 0.0
        %799 = vmatpush1.msra.mxu0 0.0
        %800 = vmatprep.subr.mxu0 0.0
        %801 = vmatpush1.msra.mxu0 0.0
        %802 = vmatprep.subr.mxu0 0.0
        %803 = vmatpush1.msra.mxu0 0.0
        %804 = vmatprep.subr.mxu0 0.0
        %805 = vmatpush1.msra.mxu0 0.0
        %806 = vmatprep.subr.mxu0 0.0
        %807 = vmatpush1.msra.mxu0 0.0
        %808 = vmatprep.subr.mxu0 0.0
        %809 = vmatpush1.msra.mxu0 0.0
        %810 = vmatprep.subr.mxu0 0.0
        %811 = vmatpush1.msra.mxu0 0.0
        %812 = vmatprep.subr.mxu0 0.0
        %813 = vmatpush1.msra.mxu0 0.0
        %814 = vmatprep.subr.mxu0 0.0
        %815 = vmatpush1.msra.mxu0 0.0
        %816 = vmatprep.subr.mxu0 0.0
        %817 = vmatpush1.msra.mxu0 0.0
        %818 = vmatprep.mubr.f32.mxu0 0.0
        %819 = vmatmul.mubr.f32.gmra.mrb[0].mxu0 %v749
        %v820 = vpop.f32.mrb[0].mxu0
        %v821 = vadd.f32 %v746, %v820
        %v822 = vpop.f32.mrb[0].mxu0
        %823 = vmatprep.mubr.f32.mxu0 0.0
        %824 = vmatmul.mubr.f32.gmra.mrb[0].mxu0 %v752
        %v825 = vpop.f32.mrb[0].mxu0
        %v826 = vadd.f32 %v746, %v825
        %v827 = vpop.f32.mrb[0].mxu0
        %828 = vdwg.mxu0
        %v829 = vmul.f32 %v821, 0.35355338
        %v830 = vmul.f32 %v826, 0.35355338
        %v831 = vlaneseq
        %v832 = vshrl.u32 %v831, 7
        %v833 = vlaneseq
        %v834 = vand.u32 %v833, 127
        %vm835 = vcmp.gt.s32.totalorder %v834, %v832
        %v836 = vsel %vm835, -1e+09, 0.0
        %v837 = vld [vmem:[%s0] sm:$0x3]
        %v838 = vsub.f32 1.0, %v837
        %v839 = vmul.f32 %v838, -1e+09
        %v840 = vld [vmem:[%s654] sm:$0xff]
        %v841 = vld [vmem:[%s654 + $0x8] sm:$0xff]
        %v842 = vld [vmem:[%s654 + $0x10] sm:$0xff]
        %v843 = vld [vmem:[%s654 + $0x18] sm:$0xff]
        %v844 = vlaneseq
        %v845 = vshrl.u32 %v844, 7
        %v846 = vsub.s32 0, %v845
        %v847 = vrot.slane %v839, %v846
        %v848 = vadd.f32 %v836, %v847
        %850 = vrot.lane.b32.xlu0 %v821, 96
        %v851 = vpop.permute.xlu0 %850
        %vm852 = vcmask 64512
        %v854 = vsel %vm852, %v829, 0
        %v856 = vsel %vm852, %v851, 0
        %858 = vmatprep.subr.mxu0 0.0
        %859 = vmatpush1.xpose.msra.mxu0 %v856
        %860 = vmatprep.subr.mxu0 0.0
        %861 = vmatpush1.xpose.msra.mxu0 0.0
        %862 = vmatprep.subr.mxu0 0.0
        %863 = vmatpush1.xpose.msra.mxu0 0.0
        %864 = vmatprep.subr.mxu0 0.0
        %865 = vmatpush1.xpose.msra.mxu0 0.0
        %866 = vmatprep.subr.mxu0 0.0
        %867 = vmatpush1.xpose.msra.mxu0 0.0
        %868 = vmatprep.subr.mxu0 0.0
        %869 = vmatpush1.xpose.msra.mxu0 0.0
        %870 = vmatprep.subr.mxu0 0.0
        %871 = vmatpush1.xpose.msra.mxu0 0.0
        %872 = vmatprep.subr.mxu0 0.0
        %873 = vmatpush1.xpose.msra.mxu0 0.0
        %874 = vmatprep.subr.mxu0 0.0
        %875 = vmatpush1.xpose.msra.mxu0 0.0
        %876 = vmatprep.subr.mxu0 0.0
        %877 = vmatpush1.xpose.msra.mxu0 0.0
        %878 = vmatprep.subr.mxu0 0.0
        %879 = vmatpush1.xpose.msra.mxu0 0.0
        %880 = vmatprep.subr.mxu0 0.0
        %881 = vmatpush1.xpose.msra.mxu0 0.0
        %882 = vmatprep.subr.mxu0 0.0
        %883 = vmatpush1.xpose.msra.mxu0 0.0
        %884 = vmatprep.subr.mxu0 0.0
        %885 = vmatpush1.xpose.msra.mxu0 0.0
        %886 = vmatprep.subr.mxu0 0.0
        %887 = vmatpush1.xpose.msra.mxu0 0.0
        %888 = vmatprep.subr.mxu0 0.0
        %889 = vmatpush1.xpose.msra.mxu0 0.0
        %890 = vmatprep.subr.mxu0 0.0
        %891 = vmatpush1.xpose.msra.mxu0 0.0
        %892 = vmatprep.subr.mxu0 0.0
        %893 = vmatpush1.xpose.msra.mxu0 0.0
        %894 = vmatprep.subr.mxu0 0.0
        %895 = vmatpush1.xpose.msra.mxu0 0.0
        %896 = vmatprep.subr.mxu0 0.0
        %897 = vmatpush1.xpose.msra.mxu0 0.0
        %898 = vmatprep.subr.mxu0 0.0
        %899 = vmatpush1.xpose.msra.mxu0 0.0
        %900 = vmatprep.subr.mxu0 0.0
        %901 = vmatpush1.xpose.msra.mxu0 0.0
        %902 = vmatprep.subr.mxu0 0.0
        %903 = vmatpush1.xpose.msra.mxu0 0.0
        %904 = vmatprep.subr.mxu0 0.0
        %905 = vmatpush1.xpose.msra.mxu0 0.0
        %906 = vmatprep.subr.mxu0 0.0
        %907 = vmatpush1.xpose.msra.mxu0 0.0
        %908 = vmatprep.subr.mxu0 0.0
        %909 = vmatpush1.xpose.msra.mxu0 0.0
        %910 = vmatprep.subr.mxu0 0.0
        %911 = vmatpush1.xpose.msra.mxu0 0.0
        %912 = vmatprep.subr.mxu0 0.0
        %913 = vmatpush1.xpose.msra.mxu0 0.0
        %914 = vmatprep.subr.mxu0 0.0
        %915 = vmatpush1.xpose.msra.mxu0 0.0
        %916 = vmatprep.subr.mxu0 0.0
        %917 = vmatpush1.xpose.msra.mxu0 0.0
        %918 = vmatprep.subr.mxu0 0.0
        %919 = vmatpush1.xpose.msra.mxu0 0.0
        %920 = vmatprep.subr.mxu0 0.0
        %921 = vmatpush1.xpose.msra.mxu0 0.0
        %922 = vmatprep.mubr.f32.mxu0 0.0
        %923 = vmatmul.mubr.f32.gmra.mrb[0].mxu0 %v854
        %v924 = vpop.f32.mrb[0].mxu0
        %v925 = vadd.f32 %v848, %v924
        %v926 = vpop.f32.mrb[0].mxu0
        %927 = vdwg.mxu0
        %v928 = vsel %vm852, %v925, -inf
        %929 = vmax.xlane.f32.xlu0 %v928
        %v930 = vpop.xlane.xlu0 %929
        %v931 = vsub.f32 %v925, %v930
        %v932 = vmul.f32 %v931, 1.442695
        %v933 = vpow.pop %v932
        %v934 = vsel %vm852, %v933, 0.0
        %935 = vadd.xlane.f32.xlu0 %v934
        %v936 = vpop.xlane.xlu0 %935
        %v937 = vrcp.pop %v936
        %v938 = vmul.f32 %v933, %v937
        %939 = vrot.lane.b32.xlu0 %v821, 64
        %v940 = vpop.permute.xlu0 %939
        %v943 = vsel %vm852, %v938, 0
        %945 = vmatprep.subr.mxu0 0.0
        %946 = vmatpush1.msra.mxu0 %v940
        %947 = vmatprep.subr.mxu0 0.0
        %948 = vmatpush1.msra.mxu0 0.0
        %949 = vmatprep.subr.mxu0 0.0
        %950 = vmatpush1.msra.mxu0 0.0
        %951 = vmatprep.subr.mxu0 0.0
        %952 = vmatpush1.msra.mxu0 0.0
        %953 = vmatprep.subr.mxu0 0.0
        %954 = vmatpush1.msra.mxu0 0.0
        %955 = vmatprep.subr.mxu0 0.0
        %956 = vmatpush1.msra.mxu0 0.0
        %957 = vmatprep.subr.mxu0 0.0
        %958 = vmatpush1.msra.mxu0 0.0
        %959 = vmatprep.subr.mxu0 0.0
        %960 = vmatpush1.msra.mxu0 0.0
        %961 = vmatprep.subr.mxu0 0.0
        %962 = vmatpush1.msra.mxu0 0.0
        %963 = vmatprep.subr.mxu0 0.0
        %964 = vmatpush1.msra.mxu0 0.0
        %965 = vmatprep.subr.mxu0 0.0
        %966 = vmatpush1.msra.mxu0 0.0
        %967 = vmatprep.subr.mxu0 0.0
        %968 = vmatpush1.msra.mxu0 0.0
        %969 = vmatprep.subr.mxu0 0.0
        %970 = vmatpush1.msra.mxu0 0.0
        %971 = vmatprep.subr.mxu0 0.0
        %972 = vmatpush1.msra.mxu0 0.0
        %973 = vmatprep.subr.mxu0 0.0
        %974 = vmatpush1.msra.mxu0 0.0
        %975 = vmatprep.subr.mxu0 0.0
        %976 = vmatpush1.msra.mxu0 0.0
        %977 = vmatprep.subr.mxu0 0.0
        %978 = vmatpush1.msra.mxu0 0.0
        %979 = vmatprep.subr.mxu0 0.0
        %980 = vmatpush1.msra.mxu0 0.0
        %981 = vmatprep.subr.mxu0 0.0
        %982 = vmatpush1.msra.mxu0 0.0
        %983 = vmatprep.subr.mxu0 0.0
        %984 = vmatpush1.msra.mxu0 0.0
        %985 = vmatprep.subr.mxu0 0.0
        %986 = vmatpush1.msra.mxu0 0.0
        %987 = vmatprep.subr.mxu0 0.0
        %988 = vmatpush1.msra.mxu0 0.0
        %989 = vmatprep.subr.mxu0 0.0
        %990 = vmatpush1.msra.mxu0 0.0
        %991 = vmatprep.subr.mxu0 0.0
        %992 = vmatpush1.msra.mxu0 0.0
        %993 = vmatprep.subr.mxu0 0.0
        %994 = vmatpush1.msra.mxu0 0.0
        %995 = vmatprep.subr.mxu0 0.0
        %996 = vmatpush1.msra.mxu0 0.0
        %997 = vmatprep.subr.mxu0 0.0
        %998 = vmatpush1.msra.mxu0 0.0
        %999 = vmatprep.subr.mxu0 0.0
        %1000 = vmatpush1.msra.mxu0 0.0
        %1001 = vmatprep.subr.mxu0 0.0
        %1002 = vmatpush1.msra.mxu0 0.0
        %1003 = vmatprep.subr.mxu0 0.0
        %1004 = vmatpush1.msra.mxu0 0.0
        %1005 = vmatprep.subr.mxu0 0.0
        %1006 = vmatpush1.msra.mxu0 0.0
        %1007 = vmatprep.subr.mxu0 0.0
        %1008 = vmatpush1.msra.mxu0 0.0
        %1009 = vmatprep.mubr.f32.mxu0 0.0
        %1010 = vmatmul.mubr.f32.gmra.mrb[0].mxu0 %v943
        %v1011 = vpop.f32.mrb[0].mxu0
        %v1012 = vadd.f32 0.0, %v1011
        %v1013 = vpop.f32.mrb[0].mxu0
        %1014 = vdwg.mxu0
        %1015 = vrot.lane.b32.xlu0 %v829, 120
        %v1016 = vpop.permute.xlu0 %1015
        %1017 = vrot.lane.b32.xlu0 %v821, 88
        %v1018 = vpop.permute.xlu0 %1017
        %v1019 = vsel %vm852, %v1016, 0
        %v1021 = vsel %vm852, %v1018, 0
        %1023 = vmatprep.subr.mxu0 0.0
        %1024 = vmatpush1.xpose.msra.mxu0 %v1021
        %1025 = vmatprep.subr.mxu0 0.0
        %1026 = vmatpush1.xpose.msra.mxu0 0.0
        %1027 = vmatprep.subr.mxu0 0.0
        %1028 = vmatpush1.xpose.msra.mxu0 0.0
        %1029 = vmatprep.subr.mxu0 0.0
        %1030 = vmatpush1.xpose.msra.mxu0 0.0
        %1031 = vmatprep.subr.mxu0 0.0
        %1032 = vmatpush1.xpose.msra.mxu0 0.0
        %1033 = vmatprep.subr.mxu0 0.0
        %1034 = vmatpush1.xpose.msra.mxu0 0.0
        %1035 = vmatprep.subr.mxu0 0.0
        %1036 = vmatpush1.xpose.msra.mxu0 0.0
        %1037 = vmatprep.subr.mxu0 0.0
        %1038 = vmatpush1.xpose.msra.mxu0 0.0
        %1039 = vmatprep.subr.mxu0 0.0
        %1040 = vmatpush1.xpose.msra.mxu0 0.0
        %1041 = vmatprep.subr.mxu0 0.0
        %1042 = vmatpush1.xpose.msra.mxu0 0.0
        %1043 = vmatprep.subr.mxu0 0.0
        %1044 = vmatpush1.xpose.msra.mxu0 0.0
        %1045 = vmatprep.subr.mxu0 0.0
        %1046 = vmatpush1.xpose.msra.mxu0 0.0
        %1047 = vmatprep.subr.mxu0 0.0
        %1048 = vmatpush1.xpose.msra.mxu0 0.0
        %1049 = vmatprep.subr.mxu0 0.0
        %1050 = vmatpush1.xpose.msra.mxu0 0.0
        %1051 = vmatprep.subr.mxu0 0.0
        %1052 = vmatpush1.xpose.msra.mxu0 0.0
        %1053 = vmatprep.subr.mxu0 0.0
        %1054 = vmatpush1.xpose.msra.mxu0 0.0
        %1055 = vmatprep.subr.mxu0 0.0
        %1056 = vmatpush1.xpose.msra.mxu0 0.0
        %1057 = vmatprep.subr.mxu0 0.0
        %1058 = vmatpush1.xpose.msra.mxu0 0.0
        %1059 = vmatprep.subr.mxu0 0.0
        %1060 = vmatpush1.xpose.msra.mxu0 0.0
        %1061 = vmatprep.subr.mxu0 0.0
        %1062 = vmatpush1.xpose.msra.mxu0 0.0
        %1063 = vmatprep.subr.mxu0 0.0
        %1064 = vmatpush1.xpose.msra.mxu0 0.0
        %1065 = vmatprep.subr.mxu0 0.0
        %1066 = vmatpush1.xpose.msra.mxu0 0.0
        %1067 = vmatprep.subr.mxu0 0.0
        %1068 = vmatpush1.xpose.msra.mxu0 0.0
        %1069 = vmatprep.subr.mxu0 0.0
        %1070 = vmatpush1.xpose.msra.mxu0 0.0
        %1071 = vmatprep.subr.mxu0 0.0
        %1072 = vmatpush1.xpose.msra.mxu0 0.0
        %1073 = vmatprep.subr.mxu0 0.0
        %1074 = vmatpush1.xpose.msra.mxu0 0.0
        %1075 = vmatprep.subr.mxu0 0.0
        %1076 = vmatpush1.xpose.msra.mxu0 0.0
        %1077 = vmatprep.subr.mxu0 0.0
        %1078 = vmatpush1.xpose.msra.mxu0 0.0
        %1079 = vmatprep.subr.mxu0 0.0
        %1080 = vmatpush1.xpose.msra.mxu0 0.0
        %1081 = vmatprep.subr.mxu0 0.0
        %1082 = vmatpush1.xpose.msra.mxu0 0.0
        %1083 = vmatprep.subr.mxu0 0.0
        %1084 = vmatpush1.xpose.msra.mxu0 0.0
        %1085 = vmatprep.subr.mxu0 0.0
        %1086 = vmatpush1.xpose.msra.mxu0 0.0
        %1087 = vmatprep.mubr.f32.mxu0 0.0
        %1088 = vmatmul.mubr.f32.gmra.mrb[0].mxu0 %v1019
        %v1089 = vpop.f32.mrb[0].mxu0
        %v1090 = vadd.f32 %v848, %v1089
        %v1091 = vpop.f32.mrb[0].mxu0
        %1092 = vdwg.mxu0
        %v1093 = vsel %vm852, %v1090, -inf
        %1094 = vmax.xlane.f32.xlu0 %v1093
        %v1095 = vpop.xlane.xlu0 %1094
        %v1096 = vsub.f32 %v1090, %v1095
        %v1097 = vmul.f32 %v1096, 1.442695
        %v1098 = vpow.pop %v1097
        %v1099 = vsel %vm852, %v1098, 0.0
        %1100 = vadd.xlane.f32.xlu0 %v1099
        %v1101 = vpop.xlane.xlu0 %1100
        %v1102 = vrcp.pop %v1101
        %v1103 = vmul.f32 %v1098, %v1102
        %1104 = vrot.lane.b32.xlu0 %v821, 56
        %v1105 = vpop.permute.xlu0 %1104
        %v1108 = vsel %vm852, %v1103, 0
        %1110 = vmatprep.subr.mxu0 0.0
        %1111 = vmatpush1.msra.mxu0 %v1105
        %1112 = vmatprep.subr.mxu0 0.0
        %1113 = vmatpush1.msra.mxu0 0.0
        %1114 = vmatprep.subr.mxu0 0.0
        %1115 = vmatpush1.msra.mxu0 0.0
        %1116 = vmatprep.subr.mxu0 0.0
        %1117 = vmatpush1.msra.mxu0 0.0
        %1118 = vmatprep.subr.mxu0 0.0
        %1119 = vmatpush1.msra.mxu0 0.0
        %1120 = vmatprep.subr.mxu0 0.0
        %1121 = vmatpush1.msra.mxu0 0.0
        %1122 = vmatprep.subr.mxu0 0.0
        %1123 = vmatpush1.msra.mxu0 0.0
        %1124 = vmatprep.subr.mxu0 0.0
        %1125 = vmatpush1.msra.mxu0 0.0
        %1126 = vmatprep.subr.mxu0 0.0
        %1127 = vmatpush1.msra.mxu0 0.0
        %1128 = vmatprep.subr.mxu0 0.0
        %1129 = vmatpush1.msra.mxu0 0.0
        %1130 = vmatprep.subr.mxu0 0.0
        %1131 = vmatpush1.msra.mxu0 0.0
        %1132 = vmatprep.subr.mxu0 0.0
        %1133 = vmatpush1.msra.mxu0 0.0
        %1134 = vmatprep.subr.mxu0 0.0
        %1135 = vmatpush1.msra.mxu0 0.0
        %1136 = vmatprep.subr.mxu0 0.0
        %1137 = vmatpush1.msra.mxu0 0.0
        %1138 = vmatprep.subr.mxu0 0.0
        %1139 = vmatpush1.msra.mxu0 0.0
        %1140 = vmatprep.subr.mxu0 0.0
        %1141 = vmatpush1.msra.mxu0 0.0
        %1142 = vmatprep.subr.mxu0 0.0
        %1143 = vmatpush1.msra.mxu0 0.0
        %1144 = vmatprep.subr.mxu0 0.0
        %1145 = vmatpush1.msra.mxu0 0.0
        %1146 = vmatprep.subr.mxu0 0.0
        %1147 = vmatpush1.msra.mxu0 0.0
        %1148 = vmatprep.subr.mxu0 0.0
        %1149 = vmatpush1.msra.mxu0 0.0
        %1150 = vmatprep.subr.mxu0 0.0
        %1151 = vmatpush1.msra.mxu0 0.0
        %1152 = vmatprep.subr.mxu0 0.0
        %1153 = vmatpush1.msra.mxu0 0.0
        %1154 = vmatprep.subr.mxu0 0.0
        %1155 = vmatpush1.msra.mxu0 0.0
        %1156 = vmatprep.subr.mxu0 0.0
        %1157 = vmatpush1.msra.mxu0 0.0
        %1158 = vmatprep.subr.mxu0 0.0
        %1159 = vmatpush1.msra.mxu0 0.0
        %1160 = vmatprep.subr.mxu0 0.0
        %1161 = vmatpush1.msra.mxu0 0.0
        %1162 = vmatprep.subr.mxu0 0.0
        %1163 = vmatpush1.msra.mxu0 0.0
        %1164 = vmatprep.subr.mxu0 0.0
        %1165 = vmatpush1.msra.mxu0 0.0
        %1166 = vmatprep.subr.mxu0 0.0
        %1167 = vmatpush1.msra.mxu0 0.0
        %1168 = vmatprep.subr.mxu0 0.0
        %1169 = vmatpush1.msra.mxu0 0.0
        %1170 = vmatprep.subr.mxu0 0.0
        %1171 = vmatpush1.msra.mxu0 0.0
        %1172 = vmatprep.subr.mxu0 0.0
        %1173 = vmatpush1.msra.mxu0 0.0
        %1174 = vmatprep.mubr.f32.mxu0 0.0
        %1175 = vmatmul.mubr.f32.gmra.mrb[0].mxu0 %v1108
        %v1176 = vpop.f32.mrb[0].mxu0
        %v1177 = vadd.f32 0.0, %v1176
        %v1178 = vpop.f32.mrb[0].mxu0
        %1179 = vdwg.mxu0
        %v1181 = vsel %vm852, %v1177, 0
        %1183 = vmatprep.subr.mxu0 0.0
        %1184 = vmatpush1.msra.mxu0 %v841
        %1185 = vmatprep.subr.mxu0 0.0
        %1186 = vmatpush1.msra.mxu0 0.0
        %1187 = vmatprep.subr.mxu0 0.0
        %1188 = vmatpush1.msra.mxu0 0.0
        %1189 = vmatprep.subr.mxu0 0.0
        %1190 = vmatpush1.msra.mxu0 0.0
        %1191 = vmatprep.subr.mxu0 0.0
        %1192 = vmatpush1.msra.mxu0 0.0
        %1193 = vmatprep.subr.mxu0 0.0
        %1194 = vmatpush1.msra.mxu0 0.0
        %1195 = vmatprep.subr.mxu0 0.0
        %1196 = vmatpush1.msra.mxu0 0.0
        %1197 = vmatprep.subr.mxu0 0.0
        %1198 = vmatpush1.msra.mxu0 0.0
        %1199 = vmatprep.subr.mxu0 0.0
        %1200 = vmatpush1.msra.mxu0 0.0
        %1201 = vmatprep.subr.mxu0 0.0
        %1202 = vmatpush1.msra.mxu0 0.0
        %1203 = vmatprep.subr.mxu0 0.0
        %1204 = vmatpush1.msra.mxu0 0.0
        %1205 = vmatprep.subr.mxu0 0.0
        %1206 = vmatpush1.msra.mxu0 0.0
        %1207 = vmatprep.subr.mxu0 0.0
        %1208 = vmatpush1.msra.mxu0 0.0
        %1209 = vmatprep.subr.mxu0 0.0
        %1210 = vmatpush1.msra.mxu0 0.0
        %1211 = vmatprep.subr.mxu0 0.0
        %1212 = vmatpush1.msra.mxu0 0.0
        %1213 = vmatprep.subr.mxu0 0.0
        %1214 = vmatpush1.msra.mxu0 0.0
        %1215 = vmatprep.subr.mxu0 0.0
        %1216 = vmatpush1.msra.mxu0 0.0
        %1217 = vmatprep.subr.mxu0 0.0
        %1218 = vmatpush1.msra.mxu0 0.0
        %1219 = vmatprep.subr.mxu0 0.0
        %1220 = vmatpush1.msra.mxu0 0.0
        %1221 = vmatprep.subr.mxu0 0.0
        %1222 = vmatpush1.msra.mxu0 0.0
        %1223 = vmatprep.subr.mxu0 0.0
        %1224 = vmatpush1.msra.mxu0 0.0
        %1225 = vmatprep.subr.mxu0 0.0
        %1226 = vmatpush1.msra.mxu0 0.0
        %1227 = vmatprep.subr.mxu0 0.0
        %1228 = vmatpush1.msra.mxu0 0.0
        %1229 = vmatprep.subr.mxu0 0.0
        %1230 = vmatpush1.msra.mxu0 0.0
        %1231 = vmatprep.subr.mxu0 0.0
        %1232 = vmatpush1.msra.mxu0 0.0
        %1233 = vmatprep.subr.mxu0 0.0
        %1234 = vmatpush1.msra.mxu0 0.0
        %1235 = vmatprep.subr.mxu0 0.0
        %1236 = vmatpush1.msra.mxu0 0.0
        %1237 = vmatprep.subr.mxu0 0.0
        %1238 = vmatpush1.msra.mxu0 0.0
        %1239 = vmatprep.subr.mxu0 0.0
        %1240 = vmatpush1.msra.mxu0 0.0
        %1241 = vmatprep.subr.mxu0 0.0
        %1242 = vmatpush1.msra.mxu0 0.0
        %1243 = vmatprep.subr.mxu0 0.0
        %1244 = vmatpush1.msra.mxu0 0.0
        %1245 = vmatprep.subr.mxu0 0.0
        %1246 = vmatpush1.msra.mxu0 0.0
        %1247 = vmatprep.mubr.f32.mxu0 0.0
        %1248 = vmatmul.mubr.f32.gmra.mrb[0].mxu0 %v1181
        %v1249 = vpop.f32.mrb[0].mxu0
        %v1250 = vadd.f32 0.0, %v1249
        %v1251 = vpop.f32.mrb[0].mxu0
        %1252 = vdwg.mxu0
        %v1254 = vsel %vm852, %v1012, 0
        %1256 = vmatprep.subr.mxu0 0.0
        %1257 = vmatpush1.msra.mxu0 %v840
        %1258 = vmatprep.subr.mxu0 0.0
        %1259 = vmatpush1.msra.mxu0 0.0
        %1260 = vmatprep.subr.mxu0 0.0
        %1261 = vmatpush1.msra.mxu0 0.0
        %1262 = vmatprep.subr.mxu0 0.0
        %1263 = vmatpush1.msra.mxu0 0.0
        %1264 = vmatprep.subr.mxu0 0.0
        %1265 = vmatpush1.msra.mxu0 0.0
        %1266 = vmatprep.subr.mxu0 0.0
        %1267 = vmatpush1.msra.mxu0 0.0
        %1268 = vmatprep.subr.mxu0 0.0
        %1269 = vmatpush1.msra.mxu0 0.0
        %1270 = vmatprep.subr.mxu0 0.0
        %1271 = vmatpush1.msra.mxu0 0.0
        %1272 = vmatprep.subr.mxu0 0.0
        %1273 = vmatpush1.msra.mxu0 0.0
        %1274 = vmatprep.subr.mxu0 0.0
        %1275 = vmatpush1.msra.mxu0 0.0
        %1276 = vmatprep.subr.mxu0 0.0
        %1277 = vmatpush1.msra.mxu0 0.0
        %1278 = vmatprep.subr.mxu0 0.0
        %1279 = vmatpush1.msra.mxu0 0.0
        %1280 = vmatprep.subr.mxu0 0.0
        %1281 = vmatpush1.msra.mxu0 0.0
        %1282 = vmatprep.subr.mxu0 0.0
        %1283 = vmatpush1.msra.mxu0 0.0
        %1284 = vmatprep.subr.mxu0 0.0
        %1285 = vmatpush1.msra.mxu0 0.0
        %1286 = vmatprep.subr.mxu0 0.0
        %1287 = vmatpush1.msra.mxu0 0.0
        %1288 = vmatprep.subr.mxu0 0.0
        %1289 = vmatpush1.msra.mxu0 0.0
        %1290 = vmatprep.subr.mxu0 0.0
        %1291 = vmatpush1.msra.mxu0 0.0
        %1292 = vmatprep.subr.mxu0 0.0
        %1293 = vmatpush1.msra.mxu0 0.0
        %1294 = vmatprep.subr.mxu0 0.0
        %1295 = vmatpush1.msra.mxu0 0.0
        %1296 = vmatprep.subr.mxu0 0.0
        %1297 = vmatpush1.msra.mxu0 0.0
        %1298 = vmatprep.subr.mxu0 0.0
        %1299 = vmatpush1.msra.mxu0 0.0
        %1300 = vmatprep.subr.mxu0 0.0
        %1301 = vmatpush1.msra.mxu0 0.0
        %1302 = vmatprep.subr.mxu0 0.0
        %1303 = vmatpush1.msra.mxu0 0.0
        %1304 = vmatprep.subr.mxu0 0.0
        %1305 = vmatpush1.msra.mxu0 0.0
        %1306 = vmatprep.subr.mxu0 0.0
        %1307 = vmatpush1.msra.mxu0 0.0
        %1308 = vmatprep.subr.mxu0 0.0
        %1309 = vmatpush1.msra.mxu0 0.0
        %1310 = vmatprep.subr.mxu0 0.0
        %1311 = vmatpush1.msra.mxu0 0.0
        %1312 = vmatprep.subr.mxu0 0.0
        %1313 = vmatpush1.msra.mxu0 0.0
        %1314 = vmatprep.subr.mxu0 0.0
        %1315 = vmatpush1.msra.mxu0 0.0
        %1316 = vmatprep.subr.mxu0 0.0
        %1317 = vmatpush1.msra.mxu0 0.0
        %1318 = vmatprep.subr.mxu0 0.0
        %1319 = vmatpush1.msra.mxu0 0.0
        %1320 = vmatprep.mubr.f32.mxu0 0.0
        %1321 = vmatmul.mubr.f32.gmra.mrb[0].mxu0 %v1254
        %v1322 = vpop.f32.mrb[0].mxu0
        %v1323 = vadd.f32 %v1250, %v1322
        %v1324 = vpop.f32.mrb[0].mxu0
        %1325 = vdwg.mxu0
        %1326 = vrot.lane.b32.xlu0 %v829, 112
        %v1327 = vpop.permute.xlu0 %1326
        %1328 = vrot.lane.b32.xlu0 %v821, 80
        %v1329 = vpop.permute.xlu0 %1328
        %v1330 = vsel %vm852, %v1327, 0
        %v1332 = vsel %vm852, %v1329, 0
        %1334 = vmatprep.subr.mxu0 0.0
        %1335 = vmatpush1.xpose.msra.mxu0 %v1332
        %1336 = vmatprep.subr.mxu0 0.0
        %1337 = vmatpush1.xpose.msra.mxu0 0.0
        %1338 = vmatprep.subr.mxu0 0.0
        %1339 = vmatpush1.xpose.msra.mxu0 0.0
        %1340 = vmatprep.subr.mxu0 0.0
        %1341 = vmatpush1.xpose.msra.mxu0 0.0
        %1342 = vmatprep.subr.mxu0 0.0
        %1343 = vmatpush1.xpose.msra.mxu0 0.0
        %1344 = vmatprep.subr.mxu0 0.0
        %1345 = vmatpush1.xpose.msra.mxu0 0.0
        %1346 = vmatprep.subr.mxu0 0.0
        %1347 = vmatpush1.xpose.msra.mxu0 0.0
        %1348 = vmatprep.subr.mxu0 0.0
        %1349 = vmatpush1.xpose.msra.mxu0 0.0
        %1350 = vmatprep.subr.mxu0 0.0
        %1351 = vmatpush1.xpose.msra.mxu0 0.0
        %1352 = vmatprep.subr.mxu0 0.0
        %1353 = vmatpush1.xpose.msra.mxu0 0.0
        %1354 = vmatprep.subr.mxu0 0.0
        %1355 = vmatpush1.xpose.msra.mxu0 0.0
        %1356 = vmatprep.subr.mxu0 0.0
        %1357 = vmatpush1.xpose.msra.mxu0 0.0
        %1358 = vmatprep.subr.mxu0 0.0
        %1359 = vmatpush1.xpose.msra.mxu0 0.0
        %1360 = vmatprep.subr.mxu0 0.0
        %1361 = vmatpush1.xpose.msra.mxu0 0.0
        %1362 = vmatprep.subr.mxu0 0.0
        %1363 = vmatpush1.xpose.msra.mxu0 0.0
        %1364 = vmatprep.subr.mxu0 0.0
        %1365 = vmatpush1.xpose.msra.mxu0 0.0
        %1366 = vmatprep.subr.mxu0 0.0
        %1367 = vmatpush1.xpose.msra.mxu0 0.0
        %1368 = vmatprep.subr.mxu0 0.0
        %1369 = vmatpush1.xpose.msra.mxu0 0.0
        %1370 = vmatprep.subr.mxu0 0.0
        %1371 = vmatpush1.xpose.msra.mxu0 0.0
        %1372 = vmatprep.subr.mxu0 0.0
        %1373 = vmatpush1.xpose.msra.mxu0 0.0
        %1374 = vmatprep.subr.mxu0 0.0
        %1375 = vmatpush1.xpose.msra.mxu0 0.0
        %1376 = vmatprep.subr.mxu0 0.0
        %1377 = vmatpush1.xpose.msra.mxu0 0.0
        %1378 = vmatprep.subr.mxu0 0.0
        %1379 = vmatpush1.xpose.msra.mxu0 0.0
        %1380 = vmatprep.subr.mxu0 0.0
        %1381 = vmatpush1.xpose.msra.mxu0 0.0
        %1382 = vmatprep.subr.mxu0 0.0
        %1383 = vmatpush1.xpose.msra.mxu0 0.0
        %1384 = vmatprep.subr.mxu0 0.0
        %1385 = vmatpush1.xpose.msra.mxu0 0.0
        %1386 = vmatprep.subr.mxu0 0.0
        %1387 = vmatpush1.xpose.msra.mxu0 0.0
        %1388 = vmatprep.subr.mxu0 0.0
        %1389 = vmatpush1.xpose.msra.mxu0 0.0
        %1390 = vmatprep.subr.mxu0 0.0
        %1391 = vmatpush1.xpose.msra.mxu0 0.0
        %1392 = vmatprep.subr.mxu0 0.0
        %1393 = vmatpush1.xpose.msra.mxu0 0.0
        %1394 = vmatprep.subr.mxu0 0.0
        %1395 = vmatpush1.xpose.msra.mxu0 0.0
        %1396 = vmatprep.subr.mxu0 0.0
        %1397 = vmatpush1.xpose.msra.mxu0 0.0
        %1398 = vmatprep.mubr.f32.mxu0 0.0
        %1399 = vmatmul.mubr.f32.gmra.mrb[0].mxu0 %v1330
        %v1400 = vpop.f32.mrb[0].mxu0
        %v1401 = vadd.f32 %v848, %v1400
        %v1402 = vpop.f32.mrb[0].mxu0
        %1403 = vdwg.mxu0
        %v1404 = vsel %vm852, %v1401, -inf
        %1405 = vmax.xlane.f32.xlu0 %v1404
        %v1406 = vpop.xlane.xlu0 %1405
        %v1407 = vsub.f32 %v1401, %v1406
        %v1408 = vmul.f32 %v1407, 1.442695
        %v1409 = vpow.pop %v1408
        %v1410 = vsel %vm852, %v1409, 0.0
        %1411 = vadd.xlane.f32.xlu0 %v1410
        %v1412 = vpop.xlane.xlu0 %1411
        %v1413 = vrcp.pop %v1412
        %v1414 = vmul.f32 %v1409, %v1413
        %1415 = vrot.lane.b32.xlu0 %v821, 48
        %v1416 = vpop.permute.xlu0 %1415
        %v1419 = vsel %vm852, %v1414, 0
        %1421 = vmatprep.subr.mxu0 0.0
        %1422 = vmatpush1.msra.mxu0 %v1416
        %1423 = vmatprep.subr.mxu0 0.0
        %1424 = vmatpush1.msra.mxu0 0.0
        %1425 = vmatprep.subr.mxu0 0.0
        %1426 = vmatpush1.msra.mxu0 0.0
        %1427 = vmatprep.subr.mxu0 0.0
        %1428 = vmatpush1.msra.mxu0 0.0
        %1429 = vmatprep.subr.mxu0 0.0
        %1430 = vmatpush1.msra.mxu0 0.0
        %1431 = vmatprep.subr.mxu0 0.0
        %1432 = vmatpush1.msra.mxu0 0.0
        %1433 = vmatprep.subr.mxu0 0.0
        %1434 = vmatpush1.msra.mxu0 0.0
        %1435 = vmatprep.subr.mxu0 0.0
        %1436 = vmatpush1.msra.mxu0 0.0
        %1437 = vmatprep.subr.mxu0 0.0
        %1438 = vmatpush1.msra.mxu0 0.0
        %1439 = vmatprep.subr.mxu0 0.0
        %1440 = vmatpush1.msra.mxu0 0.0
        %1441 = vmatprep.subr.mxu0 0.0
        %1442 = vmatpush1.msra.mxu0 0.0
        %1443 = vmatprep.subr.mxu0 0.0
        %1444 = vmatpush1.msra.mxu0 0.0
        %1445 = vmatprep.subr.mxu0 0.0
        %1446 = vmatpush1.msra.mxu0 0.0
        %1447 = vmatprep.subr.mxu0 0.0
        %1448 = vmatpush1.msra.mxu0 0.0
        %1449 = vmatprep.subr.mxu0 0.0
        %1450 = vmatpush1.msra.mxu0 0.0
        %1451 = vmatprep.subr.mxu0 0.0
        %1452 = vmatpush1.msra.mxu0 0.0
        %1453 = vmatprep.subr.mxu0 0.0
        %1454 = vmatpush1.msra.mxu0 0.0
        %1455 = vmatprep.subr.mxu0 0.0
        %1456 = vmatpush1.msra.mxu0 0.0
        %1457 = vmatprep.subr.mxu0 0.0
        %1458 = vmatpush1.msra.mxu0 0.0
        %1459 = vmatprep.subr.mxu0 0.0
        %1460 = vmatpush1.msra.mxu0 0.0
        %1461 = vmatprep.subr.mxu0 0.0
        %1462 = vmatpush1.msra.mxu0 0.0
        %1463 = vmatprep.subr.mxu0 0.0
        %1464 = vmatpush1.msra.mxu0 0.0
        %1465 = vmatprep.subr.mxu0 0.0
        %1466 = vmatpush1.msra.mxu0 0.0
        %1467 = vmatprep.subr.mxu0 0.0
        %1468 = vmatpush1.msra.mxu0 0.0
        %1469 = vmatprep.subr.mxu0 0.0
        %1470 = vmatpush1.msra.mxu0 0.0
        %1471 = vmatprep.subr.mxu0 0.0
        %1472 = vmatpush1.msra.mxu0 0.0
        %1473 = vmatprep.subr.mxu0 0.0
        %1474 = vmatpush1.msra.mxu0 0.0
        %1475 = vmatprep.subr.mxu0 0.0
        %1476 = vmatpush1.msra.mxu0 0.0
        %1477 = vmatprep.subr.mxu0 0.0
        %1478 = vmatpush1.msra.mxu0 0.0
        %1479 = vmatprep.subr.mxu0 0.0
        %1480 = vmatpush1.msra.mxu0 0.0
        %1481 = vmatprep.subr.mxu0 0.0
        %1482 = vmatpush1.msra.mxu0 0.0
        %1483 = vmatprep.subr.mxu0 0.0
        %1484 = vmatpush1.msra.mxu0 0.0
        %1485 = vmatprep.mubr.f32.mxu0 0.0
        %1486 = vmatmul.mubr.f32.gmra.mrb[0].mxu0 %v1419
        %v1487 = vpop.f32.mrb[0].mxu0
        %v1488 = vadd.f32 0.0, %v1487
        %v1489 = vpop.f32.mrb[0].mxu0
        %1490 = vdwg.mxu0
        %v1492 = vsel %vm852, %v1488, 0
        %1494 = vmatprep.subr.mxu0 0.0
        %1495 = vmatpush1.msra.mxu0 %v842
        %1496 = vmatprep.subr.mxu0 0.0
        %1497 = vmatpush1.msra.mxu0 0.0
        %1498 = vmatprep.subr.mxu0 0.0
        %1499 = vmatpush1.msra.mxu0 0.0
        %1500 = vmatprep.subr.mxu0 0.0
        %1501 = vmatpush1.msra.mxu0 0.0
        %1502 = vmatprep.subr.mxu0 0.0
        %1503 = vmatpush1.msra.mxu0 0.0
        %1504 = vmatprep.subr.mxu0 0.0
        %1505 = vmatpush1.msra.mxu0 0.0
        %1506 = vmatprep.subr.mxu0 0.0
        %1507 = vmatpush1.msra.mxu0 0.0
        %1508 = vmatprep.subr.mxu0 0.0
        %1509 = vmatpush1.msra.mxu0 0.0
        %1510 = vmatprep.subr.mxu0 0.0
        %1511 = vmatpush1.msra.mxu0 0.0
        %1512 = vmatprep.subr.mxu0 0.0
        %1513 = vmatpush1.msra.mxu0 0.0
        %1514 = vmatprep.subr.mxu0 0.0
        %1515 = vmatpush1.msra.mxu0 0.0
        %1516 = vmatprep.subr.mxu0 0.0
        %1517 = vmatpush1.msra.mxu0 0.0
        %1518 = vmatprep.subr.mxu0 0.0
        %1519 = vmatpush1.msra.mxu0 0.0
        %1520 = vmatprep.subr.mxu0 0.0
        %1521 = vmatpush1.msra.mxu0 0.0
        %1522 = vmatprep.subr.mxu0 0.0
        %1523 = vmatpush1.msra.mxu0 0.0
        %1524 = vmatprep.subr.mxu0 0.0
        %1525 = vmatpush1.msra.mxu0 0.0
        %1526 = vmatprep.subr.mxu0 0.0
        %1527 = vmatpush1.msra.mxu0 0.0
        %1528 = vmatprep.subr.mxu0 0.0
        %1529 = vmatpush1.msra.mxu0 0.0
        %1530 = vmatprep.subr.mxu0 0.0
        %1531 = vmatpush1.msra.mxu0 0.0
        %1532 = vmatprep.subr.mxu0 0.0
        %1533 = vmatpush1.msra.mxu0 0.0
        %1534 = vmatprep.subr.mxu0 0.0
        %1535 = vmatpush1.msra.mxu0 0.0
        %1536 = vmatprep.subr.mxu0 0.0
        %1537 = vmatpush1.msra.mxu0 0.0
        %1538 = vmatprep.subr.mxu0 0.0
        %1539 = vmatpush1.msra.mxu0 0.0
        %1540 = vmatprep.subr.mxu0 0.0
        %1541 = vmatpush1.msra.mxu0 0.0
        %1542 = vmatprep.subr.mxu0 0.0
        %1543 = vmatpush1.msra.mxu0 0.0
        %1544 = vmatprep.subr.mxu0 0.0
        %1545 = vmatpush1.msra.mxu0 0.0
        %1546 = vmatprep.subr.mxu0 0.0
        %1547 = vmatpush1.msra.mxu0 0.0
        %1548 = vmatprep.subr.mxu0 0.0
        %1549 = vmatpush1.msra.mxu0 0.0
        %1550 = vmatprep.subr.mxu0 0.0
        %1551 = vmatpush1.msra.mxu0 0.0
        %1552 = vmatprep.subr.mxu0 0.0
        %1553 = vmatpush1.msra.mxu0 0.0
        %1554 = vmatprep.subr.mxu0 0.0
        %1555 = vmatpush1.msra.mxu0 0.0
        %1556 = vmatprep.subr.mxu0 0.0
        %1557 = vmatpush1.msra.mxu0 0.0
        %1558 = vmatprep.mubr.f32.mxu0 0.0
        %1559 = vmatmul.mubr.f32.gmra.mrb[0].mxu0 %v1492
        %v1560 = vpop.f32.mrb[0].mxu0
        %v1561 = vadd.f32 0.0, %v1560
        %v1562 = vpop.f32.mrb[0].mxu0
        %1563 = vdwg.mxu0
        %v1564 = vadd.f32 %v1323, %v1561
        %1565 = vrot.lane.b32.xlu0 %v829, 104
        %v1566 = vpop.permute.xlu0 %1565
        %1567 = vrot.lane.b32.xlu0 %v821, 72
        %v1568 = vpop.permute.xlu0 %1567
        %v1569 = vsel %vm852, %v1566, 0
        %v1571 = vsel %vm852, %v1568, 0
        %1573 = vmatprep.subr.mxu0 0.0
        %1574 = vmatpush1.xpose.msra.mxu0 %v1571
        %1575 = vmatprep.subr.mxu0 0.0
        %1576 = vmatpush1.xpose.msra.mxu0 0.0
        %1577 = vmatprep.subr.mxu0 0.0
        %1578 = vmatpush1.xpose.msra.mxu0 0.0
        %1579 = vmatprep.subr.mxu0 0.0
        %1580 = vmatpush1.xpose.msra.mxu0 0.0
        %1581 = vmatprep.subr.mxu0 0.0
        %1582 = vmatpush1.xpose.msra.mxu0 0.0
        %1583 = vmatprep.subr.mxu0 0.0
        %1584 = vmatpush1.xpose.msra.mxu0 0.0
        %1585 = vmatprep.subr.mxu0 0.0
        %1586 = vmatpush1.xpose.msra.mxu0 0.0
        %1587 = vmatprep.subr.mxu0 0.0
        %1588 = vmatpush1.xpose.msra.mxu0 0.0
        %1589 = vmatprep.subr.mxu0 0.0
        %1590 = vmatpush1.xpose.msra.mxu0 0.0
        %1591 = vmatprep.subr.mxu0 0.0
        %1592 = vmatpush1.xpose.msra.mxu0 0.0
        %1593 = vmatprep.subr.mxu0 0.0
        %1594 = vmatpush1.xpose.msra.mxu0 0.0
        %1595 = vmatprep.subr.mxu0 0.0
        %1596 = vmatpush1.xpose.msra.mxu0 0.0
        %1597 = vmatprep.subr.mxu0 0.0
        %1598 = vmatpush1.xpose.msra.mxu0 0.0
        %1599 = vmatprep.subr.mxu0 0.0
        %1600 = vmatpush1.xpose.msra.mxu0 0.0
        %1601 = vmatprep.subr.mxu0 0.0
        %1602 = vmatpush1.xpose.msra.mxu0 0.0
        %1603 = vmatprep.subr.mxu0 0.0
        %1604 = vmatpush1.xpose.msra.mxu0 0.0
        %1605 = vmatprep.subr.mxu0 0.0
        %1606 = vmatpush1.xpose.msra.mxu0 0.0
        %1607 = vmatprep.subr.mxu0 0.0
        %1608 = vmatpush1.xpose.msra.mxu0 0.0
        %1609 = vmatprep.subr.mxu0 0.0
        %1610 = vmatpush1.xpose.msra.mxu0 0.0
        %1611 = vmatprep.subr.mxu0 0.0
        %1612 = vmatpush1.xpose.msra.mxu0 0.0
        %1613 = vmatprep.subr.mxu0 0.0
        %1614 = vmatpush1.xpose.msra.mxu0 0.0
        %1615 = vmatprep.subr.mxu0 0.0
        %1616 = vmatpush1.xpose.msra.mxu0 0.0
        %1617 = vmatprep.subr.mxu0 0.0
        %1618 = vmatpush1.xpose.msra.mxu0 0.0
        %1619 = vmatprep.subr.mxu0 0.0
        %1620 = vmatpush1.xpose.msra.mxu0 0.0
        %1621 = vmatprep.subr.mxu0 0.0
        %1622 = vmatpush1.xpose.msra.mxu0 0.0
        %1623 = vmatprep.subr.mxu0 0.0
        %1624 = vmatpush1.xpose.msra.mxu0 0.0
        %1625 = vmatprep.subr.mxu0 0.0
        %1626 = vmatpush1.xpose.msra.mxu0 0.0
        %1627 = vmatprep.subr.mxu0 0.0
        %1628 = vmatpush1.xpose.msra.mxu0 0.0
        %1629 = vmatprep.subr.mxu0 0.0
        %1630 = vmatpush1.xpose.msra.mxu0 0.0
        %1631 = vmatprep.subr.mxu0 0.0
        %1632 = vmatpush1.xpose.msra.mxu0 0.0
        %1633 = vmatprep.subr.mxu0 0.0
        %1634 = vmatpush1.xpose.msra.mxu0 0.0
        %1635 = vmatprep.subr.mxu0 0.0
        %1636 = vmatpush1.xpose.msra.mxu0 0.0
        %1637 = vmatprep.mubr.f32.mxu0 0.0
        %1638 = vmatmul.mubr.f32.gmra.mrb[0].mxu0 %v1569
        %v1639 = vpop.f32.mrb[0].mxu0
        %v1640 = vadd.f32 %v848, %v1639
        %v1641 = vpop.f32.mrb[0].mxu0
        %1642 = vdwg.mxu0
        %v1643 = vsel %vm852, %v1640, -inf
        %1644 = vmax.xlane.f32.xlu0 %v1643
        %v1645 = vpop.xlane.xlu0 %1644
        %v1646 = vsub.f32 %v1640, %v1645
        %v1647 = vmul.f32 %v1646, 1.442695
        %v1648 = vpow.pop %v1647
        %v1649 = vsel %vm852, %v1648, 0.0
        %1650 = vadd.xlane.f32.xlu0 %v1649
        %v1651 = vpop.xlane.xlu0 %1650
        %v1652 = vrcp.pop %v1651
        %v1653 = vmul.f32 %v1648, %v1652
        %1654 = vrot.lane.b32.xlu0 %v821, 40
        %v1655 = vpop.permute.xlu0 %1654
        %v1658 = vsel %vm852, %v1653, 0
        %1660 = vmatprep.subr.mxu0 0.0
        %1661 = vmatpush1.msra.mxu0 %v1655
        %1662 = vmatprep.subr.mxu0 0.0
        %1663 = vmatpush1.msra.mxu0 0.0
        %1664 = vmatprep.subr.mxu0 0.0
        %1665 = vmatpush1.msra.mxu0 0.0
        %1666 = vmatprep.subr.mxu0 0.0
        %1667 = vmatpush1.msra.mxu0 0.0
        %1668 = vmatprep.subr.mxu0 0.0
        %1669 = vmatpush1.msra.mxu0 0.0
        %1670 = vmatprep.subr.mxu0 0.0
        %1671 = vmatpush1.msra.mxu0 0.0
        %1672 = vmatprep.subr.mxu0 0.0
        %1673 = vmatpush1.msra.mxu0 0.0
        %1674 = vmatprep.subr.mxu0 0.0
        %1675 = vmatpush1.msra.mxu0 0.0
        %1676 = vmatprep.subr.mxu0 0.0
        %1677 = vmatpush1.msra.mxu0 0.0
        %1678 = vmatprep.subr.mxu0 0.0
        %1679 = vmatpush1.msra.mxu0 0.0
        %1680 = vmatprep.subr.mxu0 0.0
        %1681 = vmatpush1.msra.mxu0 0.0
        %1682 = vmatprep.subr.mxu0 0.0
        %1683 = vmatpush1.msra.mxu0 0.0
        %1684 = vmatprep.subr.mxu0 0.0
        %1685 = vmatpush1.msra.mxu0 0.0
        %1686 = vmatprep.subr.mxu0 0.0
        %1687 = vmatpush1.msra.mxu0 0.0
        %1688 = vmatprep.subr.mxu0 0.0
        %1689 = vmatpush1.msra.mxu0 0.0
        %1690 = vmatprep.subr.mxu0 0.0
        %1691 = vmatpush1.msra.mxu0 0.0
        %1692 = vmatprep.subr.mxu0 0.0
        %1693 = vmatpush1.msra.mxu0 0.0
        %1694 = vmatprep.subr.mxu0 0.0
        %1695 = vmatpush1.msra.mxu0 0.0
        %1696 = vmatprep.subr.mxu0 0.0
        %1697 = vmatpush1.msra.mxu0 0.0
        %1698 = vmatprep.subr.mxu0 0.0
        %1699 = vmatpush1.msra.mxu0 0.0
        %1700 = vmatprep.subr.mxu0 0.0
        %1701 = vmatpush1.msra.mxu0 0.0
        %1702 = vmatprep.subr.mxu0 0.0
        %1703 = vmatpush1.msra.mxu0 0.0
        %1704 = vmatprep.subr.mxu0 0.0
        %1705 = vmatpush1.msra.mxu0 0.0
        %1706 = vmatprep.subr.mxu0 0.0
        %1707 = vmatpush1.msra.mxu0 0.0
        %1708 = vmatprep.subr.mxu0 0.0
        %1709 = vmatpush1.msra.mxu0 0.0
        %1710 = vmatprep.subr.mxu0 0.0
        %1711 = vmatpush1.msra.mxu0 0.0
        %1712 = vmatprep.subr.mxu0 0.0
        %1713 = vmatpush1.msra.mxu0 0.0
        %1714 = vmatprep.subr.mxu0 0.0
        %1715 = vmatpush1.msra.mxu0 0.0
        %1716 = vmatprep.subr.mxu0 0.0
        %1717 = vmatpush1.msra.mxu0 0.0
        %1718 = vmatprep.subr.mxu0 0.0
        %1719 = vmatpush1.msra.mxu0 0.0
        %1720 = vmatprep.subr.mxu0 0.0
        %1721 = vmatpush1.msra.mxu0 0.0
        %1722 = vmatprep.subr.mxu0 0.0
        %1723 = vmatpush1.msra.mxu0 0.0
        %1724 = vmatprep.mubr.f32.mxu0 0.0
        %1725 = vmatmul.mubr.f32.gmra.mrb[0].mxu0 %v1658
        %v1726 = vpop.f32.mrb[0].mxu0
        %v1727 = vadd.f32 0.0, %v1726
        %v1728 = vpop.f32.mrb[0].mxu0
        %1729 = vdwg.mxu0
        %v1731 = vsel %vm852, %v1727, 0
        %1733 = vmatprep.subr.mxu0 0.0
        %1734 = vmatpush1.msra.mxu0 %v843
        %1735 = vmatprep.subr.mxu0 0.0
        %1736 = vmatpush1.msra.mxu0 0.0
        %1737 = vmatprep.subr.mxu0 0.0
        %1738 = vmatpush1.msra.mxu0 0.0
        %1739 = vmatprep.subr.mxu0 0.0
        %1740 = vmatpush1.msra.mxu0 0.0
        %1741 = vmatprep.subr.mxu0 0.0
        %1742 = vmatpush1.msra.mxu0 0.0
        %1743 = vmatprep.subr.mxu0 0.0
        %1744 = vmatpush1.msra.mxu0 0.0
        %1745 = vmatprep.subr.mxu0 0.0
        %1746 = vmatpush1.msra.mxu0 0.0
        %1747 = vmatprep.subr.mxu0 0.0
        %1748 = vmatpush1.msra.mxu0 0.0
        %1749 = vmatprep.subr.mxu0 0.0
        %1750 = vmatpush1.msra.mxu0 0.0
        %1751 = vmatprep.subr.mxu0 0.0
        %1752 = vmatpush1.msra.mxu0 0.0
        %1753 = vmatprep.subr.mxu0 0.0
        %1754 = vmatpush1.msra.mxu0 0.0
        %1755 = vmatprep.subr.mxu0 0.0
        %1756 = vmatpush1.msra.mxu0 0.0
        %1757 = vmatprep.subr.mxu0 0.0
        %1758 = vmatpush1.msra.mxu0 0.0
        %1759 = vmatprep.subr.mxu0 0.0
        %1760 = vmatpush1.msra.mxu0 0.0
        %1761 = vmatprep.subr.mxu0 0.0
        %1762 = vmatpush1.msra.mxu0 0.0
        %1763 = vmatprep.subr.mxu0 0.0
        %1764 = vmatpush1.msra.mxu0 0.0
        %1765 = vmatprep.subr.mxu0 0.0
        %1766 = vmatpush1.msra.mxu0 0.0
        %1767 = vmatprep.subr.mxu0 0.0
        %1768 = vmatpush1.msra.mxu0 0.0
        %1769 = vmatprep.subr.mxu0 0.0
        %1770 = vmatpush1.msra.mxu0 0.0
        %1771 = vmatprep.subr.mxu0 0.0
        %1772 = vmatpush1.msra.mxu0 0.0
        %1773 = vmatprep.subr.mxu0 0.0
        %1774 = vmatpush1.msra.mxu0 0.0
        %1775 = vmatprep.subr.mxu0 0.0
        %1776 = vmatpush1.msra.mxu0 0.0
        %1777 = vmatprep.subr.mxu0 0.0
        %1778 = vmatpush1.msra.mxu0 0.0
        %1779 = vmatprep.subr.mxu0 0.0
        %1780 = vmatpush1.msra.mxu0 0.0
        %1781 = vmatprep.subr.mxu0 0.0
        %1782 = vmatpush1.msra.mxu0 0.0
        %1783 = vmatprep.subr.mxu0 0.0
        %1784 = vmatpush1.msra.mxu0 0.0
        %1785 = vmatprep.subr.mxu0 0.0
        %1786 = vmatpush1.msra.mxu0 0.0
        %1787 = vmatprep.subr.mxu0 0.0
        %1788 = vmatpush1.msra.mxu0 0.0
        %1789 = vmatprep.subr.mxu0 0.0
        %1790 = vmatpush1.msra.mxu0 0.0
        %1791 = vmatprep.subr.mxu0 0.0
        %1792 = vmatpush1.msra.mxu0 0.0
        %1793 = vmatprep.subr.mxu0 0.0
        %1794 = vmatpush1.msra.mxu0 0.0
        %1795 = vmatprep.subr.mxu0 0.0
        %1796 = vmatpush1.msra.mxu0 0.0
        %1797 = vmatprep.mubr.f32.mxu0 0.0
        %1798 = vmatmul.mubr.f32.gmra.mrb[0].mxu0 %v1731
        %v1799 = vpop.f32.mrb[0].mxu0
        %v1800 = vadd.f32 0.0, %v1799
        %v1801 = vpop.f32.mrb[0].mxu0
        %1802 = vdwg.mxu0
        %v1803 = vadd.f32 %v1564, %v1800
        %1804 = vst.msk [vmem:[#allocation2] sm:$0xff] %vm693, %v1803
        %v1805 = vlaneseq
        %v1806 = vshrl.u32 %v1805, 7
        %v1807 = vsub.s32 1, %v1806
        %v1808 = vrot.slane %v839, %v1807
        %v1809 = vadd.f32 %v836, %v1808
        %1811 = vrot.lane.b32.xlu0 %v826, 96
        %v1812 = vpop.permute.xlu0 %1811
        %v1814 = vsel %vm852, %v830, 0
        %v1816 = vsel %vm852, %v1812, 0
        %1818 = vmatprep.subr.mxu0 0.0
        %1819 = vmatpush1.xpose.msra.mxu0 %v1816
        %1820 = vmatprep.subr.mxu0 0.0
        %1821 = vmatpush1.xpose.msra.mxu0 0.0
        %1822 = vmatprep.subr.mxu0 0.0
        %1823 = vmatpush1.xpose.msra.mxu0 0.0
        %1824 = vmatprep.subr.mxu0 0.0
        %1825 = vmatpush1.xpose.msra.mxu0 0.0
        %1826 = vmatprep.subr.mxu0 0.0
        %1827 = vmatpush1.xpose.msra.mxu0 0.0
        %1828 = vmatprep.subr.mxu0 0.0
        %1829 = vmatpush1.xpose.msra.mxu0 0.0
        %1830 = vmatprep.subr.mxu0 0.0
        %1831 = vmatpush1.xpose.msra.mxu0 0.0
        %1832 = vmatprep.subr.mxu0 0.0
        %1833 = vmatpush1.xpose.msra.mxu0 0.0
        %1834 = vmatprep.subr.mxu0 0.0
        %1835 = vmatpush1.xpose.msra.mxu0 0.0
        %1836 = vmatprep.subr.mxu0 0.0
        %1837 = vmatpush1.xpose.msra.mxu0 0.0
        %1838 = vmatprep.subr.mxu0 0.0
        %1839 = vmatpush1.xpose.msra.mxu0 0.0
        %1840 = vmatprep.subr.mxu0 0.0
        %1841 = vmatpush1.xpose.msra.mxu0 0.0
        %1842 = vmatprep.subr.mxu0 0.0
        %1843 = vmatpush1.xpose.msra.mxu0 0.0
        %1844 = vmatprep.subr.mxu0 0.0
        %1845 = vmatpush1.xpose.msra.mxu0 0.0
        %1846 = vmatprep.subr.mxu0 0.0
        %1847 = vmatpush1.xpose.msra.mxu0 0.0
        %1848 = vmatprep.subr.mxu0 0.0
        %1849 = vmatpush1.xpose.msra.mxu0 0.0
        %1850 = vmatprep.subr.mxu0 0.0
        %1851 = vmatpush1.xpose.msra.mxu0 0.0
        %1852 = vmatprep.subr.mxu0 0.0
        %1853 = vmatpush1.xpose.msra.mxu0 0.0
        %1854 = vmatprep.subr.mxu0 0.0
        %1855 = vmatpush1.xpose.msra.mxu0 0.0
        %1856 = vmatprep.subr.mxu0 0.0
        %1857 = vmatpush1.xpose.msra.mxu0 0.0
        %1858 = vmatprep.subr.mxu0 0.0
        %1859 = vmatpush1.xpose.msra.mxu0 0.0
        %1860 = vmatprep.subr.mxu0 0.0
        %1861 = vmatpush1.xpose.msra.mxu0 0.0
        %1862 = vmatprep.subr.mxu0 0.0
        %1863 = vmatpush1.xpose.msra.mxu0 0.0
        %1864 = vmatprep.subr.mxu0 0.0
        %1865 = vmatpush1.xpose.msra.mxu0 0.0
        %1866 = vmatprep.subr.mxu0 0.0
        %1867 = vmatpush1.xpose.msra.mxu0 0.0
        %1868 = vmatprep.subr.mxu0 0.0
        %1869 = vmatpush1.xpose.msra.mxu0 0.0
        %1870 = vmatprep.subr.mxu0 0.0
        %1871 = vmatpush1.xpose.msra.mxu0 0.0
        %1872 = vmatprep.subr.mxu0 0.0
        %1873 = vmatpush1.xpose.msra.mxu0 0.0
        %1874 = vmatprep.subr.mxu0 0.0
        %1875 = vmatpush1.xpose.msra.mxu0 0.0
        %1876 = vmatprep.subr.mxu0 0.0
        %1877 = vmatpush1.xpose.msra.mxu0 0.0
        %1878 = vmatprep.subr.mxu0 0.0
        %1879 = vmatpush1.xpose.msra.mxu0 0.0
        %1880 = vmatprep.subr.mxu0 0.0
        %1881 = vmatpush1.xpose.msra.mxu0 0.0
        %1882 = vmatprep.mubr.f32.mxu0 0.0
        %1883 = vmatmul.mubr.f32.gmra.mrb[0].mxu0 %v1814
        %v1884 = vpop.f32.mrb[0].mxu0
        %v1885 = vadd.f32 %v1809, %v1884
        %v1886 = vpop.f32.mrb[0].mxu0
        %1887 = vdwg.mxu0
        %v1888 = vsel %vm852, %v1885, -inf
        %1889 = vmax.xlane.f32.xlu0 %v1888
        %v1890 = vpop.xlane.xlu0 %1889
        %v1891 = vsub.f32 %v1885, %v1890
        %v1892 = vmul.f32 %v1891, 1.442695
        %v1893 = vpow.pop %v1892
        %v1894 = vsel %vm852, %v1893, 0.0
        %1895 = vadd.xlane.f32.xlu0 %v1894
        %v1896 = vpop.xlane.xlu0 %1895
        %v1897 = vrcp.pop %v1896
        %v1898 = vmul.f32 %v1893, %v1897
        %1899 = vrot.lane.b32.xlu0 %v826, 64
        %v1900 = vpop.permute.xlu0 %1899
        %v1903 = vsel %vm852, %v1898, 0
        %1905 = vmatprep.subr.mxu0 0.0
        %1906 = vmatpush1.msra.mxu0 %v1900
        %1907 = vmatprep.subr.mxu0 0.0
        %1908 = vmatpush1.msra.mxu0 0.0
        %1909 = vmatprep.subr.mxu0 0.0
        %1910 = vmatpush1.msra.mxu0 0.0
        %1911 = vmatprep.subr.mxu0 0.0
        %1912 = vmatpush1.msra.mxu0 0.0
        %1913 = vmatprep.subr.mxu0 0.0
        %1914 = vmatpush1.msra.mxu0 0.0
        %1915 = vmatprep.subr.mxu0 0.0
        %1916 = vmatpush1.msra.mxu0 0.0
        %1917 = vmatprep.subr.mxu0 0.0
        %1918 = vmatpush1.msra.mxu0 0.0
        %1919 = vmatprep.subr.mxu0 0.0
        %1920 = vmatpush1.msra.mxu0 0.0
        %1921 = vmatprep.subr.mxu0 0.0
        %1922 = vmatpush1.msra.mxu0 0.0
        %1923 = vmatprep.subr.mxu0 0.0
        %1924 = vmatpush1.msra.mxu0 0.0
        %1925 = vmatprep.subr.mxu0 0.0
        %1926 = vmatpush1.msra.mxu0 0.0
        %1927 = vmatprep.subr.mxu0 0.0
        %1928 = vmatpush1.msra.mxu0 0.0
        %1929 = vmatprep.subr.mxu0 0.0
        %1930 = vmatpush1.msra.mxu0 0.0
        %1931 = vmatprep.subr.mxu0 0.0
        %1932 = vmatpush1.msra.mxu0 0.0
        %1933 = vmatprep.subr.mxu0 0.0
        %1934 = vmatpush1.msra.mxu0 0.0
        %1935 = vmatprep.subr.mxu0 0.0
        %1936 = vmatpush1.msra.mxu0 0.0
        %1937 = vmatprep.subr.mxu0 0.0
        %1938 = vmatpush1.msra.mxu0 0.0
        %1939 = vmatprep.subr.mxu0 0.0
        %1940 = vmatpush1.msra.mxu0 0.0
        %1941 = vmatprep.subr.mxu0 0.0
        %1942 = vmatpush1.msra.mxu0 0.0
        %1943 = vmatprep.subr.mxu0 0.0
        %1944 = vmatpush1.msra.mxu0 0.0
        %1945 = vmatprep.subr.mxu0 0.0
        %1946 = vmatpush1.msra.mxu0 0.0
        %1947 = vmatprep.subr.mxu0 0.0
        %1948 = vmatpush1.msra.mxu0 0.0
        %1949 = vmatprep.subr.mxu0 0.0
        %1950 = vmatpush1.msra.mxu0 0.0
        %1951 = vmatprep.subr.mxu0 0.0
        %1952 = vmatpush1.msra.mxu0 0.0
        %1953 = vmatprep.subr.mxu0 0.0
        %1954 = vmatpush1.msra.mxu0 0.0
        %1955 = vmatprep.subr.mxu0 0.0
        %1956 = vmatpush1.msra.mxu0 0.0
        %1957 = vmatprep.subr.mxu0 0.0
        %1958 = vmatpush1.msra.mxu0 0.0
        %1959 = vmatprep.subr.mxu0 0.0
        %1960 = vmatpush1.msra.mxu0 0.0
        %1961 = vmatprep.subr.mxu0 0.0
        %1962 = vmatpush1.msra.mxu0 0.0
        %1963 = vmatprep.subr.mxu0 0.0
        %1964 = vmatpush1.msra.mxu0 0.0
        %1965 = vmatprep.subr.mxu0 0.0
        %1966 = vmatpush1.msra.mxu0 0.0
        %1967 = vmatprep.subr.mxu0 0.0
        %1968 = vmatpush1.msra.mxu0 0.0
        %1969 = vmatprep.mubr.f32.mxu0 0.0
        %1970 = vmatmul.mubr.f32.gmra.mrb[0].mxu0 %v1903
        %v1971 = vpop.f32.mrb[0].mxu0
        %v1972 = vadd.f32 0.0, %v1971
        %v1973 = vpop.f32.mrb[0].mxu0
        %1974 = vdwg.mxu0
        %1975 = vrot.lane.b32.xlu0 %v830, 120
        %v1976 = vpop.permute.xlu0 %1975
        %1977 = vrot.lane.b32.xlu0 %v826, 88
        %v1978 = vpop.permute.xlu0 %1977
        %v1979 = vsel %vm852, %v1976, 0
        %v1981 = vsel %vm852, %v1978, 0
        %1983 = vmatprep.subr.mxu0 0.0
        %1984 = vmatpush1.xpose.msra.mxu0 %v1981
        %1985 = vmatprep.subr.mxu0 0.0
        %1986 = vmatpush1.xpose.msra.mxu0 0.0
        %1987 = vmatprep.subr.mxu0 0.0
        %1988 = vmatpush1.xpose.msra.mxu0 0.0
        %1989 = vmatprep.subr.mxu0 0.0
        %1990 = vmatpush1.xpose.msra.mxu0 0.0
        %1991 = vmatprep.subr.mxu0 0.0
        %1992 = vmatpush1.xpose.msra.mxu0 0.0
        %1993 = vmatprep.subr.mxu0 0.0
        %1994 = vmatpush1.xpose.msra.mxu0 0.0
        %1995 = vmatprep.subr.mxu0 0.0
        %1996 = vmatpush1.xpose.msra.mxu0 0.0
        %1997 = vmatprep.subr.mxu0 0.0
        %1998 = vmatpush1.xpose.msra.mxu0 0.0
        %1999 = vmatprep.subr.mxu0 0.0
        %2000 = vmatpush1.xpose.msra.mxu0 0.0
        %2001 = vmatprep.subr.mxu0 0.0
        %2002 = vmatpush1.xpose.msra.mxu0 0.0
        %2003 = vmatprep.subr.mxu0 0.0
        %2004 = vmatpush1.xpose.msra.mxu0 0.0
        %2005 = vmatprep.subr.mxu0 0.0
        %2006 = vmatpush1.xpose.msra.mxu0 0.0
        %2007 = vmatprep.subr.mxu0 0.0
        %2008 = vmatpush1.xpose.msra.mxu0 0.0
        %2009 = vmatprep.subr.mxu0 0.0
        %2010 = vmatpush1.xpose.msra.mxu0 0.0
        %2011 = vmatprep.subr.mxu0 0.0
        %2012 = vmatpush1.xpose.msra.mxu0 0.0
        %2013 = vmatprep.subr.mxu0 0.0
        %2014 = vmatpush1.xpose.msra.mxu0 0.0
        %2015 = vmatprep.subr.mxu0 0.0
        %2016 = vmatpush1.xpose.msra.mxu0 0.0
        %2017 = vmatprep.subr.mxu0 0.0
        %2018 = vmatpush1.xpose.msra.mxu0 0.0
        %2019 = vmatprep.subr.mxu0 0.0
        %2020 = vmatpush1.xpose.msra.mxu0 0.0
        %2021 = vmatprep.subr.mxu0 0.0
        %2022 = vmatpush1.xpose.msra.mxu0 0.0
        %2023 = vmatprep.subr.mxu0 0.0
        %2024 = vmatpush1.xpose.msra.mxu0 0.0
        %2025 = vmatprep.subr.mxu0 0.0
        %2026 = vmatpush1.xpose.msra.mxu0 0.0
        %2027 = vmatprep.subr.mxu0 0.0
        %2028 = vmatpush1.xpose.msra.mxu0 0.0
        %2029 = vmatprep.subr.mxu0 0.0
        %2030 = vmatpush1.xpose.msra.mxu0 0.0
        %2031 = vmatprep.subr.mxu0 0.0
        %2032 = vmatpush1.xpose.msra.mxu0 0.0
        %2033 = vmatprep.subr.mxu0 0.0
        %2034 = vmatpush1.xpose.msra.mxu0 0.0
        %2035 = vmatprep.subr.mxu0 0.0
        %2036 = vmatpush1.xpose.msra.mxu0 0.0
        %2037 = vmatprep.subr.mxu0 0.0
        %2038 = vmatpush1.xpose.msra.mxu0 0.0
        %2039 = vmatprep.subr.mxu0 0.0
        %2040 = vmatpush1.xpose.msra.mxu0 0.0
        %2041 = vmatprep.subr.mxu0 0.0
        %2042 = vmatpush1.xpose.msra.mxu0 0.0
        %2043 = vmatprep.subr.mxu0 0.0
        %2044 = vmatpush1.xpose.msra.mxu0 0.0
        %2045 = vmatprep.subr.mxu0 0.0
        %2046 = vmatpush1.xpose.msra.mxu0 0.0
        %2047 = vmatprep.mubr.f32.mxu0 0.0
        %2048 = vmatmul.mubr.f32.gmra.mrb[0].mxu0 %v1979
        %v2049 = vpop.f32.mrb[0].mxu0
        %v2050 = vadd.f32 %v1809, %v2049
        %v2051 = vpop.f32.mrb[0].mxu0
        %2052 = vdwg.mxu0
        %v2053 = vsel %vm852, %v2050, -inf
        %2054 = vmax.xlane.f32.xlu0 %v2053
        %v2055 = vpop.xlane.xlu0 %2054
        %v2056 = vsub.f32 %v2050, %v2055
        %v2057 = vmul.f32 %v2056, 1.442695
        %v2058 = vpow.pop %v2057
        %v2059 = vsel %vm852, %v2058, 0.0
        %2060 = vadd.xlane.f32.xlu0 %v2059
        %v2061 = vpop.xlane.xlu0 %2060
        %v2062 = vrcp.pop %v2061
        %v2063 = vmul.f32 %v2058, %v2062
        %2064 = vrot.lane.b32.xlu0 %v826, 56
        %v2065 = vpop.permute.xlu0 %2064
        %v2068 = vsel %vm852, %v2063, 0
        %2070 = vmatprep.subr.mxu0 0.0
        %2071 = vmatpush1.msra.mxu0 %v2065
        %2072 = vmatprep.subr.mxu0 0.0
        %2073 = vmatpush1.msra.mxu0 0.0
        %2074 = vmatprep.subr.mxu0 0.0
        %2075 = vmatpush1.msra.mxu0 0.0
        %2076 = vmatprep.subr.mxu0 0.0
        %2077 = vmatpush1.msra.mxu0 0.0
        %2078 = vmatprep.subr.mxu0 0.0
        %2079 = vmatpush1.msra.mxu0 0.0
        %2080 = vmatprep.subr.mxu0 0.0
        %2081 = vmatpush1.msra.mxu0 0.0
        %2082 = vmatprep.subr.mxu0 0.0
        %2083 = vmatpush1.msra.mxu0 0.0
        %2084 = vmatprep.subr.mxu0 0.0
        %2085 = vmatpush1.msra.mxu0 0.0
        %2086 = vmatprep.subr.mxu0 0.0
        %2087 = vmatpush1.msra.mxu0 0.0
        %2088 = vmatprep.subr.mxu0 0.0
        %2089 = vmatpush1.msra.mxu0 0.0
        %2090 = vmatprep.subr.mxu0 0.0
        %2091 = vmatpush1.msra.mxu0 0.0
        %2092 = vmatprep.subr.mxu0 0.0
        %2093 = vmatpush1.msra.mxu0 0.0
        %2094 = vmatprep.subr.mxu0 0.0
        %2095 = vmatpush1.msra.mxu0 0.0
        %2096 = vmatprep.subr.mxu0 0.0
        %2097 = vmatpush1.msra.mxu0 0.0
        %2098 = vmatprep.subr.mxu0 0.0
        %2099 = vmatpush1.msra.mxu0 0.0
        %2100 = vmatprep.subr.mxu0 0.0
        %2101 = vmatpush1.msra.mxu0 0.0
        %2102 = vmatprep.subr.mxu0 0.0
        %2103 = vmatpush1.msra.mxu0 0.0
        %2104 = vmatprep.subr.mxu0 0.0
        %2105 = vmatpush1.msra.mxu0 0.0
        %2106 = vmatprep.subr.mxu0 0.0
        %2107 = vmatpush1.msra.mxu0 0.0
        %2108 = vmatprep.subr.mxu0 0.0
        %2109 = vmatpush1.msra.mxu0 0.0
        %2110 = vmatprep.subr.mxu0 0.0
        %2111 = vmatpush1.msra.mxu0 0.0
        %2112 = vmatprep.subr.mxu0 0.0
        %2113 = vmatpush1.msra.mxu0 0.0
        %2114 = vmatprep.subr.mxu0 0.0
        %2115 = vmatpush1.msra.mxu0 0.0
        %2116 = vmatprep.subr.mxu0 0.0
        %2117 = vmatpush1.msra.mxu0 0.0
        %2118 = vmatprep.subr.mxu0 0.0
        %2119 = vmatpush1.msra.mxu0 0.0
        %2120 = vmatprep.subr.mxu0 0.0
        %2121 = vmatpush1.msra.mxu0 0.0
        %2122 = vmatprep.subr.mxu0 0.0
        %2123 = vmatpush1.msra.mxu0 0.0
        %2124 = vmatprep.subr.mxu0 0.0
        %2125 = vmatpush1.msra.mxu0 0.0
        %2126 = vmatprep.subr.mxu0 0.0
        %2127 = vmatpush1.msra.mxu0 0.0
        %2128 = vmatprep.subr.mxu0 0.0
        %2129 = vmatpush1.msra.mxu0 0.0
        %2130 = vmatprep.subr.mxu0 0.0
        %2131 = vmatpush1.msra.mxu0 0.0
        %2132 = vmatprep.subr.mxu0 0.0
        %2133 = vmatpush1.msra.mxu0 0.0
        %2134 = vmatprep.mubr.f32.mxu0 0.0
        %2135 = vmatmul.mubr.f32.gmra.mrb[0].mxu0 %v2068
        %v2136 = vpop.f32.mrb[0].mxu0
        %v2137 = vadd.f32 0.0, %v2136
        %v2138 = vpop.f32.mrb[0].mxu0
        %2139 = vdwg.mxu0
        %v2141 = vsel %vm852, %v2137, 0
        %2143 = vmatprep.subr.mxu0 0.0
        %2144 = vmatpush1.msra.mxu0 %v841
        %2145 = vmatprep.subr.mxu0 0.0
        %2146 = vmatpush1.msra.mxu0 0.0
        %2147 = vmatprep.subr.mxu0 0.0
        %2148 = vmatpush1.msra.mxu0 0.0
        %2149 = vmatprep.subr.mxu0 0.0
        %2150 = vmatpush1.msra.mxu0 0.0
        %2151 = vmatprep.subr.mxu0 0.0
        %2152 = vmatpush1.msra.mxu0 0.0
        %2153 = vmatprep.subr.mxu0 0.0
        %2154 = vmatpush1.msra.mxu0 0.0
        %2155 = vmatprep.subr.mxu0 0.0
        %2156 = vmatpush1.msra.mxu0 0.0
        %2157 = vmatprep.subr.mxu0 0.0
        %2158 = vmatpush1.msra.mxu0 0.0
        %2159 = vmatprep.subr.mxu0 0.0
        %2160 = vmatpush1.msra.mxu0 0.0
        %2161 = vmatprep.subr.mxu0 0.0
        %2162 = vmatpush1.msra.mxu0 0.0
        %2163 = vmatprep.subr.mxu0 0.0
        %2164 = vmatpush1.msra.mxu0 0.0
        %2165 = vmatprep.subr.mxu0 0.0
        %2166 = vmatpush1.msra.mxu0 0.0
        %2167 = vmatprep.subr.mxu0 0.0
        %2168 = vmatpush1.msra.mxu0 0.0
        %2169 = vmatprep.subr.mxu0 0.0
        %2170 = vmatpush1.msra.mxu0 0.0
        %2171 = vmatprep.subr.mxu0 0.0
        %2172 = vmatpush1.msra.mxu0 0.0
        %2173 = vmatprep.subr.mxu0 0.0
        %2174 = vmatpush1.msra.mxu0 0.0
        %2175 = vmatprep.subr.mxu0 0.0
        %2176 = vmatpush1.msra.mxu0 0.0
        %2177 = vmatprep.subr.mxu0 0.0
        %2178 = vmatpush1.msra.mxu0 0.0
        %2179 = vmatprep.subr.mxu0 0.0
        %2180 = vmatpush1.msra.mxu0 0.0
        %2181 = vmatprep.subr.mxu0 0.0
        %2182 = vmatpush1.msra.mxu0 0.0
        %2183 = vmatprep.subr.mxu0 0.0
        %2184 = vmatpush1.msra.mxu0 0.0
        %2185 = vmatprep.subr.mxu0 0.0
        %2186 = vmatpush1.msra.mxu0 0.0
        %2187 = vmatprep.subr.mxu0 0.0
        %2188 = vmatpush1.msra.mxu0 0.0
        %2189 = vmatprep.subr.mxu0 0.0
        %2190 = vmatpush1.msra.mxu0 0.0
        %2191 = vmatprep.subr.mxu0 0.0
        %2192 = vmatpush1.msra.mxu0 0.0
        %2193 = vmatprep.subr.mxu0 0.0
        %2194 = vmatpush1.msra.mxu0 0.0
        %2195 = vmatprep.subr.mxu0 0.0
        %2196 = vmatpush1.msra.mxu0 0.0
        %2197 = vmatprep.subr.mxu0 0.0
        %2198 = vmatpush1.msra.mxu0 0.0
        %2199 = vmatprep.subr.mxu0 0.0
        %2200 = vmatpush1.msra.mxu0 0.0
        %2201 = vmatprep.subr.mxu0 0.0
        %2202 = vmatpush1.msra.mxu0 0.0
        %2203 = vmatprep.subr.mxu0 0.0
        %2204 = vmatpush1.msra.mxu0 0.0
        %2205 = vmatprep.subr.mxu0 0.0
        %2206 = vmatpush1.msra.mxu0 0.0
        %2207 = vmatprep.mubr.f32.mxu0 0.0
        %2208 = vmatmul.mubr.f32.gmra.mrb[0].mxu0 %v2141
        %v2209 = vpop.f32.mrb[0].mxu0
        %v2210 = vadd.f32 0.0, %v2209
        %v2211 = vpop.f32.mrb[0].mxu0
        %2212 = vdwg.mxu0
        %v2214 = vsel %vm852, %v1972, 0
        %2216 = vmatprep.subr.mxu0 0.0
        %2217 = vmatpush1.msra.mxu0 %v840
        %2218 = vmatprep.subr.mxu0 0.0
        %2219 = vmatpush1.msra.mxu0 0.0
        %2220 = vmatprep.subr.mxu0 0.0
        %2221 = vmatpush1.msra.mxu0 0.0
        %2222 = vmatprep.subr.mxu0 0.0
        %2223 = vmatpush1.msra.mxu0 0.0
        %2224 = vmatprep.subr.mxu0 0.0
        %2225 = vmatpush1.msra.mxu0 0.0
        %2226 = vmatprep.subr.mxu0 0.0
        %2227 = vmatpush1.msra.mxu0 0.0
        %2228 = vmatprep.subr.mxu0 0.0
        %2229 = vmatpush1.msra.mxu0 0.0
        %2230 = vmatprep.subr.mxu0 0.0
        %2231 = vmatpush1.msra.mxu0 0.0
        %2232 = vmatprep.subr.mxu0 0.0
        %2233 = vmatpush1.msra.mxu0 0.0
        %2234 = vmatprep.subr.mxu0 0.0
        %2235 = vmatpush1.msra.mxu0 0.0
        %2236 = vmatprep.subr.mxu0 0.0
        %2237 = vmatpush1.msra.mxu0 0.0
        %2238 = vmatprep.subr.mxu0 0.0
        %2239 = vmatpush1.msra.mxu0 0.0
        %2240 = vmatprep.subr.mxu0 0.0
        %2241 = vmatpush1.msra.mxu0 0.0
        %2242 = vmatprep.subr.mxu0 0.0
        %2243 = vmatpush1.msra.mxu0 0.0
        %2244 = vmatprep.subr.mxu0 0.0
        %2245 = vmatpush1.msra.mxu0 0.0
        %2246 = vmatprep.subr.mxu0 0.0
        %2247 = vmatpush1.msra.mxu0 0.0
        %2248 = vmatprep.subr.mxu0 0.0
        %2249 = vmatpush1.msra.mxu0 0.0
        %2250 = vmatprep.subr.mxu0 0.0
        %2251 = vmatpush1.msra.mxu0 0.0
        %2252 = vmatprep.subr.mxu0 0.0
        %2253 = vmatpush1.msra.mxu0 0.0
        %2254 = vmatprep.subr.mxu0 0.0
        %2255 = vmatpush1.msra.mxu0 0.0
        %2256 = vmatprep.subr.mxu0 0.0
        %2257 = vmatpush1.msra.mxu0 0.0
        %2258 = vmatprep.subr.mxu0 0.0
        %2259 = vmatpush1.msra.mxu0 0.0
        %2260 = vmatprep.subr.mxu0 0.0
        %2261 = vmatpush1.msra.mxu0 0.0
        %2262 = vmatprep.subr.mxu0 0.0
        %2263 = vmatpush1.msra.mxu0 0.0
        %2264 = vmatprep.subr.mxu0 0.0
        %2265 = vmatpush1.msra.mxu0 0.0
        %2266 = vmatprep.subr.mxu0 0.0
        %2267 = vmatpush1.msra.mxu0 0.0
        %2268 = vmatprep.subr.mxu0 0.0
        %2269 = vmatpush1.msra.mxu0 0.0
        %2270 = vmatprep.subr.mxu0 0.0
        %2271 = vmatpush1.msra.mxu0 0.0
        %2272 = vmatprep.subr.mxu0 0.0
        %2273 = vmatpush1.msra.mxu0 0.0
        %2274 = vmatprep.subr.mxu0 0.0
        %2275 = vmatpush1.msra.mxu0 0.0
        %2276 = vmatprep.subr.mxu0 0.0
        %2277 = vmatpush1.msra.mxu0 0.0
        %2278 = vmatprep.subr.mxu0 0.0
        %2279 = vmatpush1.msra.mxu0 0.0
        %2280 = vmatprep.mubr.f32.mxu0 0.0
        %2281 = vmatmul.mubr.f32.gmra.mrb[0].mxu0 %v2214
        %v2282 = vpop.f32.mrb[0].mxu0
        %v2283 = vadd.f32 %v2210, %v2282
        %v2284 = vpop.f32.mrb[0].mxu0
        %2285 = vdwg.mxu0
        %2286 = vrot.lane.b32.xlu0 %v830, 112
        %v2287 = vpop.permute.xlu0 %2286
        %2288 = vrot.lane.b32.xlu0 %v826, 80
        %v2289 = vpop.permute.xlu0 %2288
        %v2290 = vsel %vm852, %v2287, 0
        %v2292 = vsel %vm852, %v2289, 0
        %2294 = vmatprep.subr.mxu0 0.0
        %2295 = vmatpush1.xpose.msra.mxu0 %v2292
        %2296 = vmatprep.subr.mxu0 0.0
        %2297 = vmatpush1.xpose.msra.mxu0 0.0
        %2298 = vmatprep.subr.mxu0 0.0
        %2299 = vmatpush1.xpose.msra.mxu0 0.0
        %2300 = vmatprep.subr.mxu0 0.0
        %2301 = vmatpush1.xpose.msra.mxu0 0.0
        %2302 = vmatprep.subr.mxu0 0.0
        %2303 = vmatpush1.xpose.msra.mxu0 0.0
        %2304 = vmatprep.subr.mxu0 0.0
        %2305 = vmatpush1.xpose.msra.mxu0 0.0
        %2306 = vmatprep.subr.mxu0 0.0
        %2307 = vmatpush1.xpose.msra.mxu0 0.0
        %2308 = vmatprep.subr.mxu0 0.0
        %2309 = vmatpush1.xpose.msra.mxu0 0.0
        %2310 = vmatprep.subr.mxu0 0.0
        %2311 = vmatpush1.xpose.msra.mxu0 0.0
        %2312 = vmatprep.subr.mxu0 0.0
        %2313 = vmatpush1.xpose.msra.mxu0 0.0
        %2314 = vmatprep.subr.mxu0 0.0
        %2315 = vmatpush1.xpose.msra.mxu0 0.0
        %2316 = vmatprep.subr.mxu0 0.0
        %2317 = vmatpush1.xpose.msra.mxu0 0.0
        %2318 = vmatprep.subr.mxu0 0.0
        %2319 = vmatpush1.xpose.msra.mxu0 0.0
        %2320 = vmatprep.subr.mxu0 0.0
        %2321 = vmatpush1.xpose.msra.mxu0 0.0
        %2322 = vmatprep.subr.mxu0 0.0
        %2323 = vmatpush1.xpose.msra.mxu0 0.0
        %2324 = vmatprep.subr.mxu0 0.0
        %2325 = vmatpush1.xpose.msra.mxu0 0.0
        %2326 = vmatprep.subr.mxu0 0.0
        %2327 = vmatpush1.xpose.msra.mxu0 0.0
        %2328 = vmatprep.subr.mxu0 0.0
        %2329 = vmatpush1.xpose.msra.mxu0 0.0
        %2330 = vmatprep.subr.mxu0 0.0
        %2331 = vmatpush1.xpose.msra.mxu0 0.0
        %2332 = vmatprep.subr.mxu0 0.0
        %2333 = vmatpush1.xpose.msra.mxu0 0.0
        %2334 = vmatprep.subr.mxu0 0.0
        %2335 = vmatpush1.xpose.msra.mxu0 0.0
        %2336 = vmatprep.subr.mxu0 0.0
        %2337 = vmatpush1.xpose.msra.mxu0 0.0
        %2338 = vmatprep.subr.mxu0 0.0
        %2339 = vmatpush1.xpose.msra.mxu0 0.0
        %2340 = vmatprep.subr.mxu0 0.0
        %2341 = vmatpush1.xpose.msra.mxu0 0.0
        %2342 = vmatprep.subr.mxu0 0.0
        %2343 = vmatpush1.xpose.msra.mxu0 0.0
        %2344 = vmatprep.subr.mxu0 0.0
        %2345 = vmatpush1.xpose.msra.mxu0 0.0
        %2346 = vmatprep.subr.mxu0 0.0
        %2347 = vmatpush1.xpose.msra.mxu0 0.0
        %2348 = vmatprep.subr.mxu0 0.0
        %2349 = vmatpush1.xpose.msra.mxu0 0.0
        %2350 = vmatprep.subr.mxu0 0.0
        %2351 = vmatpush1.xpose.msra.mxu0 0.0
        %2352 = vmatprep.subr.mxu0 0.0
        %2353 = vmatpush1.xpose.msra.mxu0 0.0
        %2354 = vmatprep.subr.mxu0 0.0
        %2355 = vmatpush1.xpose.msra.mxu0 0.0
        %2356 = vmatprep.subr.mxu0 0.0
        %2357 = vmatpush1.xpose.msra.mxu0 0.0
        %2358 = vmatprep.mubr.f32.mxu0 0.0
        %2359 = vmatmul.mubr.f32.gmra.mrb[0].mxu0 %v2290
        %v2360 = vpop.f32.mrb[0].mxu0
        %v2361 = vadd.f32 %v1809, %v2360
        %v2362 = vpop.f32.mrb[0].mxu0
        %2363 = vdwg.mxu0
        %v2364 = vsel %vm852, %v2361, -inf
        %2365 = vmax.xlane.f32.xlu0 %v2364
        %v2366 = vpop.xlane.xlu0 %2365
        %v2367 = vsub.f32 %v2361, %v2366
        %v2368 = vmul.f32 %v2367, 1.442695
        %v2369 = vpow.pop %v2368
        %v2370 = vsel %vm852, %v2369, 0.0
        %2371 = vadd.xlane.f32.xlu0 %v2370
        %v2372 = vpop.xlane.xlu0 %2371
        %v2373 = vrcp.pop %v2372
        %v2374 = vmul.f32 %v2369, %v2373
        %2375 = vrot.lane.b32.xlu0 %v826, 48
        %v2376 = vpop.permute.xlu0 %2375
        %v2379 = vsel %vm852, %v2374, 0
        %2381 = vmatprep.subr.mxu0 0.0
        %2382 = vmatpush1.msra.mxu0 %v2376
        %2383 = vmatprep.subr.mxu0 0.0
        %2384 = vmatpush1.msra.mxu0 0.0
        %2385 = vmatprep.subr.mxu0 0.0
        %2386 = vmatpush1.msra.mxu0 0.0
        %2387 = vmatprep.subr.mxu0 0.0
        %2388 = vmatpush1.msra.mxu0 0.0
        %2389 = vmatprep.subr.mxu0 0.0
        %2390 = vmatpush1.msra.mxu0 0.0
        %2391 = vmatprep.subr.mxu0 0.0
        %2392 = vmatpush1.msra.mxu0 0.0
        %2393 = vmatprep.subr.mxu0 0.0
        %2394 = vmatpush1.msra.mxu0 0.0
        %2395 = vmatprep.subr.mxu0 0.0
        %2396 = vmatpush1.msra.mxu0 0.0
        %2397 = vmatprep.subr.mxu0 0.0
        %2398 = vmatpush1.msra.mxu0 0.0
        %2399 = vmatprep.subr.mxu0 0.0
        %2400 = vmatpush1.msra.mxu0 0.0
        %2401 = vmatprep.subr.mxu0 0.0
        %2402 = vmatpush1.msra.mxu0 0.0
        %2403 = vmatprep.subr.mxu0 0.0
        %2404 = vmatpush1.msra.mxu0 0.0
        %2405 = vmatprep.subr.mxu0 0.0
        %2406 = vmatpush1.msra.mxu0 0.0
        %2407 = vmatprep.subr.mxu0 0.0
        %2408 = vmatpush1.msra.mxu0 0.0
        %2409 = vmatprep.subr.mxu0 0.0
        %2410 = vmatpush1.msra.mxu0 0.0
        %2411 = vmatprep.subr.mxu0 0.0
        %2412 = vmatpush1.msra.mxu0 0.0
        %2413 = vmatprep.subr.mxu0 0.0
        %2414 = vmatpush1.msra.mxu0 0.0
        %2415 = vmatprep.subr.mxu0 0.0
        %2416 = vmatpush1.msra.mxu0 0.0
        %2417 = vmatprep.subr.mxu0 0.0
        %2418 = vmatpush1.msra.mxu0 0.0
        %2419 = vmatprep.subr.mxu0 0.0
        %2420 = vmatpush1.msra.mxu0 0.0
        %2421 = vmatprep.subr.mxu0 0.0
        %2422 = vmatpush1.msra.mxu0 0.0
        %2423 = vmatprep.subr.mxu0 0.0
        %2424 = vmatpush1.msra.mxu0 0.0
        %2425 = vmatprep.subr.mxu0 0.0
        %2426 = vmatpush1.msra.mxu0 0.0
        %2427 = vmatprep.subr.mxu0 0.0
        %2428 = vmatpush1.msra.mxu0 0.0
        %2429 = vmatprep.subr.mxu0 0.0
        %2430 = vmatpush1.msra.mxu0 0.0
        %2431 = vmatprep.subr.mxu0 0.0
        %2432 = vmatpush1.msra.mxu0 0.0
        %2433 = vmatprep.subr.mxu0 0.0
        %2434 = vmatpush1.msra.mxu0 0.0
        %2435 = vmatprep.subr.mxu0 0.0
        %2436 = vmatpush1.msra.mxu0 0.0
        %2437 = vmatprep.subr.mxu0 0.0
        %2438 = vmatpush1.msra.mxu0 0.0
        %2439 = vmatprep.subr.mxu0 0.0
        %2440 = vmatpush1.msra.mxu0 0.0
        %2441 = vmatprep.subr.mxu0 0.0
        %2442 = vmatpush1.msra.mxu0 0.0
        %2443 = vmatprep.subr.mxu0 0.0
        %2444 = vmatpush1.msra.mxu0 0.0
        %2445 = vmatprep.mubr.f32.mxu0 0.0
        %2446 = vmatmul.mubr.f32.gmra.mrb[0].mxu0 %v2379
        %v2447 = vpop.f32.mrb[0].mxu0
        %v2448 = vadd.f32 0.0, %v2447
        %v2449 = vpop.f32.mrb[0].mxu0
        %2450 = vdwg.mxu0
        %v2452 = vsel %vm852, %v2448, 0
        %2454 = vmatprep.subr.mxu0 0.0
        %2455 = vmatpush1.msra.mxu0 %v842
        %2456 = vmatprep.subr.mxu0 0.0
        %2457 = vmatpush1.msra.mxu0 0.0
        %2458 = vmatprep.subr.mxu0 0.0
        %2459 = vmatpush1.msra.mxu0 0.0
        %2460 = vmatprep.subr.mxu0 0.0
        %2461 = vmatpush1.msra.mxu0 0.0
        %2462 = vmatprep.subr.mxu0 0.0
        %2463 = vmatpush1.msra.mxu0 0.0
        %2464 = vmatprep.subr.mxu0 0.0
        %2465 = vmatpush1.msra.mxu0 0.0
        %2466 = vmatprep.subr.mxu0 0.0
        %2467 = vmatpush1.msra.mxu0 0.0
        %2468 = vmatprep.subr.mxu0 0.0
        %2469 = vmatpush1.msra.mxu0 0.0
        %2470 = vmatprep.subr.mxu0 0.0
        %2471 = vmatpush1.msra.mxu0 0.0
        %2472 = vmatprep.subr.mxu0 0.0
        %2473 = vmatpush1.msra.mxu0 0.0
        %2474 = vmatprep.subr.mxu0 0.0
        %2475 = vmatpush1.msra.mxu0 0.0
        %2476 = vmatprep.subr.mxu0 0.0
        %2477 = vmatpush1.msra.mxu0 0.0
        %2478 = vmatprep.subr.mxu0 0.0
        %2479 = vmatpush1.msra.mxu0 0.0
        %2480 = vmatprep.subr.mxu0 0.0
        %2481 = vmatpush1.msra.mxu0 0.0
        %2482 = vmatprep.subr.mxu0 0.0
        %2483 = vmatpush1.msra.mxu0 0.0
        %2484 = vmatprep.subr.mxu0 0.0
        %2485 = vmatpush1.msra.mxu0 0.0
        %2486 = vmatprep.subr.mxu0 0.0
        %2487 = vmatpush1.msra.mxu0 0.0
        %2488 = vmatprep.subr.mxu0 0.0
        %2489 = vmatpush1.msra.mxu0 0.0
        %2490 = vmatprep.subr.mxu0 0.0
        %2491 = vmatpush1.msra.mxu0 0.0
        %2492 = vmatprep.subr.mxu0 0.0
        %2493 = vmatpush1.msra.mxu0 0.0
        %2494 = vmatprep.subr.mxu0 0.0
        %2495 = vmatpush1.msra.mxu0 0.0
        %2496 = vmatprep.subr.mxu0 0.0
        %2497 = vmatpush1.msra.mxu0 0.0
        %2498 = vmatprep.subr.mxu0 0.0
        %2499 = vmatpush1.msra.mxu0 0.0
        %2500 = vmatprep.subr.mxu0 0.0
        %2501 = vmatpush1.msra.mxu0 0.0
        %2502 = vmatprep.subr.mxu0 0.0
        %2503 = vmatpush1.msra.mxu0 0.0
        %2504 = vmatprep.subr.mxu0 0.0
        %2505 = vmatpush1.msra.mxu0 0.0
        %2506 = vmatprep.subr.mxu0 0.0
        %2507 = vmatpush1.msra.mxu0 0.0
        %2508 = vmatprep.subr.mxu0 0.0
        %2509 = vmatpush1.msra.mxu0 0.0
        %2510 = vmatprep.subr.mxu0 0.0
        %2511 = vmatpush1.msra.mxu0 0.0
        %2512 = vmatprep.subr.mxu0 0.0
        %2513 = vmatpush1.msra.mxu0 0.0
        %2514 = vmatprep.subr.mxu0 0.0
        %2515 = vmatpush1.msra.mxu0 0.0
        %2516 = vmatprep.subr.mxu0 0.0
        %2517 = vmatpush1.msra.mxu0 0.0
        %2518 = vmatprep.mubr.f32.mxu0 0.0
        %2519 = vmatmul.mubr.f32.gmra.mrb[0].mxu0 %v2452
        %v2520 = vpop.f32.mrb[0].mxu0
        %v2521 = vadd.f32 0.0, %v2520
        %v2522 = vpop.f32.mrb[0].mxu0
        %2523 = vdwg.mxu0
        %v2524 = vadd.f32 %v2283, %v2521
        %2525 = vrot.lane.b32.xlu0 %v830, 104
        %v2526 = vpop.permute.xlu0 %2525
        %2527 = vrot.lane.b32.xlu0 %v826, 72
        %v2528 = vpop.permute.xlu0 %2527
        %v2529 = vsel %vm852, %v2526, 0
        %v2531 = vsel %vm852, %v2528, 0
        %2533 = vmatprep.subr.mxu0 0.0
        %2534 = vmatpush1.xpose.msra.mxu0 %v2531
        %2535 = vmatprep.subr.mxu0 0.0
        %2536 = vmatpush1.xpose.msra.mxu0 0.0
        %2537 = vmatprep.subr.mxu0 0.0
        %2538 = vmatpush1.xpose.msra.mxu0 0.0
        %2539 = vmatprep.subr.mxu0 0.0
        %2540 = vmatpush1.xpose.msra.mxu0 0.0
        %2541 = vmatprep.subr.mxu0 0.0
        %2542 = vmatpush1.xpose.msra.mxu0 0.0
        %2543 = vmatprep.subr.mxu0 0.0
        %2544 = vmatpush1.xpose.msra.mxu0 0.0
        %2545 = vmatprep.subr.mxu0 0.0
        %2546 = vmatpush1.xpose.msra.mxu0 0.0
        %2547 = vmatprep.subr.mxu0 0.0
        %2548 = vmatpush1.xpose.msra.mxu0 0.0
        %2549 = vmatprep.subr.mxu0 0.0
        %2550 = vmatpush1.xpose.msra.mxu0 0.0
        %2551 = vmatprep.subr.mxu0 0.0
        %2552 = vmatpush1.xpose.msra.mxu0 0.0
        %2553 = vmatprep.subr.mxu0 0.0
        %2554 = vmatpush1.xpose.msra.mxu0 0.0
        %2555 = vmatprep.subr.mxu0 0.0
        %2556 = vmatpush1.xpose.msra.mxu0 0.0
        %2557 = vmatprep.subr.mxu0 0.0
        %2558 = vmatpush1.xpose.msra.mxu0 0.0
        %2559 = vmatprep.subr.mxu0 0.0
        %2560 = vmatpush1.xpose.msra.mxu0 0.0
        %2561 = vmatprep.subr.mxu0 0.0
        %2562 = vmatpush1.xpose.msra.mxu0 0.0
        %2563 = vmatprep.subr.mxu0 0.0
        %2564 = vmatpush1.xpose.msra.mxu0 0.0
        %2565 = vmatprep.subr.mxu0 0.0
        %2566 = vmatpush1.xpose.msra.mxu0 0.0
        %2567 = vmatprep.subr.mxu0 0.0
        %2568 = vmatpush1.xpose.msra.mxu0 0.0
        %2569 = vmatprep.subr.mxu0 0.0
        %2570 = vmatpush1.xpose.msra.mxu0 0.0
        %2571 = vmatprep.subr.mxu0 0.0
        %2572 = vmatpush1.xpose.msra.mxu0 0.0
        %2573 = vmatprep.subr.mxu0 0.0
        %2574 = vmatpush1.xpose.msra.mxu0 0.0
        %2575 = vmatprep.subr.mxu0 0.0
        %2576 = vmatpush1.xpose.msra.mxu0 0.0
        %2577 = vmatprep.subr.mxu0 0.0
        %2578 = vmatpush1.xpose.msra.mxu0 0.0
        %2579 = vmatprep.subr.mxu0 0.0
        %2580 = vmatpush1.xpose.msra.mxu0 0.0
        %2581 = vmatprep.subr.mxu0 0.0
        %2582 = vmatpush1.xpose.msra.mxu0 0.0
        %2583 = vmatprep.subr.mxu0 0.0
        %2584 = vmatpush1.xpose.msra.mxu0 0.0
        %2585 = vmatprep.subr.mxu0 0.0
        %2586 = vmatpush1.xpose.msra.mxu0 0.0
        %2587 = vmatprep.subr.mxu0 0.0
        %2588 = vmatpush1.xpose.msra.mxu0 0.0
        %2589 = vmatprep.subr.mxu0 0.0
        %2590 = vmatpush1.xpose.msra.mxu0 0.0
        %2591 = vmatprep.subr.mxu0 0.0
        %2592 = vmatpush1.xpose.msra.mxu0 0.0
        %2593 = vmatprep.subr.mxu0 0.0
        %2594 = vmatpush1.xpose.msra.mxu0 0.0
        %2595 = vmatprep.subr.mxu0 0.0
        %2596 = vmatpush1.xpose.msra.mxu0 0.0
        %2597 = vmatprep.mubr.f32.mxu0 0.0
        %2598 = vmatmul.mubr.f32.gmra.mrb[0].mxu0 %v2529
        %v2599 = vpop.f32.mrb[0].mxu0
        %v2600 = vadd.f32 %v1809, %v2599
        %v2601 = vpop.f32.mrb[0].mxu0
        %2602 = vdwg.mxu0
        %v2603 = vsel %vm852, %v2600, -inf
        %2604 = vmax.xlane.f32.xlu0 %v2603
        %v2605 = vpop.xlane.xlu0 %2604
        %v2606 = vsub.f32 %v2600, %v2605
        %v2607 = vmul.f32 %v2606, 1.442695
        %v2608 = vpow.pop %v2607
        %v2609 = vsel %vm852, %v2608, 0.0
        %2610 = vadd.xlane.f32.xlu0 %v2609
        %v2611 = vpop.xlane.xlu0 %2610
        %v2612 = vrcp.pop %v2611
        %v2613 = vmul.f32 %v2608, %v2612
        %2614 = vrot.lane.b32.xlu0 %v826, 40
        %v2615 = vpop.permute.xlu0 %2614
        %v2618 = vsel %vm852, %v2613, 0
        %2620 = vmatprep.subr.mxu0 0.0
        %2621 = vmatpush1.msra.mxu0 %v2615
        %2622 = vmatprep.subr.mxu0 0.0
        %2623 = vmatpush1.msra.mxu0 0.0
        %2624 = vmatprep.subr.mxu0 0.0
        %2625 = vmatpush1.msra.mxu0 0.0
        %2626 = vmatprep.subr.mxu0 0.0
        %2627 = vmatpush1.msra.mxu0 0.0
        %2628 = vmatprep.subr.mxu0 0.0
        %2629 = vmatpush1.msra.mxu0 0.0
        %2630 = vmatprep.subr.mxu0 0.0
        %2631 = vmatpush1.msra.mxu0 0.0
        %2632 = vmatprep.subr.mxu0 0.0
        %2633 = vmatpush1.msra.mxu0 0.0
        %2634 = vmatprep.subr.mxu0 0.0
        %2635 = vmatpush1.msra.mxu0 0.0
        %2636 = vmatprep.subr.mxu0 0.0
        %2637 = vmatpush1.msra.mxu0 0.0
        %2638 = vmatprep.subr.mxu0 0.0
        %2639 = vmatpush1.msra.mxu0 0.0
        %2640 = vmatprep.subr.mxu0 0.0
        %2641 = vmatpush1.msra.mxu0 0.0
        %2642 = vmatprep.subr.mxu0 0.0
        %2643 = vmatpush1.msra.mxu0 0.0
        %2644 = vmatprep.subr.mxu0 0.0
        %2645 = vmatpush1.msra.mxu0 0.0
        %2646 = vmatprep.subr.mxu0 0.0
        %2647 = vmatpush1.msra.mxu0 0.0
        %2648 = vmatprep.subr.mxu0 0.0
        %2649 = vmatpush1.msra.mxu0 0.0
        %2650 = vmatprep.subr.mxu0 0.0
        %2651 = vmatpush1.msra.mxu0 0.0
        %2652 = vmatprep.subr.mxu0 0.0
        %2653 = vmatpush1.msra.mxu0 0.0
        %2654 = vmatprep.subr.mxu0 0.0
        %2655 = vmatpush1.msra.mxu0 0.0
        %2656 = vmatprep.subr.mxu0 0.0
        %2657 = vmatpush1.msra.mxu0 0.0
        %2658 = vmatprep.subr.mxu0 0.0
        %2659 = vmatpush1.msra.mxu0 0.0
        %2660 = vmatprep.subr.mxu0 0.0
        %2661 = vmatpush1.msra.mxu0 0.0
        %2662 = vmatprep.subr.mxu0 0.0
        %2663 = vmatpush1.msra.mxu0 0.0
        %2664 = vmatprep.subr.mxu0 0.0
        %2665 = vmatpush1.msra.mxu0 0.0
        %2666 = vmatprep.subr.mxu0 0.0
        %2667 = vmatpush1.msra.mxu0 0.0
        %2668 = vmatprep.subr.mxu0 0.0
        %2669 = vmatpush1.msra.mxu0 0.0
        %2670 = vmatprep.subr.mxu0 0.0
        %2671 = vmatpush1.msra.mxu0 0.0
        %2672 = vmatprep.subr.mxu0 0.0
        %2673 = vmatpush1.msra.mxu0 0.0
        %2674 = vmatprep.subr.mxu0 0.0
        %2675 = vmatpush1.msra.mxu0 0.0
        %2676 = vmatprep.subr.mxu0 0.0
        %2677 = vmatpush1.msra.mxu0 0.0
        %2678 = vmatprep.subr.mxu0 0.0
        %2679 = vmatpush1.msra.mxu0 0.0
        %2680 = vmatprep.subr.mxu0 0.0
        %2681 = vmatpush1.msra.mxu0 0.0
        %2682 = vmatprep.subr.mxu0 0.0
        %2683 = vmatpush1.msra.mxu0 0.0
        %2684 = vmatprep.mubr.f32.mxu0 0.0
        %2685 = vmatmul.mubr.f32.gmra.mrb[0].mxu0 %v2618
        %v2686 = vpop.f32.mrb[0].mxu0
        %v2687 = vadd.f32 0.0, %v2686
        %v2688 = vpop.f32.mrb[0].mxu0
        %2689 = vdwg.mxu0
        %v2691 = vsel %vm852, %v2687, 0
        %2693 = vmatprep.subr.mxu0 0.0
        %2694 = vmatpush1.msra.mxu0 %v843
        %2695 = vmatprep.subr.mxu0 0.0
        %2696 = vmatpush1.msra.mxu0 0.0
        %2697 = vmatprep.subr.mxu0 0.0
        %2698 = vmatpush1.msra.mxu0 0.0
        %2699 = vmatprep.subr.mxu0 0.0
        %2700 = vmatpush1.msra.mxu0 0.0
        %2701 = vmatprep.subr.mxu0 0.0
        %2702 = vmatpush1.msra.mxu0 0.0
        %2703 = vmatprep.subr.mxu0 0.0
        %2704 = vmatpush1.msra.mxu0 0.0
        %2705 = vmatprep.subr.mxu0 0.0
        %2706 = vmatpush1.msra.mxu0 0.0
        %2707 = vmatprep.subr.mxu0 0.0
        %2708 = vmatpush1.msra.mxu0 0.0
        %2709 = vmatprep.subr.mxu0 0.0
        %2710 = vmatpush1.msra.mxu0 0.0
        %2711 = vmatprep.subr.mxu0 0.0
        %2712 = vmatpush1.msra.mxu0 0.0
        %2713 = vmatprep.subr.mxu0 0.0
        %2714 = vmatpush1.msra.mxu0 0.0
        %2715 = vmatprep.subr.mxu0 0.0
        %2716 = vmatpush1.msra.mxu0 0.0
        %2717 = vmatprep.subr.mxu0 0.0
        %2718 = vmatpush1.msra.mxu0 0.0
        %2719 = vmatprep.subr.mxu0 0.0
        %2720 = vmatpush1.msra.mxu0 0.0
        %2721 = vmatprep.subr.mxu0 0.0
        %2722 = vmatpush1.msra.mxu0 0.0
        %2723 = vmatprep.subr.mxu0 0.0
        %2724 = vmatpush1.msra.mxu0 0.0
        %2725 = vmatprep.subr.mxu0 0.0
        %2726 = vmatpush1.msra.mxu0 0.0
        %2727 = vmatprep.subr.mxu0 0.0
        %2728 = vmatpush1.msra.mxu0 0.0
        %2729 = vmatprep.subr.mxu0 0.0
        %2730 = vmatpush1.msra.mxu0 0.0
        %2731 = vmatprep.subr.mxu0 0.0
        %2732 = vmatpush1.msra.mxu0 0.0
        %2733 = vmatprep.subr.mxu0 0.0
        %2734 = vmatpush1.msra.mxu0 0.0
        %2735 = vmatprep.subr.mxu0 0.0
        %2736 = vmatpush1.msra.mxu0 0.0
        %2737 = vmatprep.subr.mxu0 0.0
        %2738 = vmatpush1.msra.mxu0 0.0
        %2739 = vmatprep.subr.mxu0 0.0
        %2740 = vmatpush1.msra.mxu0 0.0
        %2741 = vmatprep.subr.mxu0 0.0
        %2742 = vmatpush1.msra.mxu0 0.0
        %2743 = vmatprep.subr.mxu0 0.0
        %2744 = vmatpush1.msra.mxu0 0.0
        %2745 = vmatprep.subr.mxu0 0.0
        %2746 = vmatpush1.msra.mxu0 0.0
        %2747 = vmatprep.subr.mxu0 0.0
        %2748 = vmatpush1.msra.mxu0 0.0
        %2749 = vmatprep.subr.mxu0 0.0
        %2750 = vmatpush1.msra.mxu0 0.0
        %2751 = vmatprep.subr.mxu0 0.0
        %2752 = vmatpush1.msra.mxu0 0.0
        %2753 = vmatprep.subr.mxu0 0.0
        %2754 = vmatpush1.msra.mxu0 0.0
        %2755 = vmatprep.subr.mxu0 0.0
        %2756 = vmatpush1.msra.mxu0 0.0
        %2757 = vmatprep.mubr.f32.mxu0 0.0
        %2758 = vmatmul.mubr.f32.gmra.mrb[0].mxu0 %v2691
        %v2759 = vpop.f32.mrb[0].mxu0
        %v2760 = vadd.f32 0.0, %v2759
        %v2761 = vpop.f32.mrb[0].mxu0
        %2762 = vdwg.mxu0
        %v2763 = vadd.f32 %v2524, %v2760
        %2764 = vst.msk [vmem:[#allocation2 + $0x8] sm:$0xff] %vm693, %v2763
        %v2765 = vld [vmem:[#allocation2] sm:$0xff]
        %v2766 = vld [vmem:[#allocation2 + $0x8] sm:$0xff]
        %v2767 = vadd.f32 %v689, %v2765
        %v2768 = vadd.f32 %v690, %v2766
        %v2769 = vld [vmem:[%s657] sm:$0x1]
        %v2771 = vlaneseq
        %v2772 = vshrl.u32 %v2771, 7
        %v2773 = vsub.s32 0, %v2772
        %v2774 = vrot.slane %v2769, %v2773
        %v2776 = vadd.f32 %v2767, %v2774
        %v2777 = vadd.f32 %v2768, %v2774
        %v2778 = vld [vmem:[%s660] sm:$0x1]
        %v2779 = vld [vmem:[%s663] sm:$0x1]
        %v2780 = vsel %vm693, %v2776, 0.0
        %2781 = vadd.xlane.f32.xlu0 %v2780
        %v2782 = vpop.xlane.xlu0 %2781
        %v2783 = vsel %vm693, %v2777, 0.0
        %2784 = vadd.xlane.f32.xlu0 %v2783
        %v2785 = vpop.xlane.xlu0 %2784
        %v2786 = vmul.f32 %v2782, %v700
        %v2787 = vmul.f32 %v2785, %v700
        %v2788 = vsub.f32 %v2776, %v2786
        %v2789 = vsub.f32 %v2777, %v2787
        %v2790 = vmul.f32 %v2788, %v2788
        %v2791 = vmul.f32 %v2789, %v2789
        %v2792 = vsel %vm693, %v2790, 0.0
        %2793 = vadd.xlane.f32.xlu0 %v2792
        %v2794 = vpop.xlane.xlu0 %2793
        %v2795 = vsel %vm693, %v2791, 0.0
        %2796 = vadd.xlane.f32.xlu0 %v2795
        %v2797 = vpop.xlane.xlu0 %2796
        %v2798 = vmul.f32 %v2794, %v700
        %v2799 = vmul.f32 %v2797, %v700
        %v2800 = vadd.f32 %v2798, 1e-05
        %v2801 = vadd.f32 %v2799, 1e-05
        %v2802 = vrsqrt.pop %v2800
        %v2803 = vrsqrt.pop %v2801
        %v2804 = vmul.f32 %v2788, %v2802
        %v2805 = vmul.f32 %v2789, %v2803
        %v2807 = vlaneseq
        %v2808 = vshrl.u32 %v2807, 7
        %v2809 = vsub.s32 0, %v2808
        %v2810 = vrot.slane %v2778, %v2809
        %v2812 = vmul.f32 %v2804, %v2810
        %v2813 = vmul.f32 %v2805, %v2810
        %v2815 = vlaneseq
        %v2816 = vshrl.u32 %v2815, 7
        %v2817 = vsub.s32 0, %v2816
        %v2818 = vrot.slane %v2779, %v2817
        %v2820 = vadd.f32 %v2812, %v2818
        %v2821 = vadd.f32 %v2813, %v2818
        %v2822 = vld [vmem:[%s668] sm:$0xff]
        %v2823 = vld [vmem:[%s668 + $0x8] sm:$0xff]
        %v2824 = vld [vmem:[%s668 + $0x10] sm:$0xff]
        %v2825 = vld [vmem:[%s668 + $0x18] sm:$0xff]
        %v2826 = vld [vmem:[%s671] sm:$0x1]
        %v2828 = vlaneseq
        %v2829 = vshrl.u32 %v2828, 7
        %v2830 = vsub.s32 0, %v2829
        %v2831 = vrot.slane %v2826, %v2830
        %v2834 = vsel %vm693, %v2820, 0
        %v2837 = vsel %vm693, %v2821, 0
        %2839 = vmatprep.subr.mxu0 0.0
        %2840 = vmatpush1.msra.mxu0 %v2822
        %2841 = vmatprep.subr.mxu0 0.0
        %2842 = vmatpush1.msra.mxu0 %v2823
        %2843 = vmatprep.subr.mxu0 0.0
        %2844 = vmatpush1.msra.mxu0 %v2824
        %2845 = vmatprep.subr.mxu0 0.0
        %2846 = vmatpush1.msra.mxu0 %v2825
        %2847 = vmatprep.subr.mxu0 0.0
        %2848 = vmatpush1.msra.mxu0 0.0
        %2849 = vmatprep.subr.mxu0 0.0
        %2850 = vmatpush1.msra.mxu0 0.0
        %2851 = vmatprep.subr.mxu0 0.0
        %2852 = vmatpush1.msra.mxu0 0.0
        %2853 = vmatprep.subr.mxu0 0.0
        %2854 = vmatpush1.msra.mxu0 0.0
        %2855 = vmatprep.subr.mxu0 0.0
        %2856 = vmatpush1.msra.mxu0 0.0
        %2857 = vmatprep.subr.mxu0 0.0
        %2858 = vmatpush1.msra.mxu0 0.0
        %2859 = vmatprep.subr.mxu0 0.0
        %2860 = vmatpush1.msra.mxu0 0.0
        %2861 = vmatprep.subr.mxu0 0.0
        %2862 = vmatpush1.msra.mxu0 0.0
        %2863 = vmatprep.subr.mxu0 0.0
        %2864 = vmatpush1.msra.mxu0 0.0
        %2865 = vmatprep.subr.mxu0 0.0
        %2866 = vmatpush1.msra.mxu0 0.0
        %2867 = vmatprep.subr.mxu0 0.0
        %2868 = vmatpush1.msra.mxu0 0.0
        %2869 = vmatprep.subr.mxu0 0.0
        %2870 = vmatpush1.msra.mxu0 0.0
        %2871 = vmatprep.subr.mxu0 0.0
        %2872 = vmatpush1.msra.mxu0 0.0
        %2873 = vmatprep.subr.mxu0 0.0
        %2874 = vmatpush1.msra.mxu0 0.0
        %2875 = vmatprep.subr.mxu0 0.0
        %2876 = vmatpush1.msra.mxu0 0.0
        %2877 = vmatprep.subr.mxu0 0.0
        %2878 = vmatpush1.msra.mxu0 0.0
        %2879 = vmatprep.subr.mxu0 0.0
        %2880 = vmatpush1.msra.mxu0 0.0
        %2881 = vmatprep.subr.mxu0 0.0
        %2882 = vmatpush1.msra.mxu0 0.0
        %2883 = vmatprep.subr.mxu0 0.0
        %2884 = vmatpush1.msra.mxu0 0.0
        %2885 = vmatprep.subr.mxu0 0.0
        %2886 = vmatpush1.msra.mxu0 0.0
        %2887 = vmatprep.subr.mxu0 0.0
        %2888 = vmatpush1.msra.mxu0 0.0
        %2889 = vmatprep.subr.mxu0 0.0
        %2890 = vmatpush1.msra.mxu0 0.0
        %2891 = vmatprep.subr.mxu0 0.0
        %2892 = vmatpush1.msra.mxu0 0.0
        %2893 = vmatprep.subr.mxu0 0.0
        %2894 = vmatpush1.msra.mxu0 0.0
        %2895 = vmatprep.subr.mxu0 0.0
        %2896 = vmatpush1.msra.mxu0 0.0
        %2897 = vmatprep.subr.mxu0 0.0
        %2898 = vmatpush1.msra.mxu0 0.0
        %2899 = vmatprep.subr.mxu0 0.0
        %2900 = vmatpush1.msra.mxu0 0.0
        %2901 = vmatprep.subr.mxu0 0.0
        %2902 = vmatpush1.msra.mxu0 0.0
        %2903 = vmatprep.mubr.f32.mxu0 0.0
        %2904 = vmatmul.mubr.f32.gmra.mrb[0].mxu0 %v2834
        %v2905 = vpop.f32.mrb[0].mxu0
        %v2906 = vadd.f32 %v2831, %v2905
        %v2907 = vpop.f32.mrb[0].mxu0
        %2908 = vmatprep.mubr.f32.mxu0 0.0
        %2909 = vmatmul.mubr.f32.gmra.mrb[0].mxu0 %v2837
        %v2910 = vpop.f32.mrb[0].mxu0
        %v2911 = vadd.f32 %v2831, %v2910
        %v2912 = vpop.f32.mrb[0].mxu0
        %2913 = vdwg.mxu0
        %v2914 = vmul.f32 %v2906, 1.702
        %v2915 = vmul.f32 %v2911, 1.702
        %v2916 = vxor.u32 %v2914, 2147483648
        %v2917 = vxor.u32 %v2915, 2147483648
        %v2918 = vmul.f32 %v2916, 1.442695
        %v2919 = vpow.pop %v2918
        %v2920 = vmul.f32 %v2917, 1.442695
        %v2921 = vpow.pop %v2920
        %v2922 = vadd.f32 %v2919, 1.0
        %v2923 = vadd.f32 %v2921, 1.0
        %v2924 = vrcp.pop %v2922
        %v2925 = vmul.f32 1.0, %v2924
        %v2926 = vrcp.pop %v2923
        %v2927 = vmul.f32 1.0, %v2926
        %v2928 = vmul.f32 %v2906, %v2925
        %v2929 = vmul.f32 %v2911, %v2927
        %v2930 = vld [vmem:[%s676] sm:$0xff]
        %v2931 = vld [vmem:[%s676 + $0x8] sm:$0xff]
        %v2932 = vld [vmem:[%s676 + $0x10] sm:$0xff]
        %v2933 = vld [vmem:[%s676 + $0x18] sm:$0xff]
        %v2934 = vld [vmem:[%s676 + $0x20] sm:$0xff]
        %v2935 = vld [vmem:[%s676 + $0x28] sm:$0xff]
        %v2936 = vld [vmem:[%s676 + $0x30] sm:$0xff]
        %v2937 = vld [vmem:[%s676 + $0x38] sm:$0xff]
        %v2938 = vld [vmem:[%s676 + $0x40] sm:$0xff]
        %v2939 = vld [vmem:[%s676 + $0x48] sm:$0xff]
        %v2940 = vld [vmem:[%s676 + $0x50] sm:$0xff]
        %v2941 = vld [vmem:[%s676 + $0x58] sm:$0xff]
        %v2942 = vld [vmem:[%s676 + $0x60] sm:$0xff]
        %v2943 = vld [vmem:[%s676 + $0x68] sm:$0xff]
        %v2944 = vld [vmem:[%s676 + $0x70] sm:$0xff]
        %v2945 = vld [vmem:[%s676 + $0x78] sm:$0xff]
        %2946 = vmatprep.subr.mxu0 0.0
        %2947 = vmatpush1.msra.mxu0 %v2930
        %2948 = vmatprep.subr.mxu0 0.0
        %2949 = vmatpush1.msra.mxu0 %v2931
        %2950 = vmatprep.subr.mxu0 0.0
        %2951 = vmatpush1.msra.mxu0 %v2932
        %2952 = vmatprep.subr.mxu0 0.0
        %2953 = vmatpush1.msra.mxu0 %v2933
        %2954 = vmatprep.subr.mxu0 0.0
        %2955 = vmatpush1.msra.mxu0 %v2934
        %2956 = vmatprep.subr.mxu0 0.0
        %2957 = vmatpush1.msra.mxu0 %v2935
        %2958 = vmatprep.subr.mxu0 0.0
        %2959 = vmatpush1.msra.mxu0 %v2936
        %2960 = vmatprep.subr.mxu0 0.0
        %2961 = vmatpush1.msra.mxu0 %v2937
        %2962 = vmatprep.subr.mxu0 0.0
        %2963 = vmatpush1.msra.mxu0 %v2938
        %2964 = vmatprep.subr.mxu0 0.0
        %2965 = vmatpush1.msra.mxu0 %v2939
        %2966 = vmatprep.subr.mxu0 0.0
        %2967 = vmatpush1.msra.mxu0 %v2940
        %2968 = vmatprep.subr.mxu0 0.0
        %2969 = vmatpush1.msra.mxu0 %v2941
        %2970 = vmatprep.subr.mxu0 0.0
        %2971 = vmatpush1.msra.mxu0 %v2942
        %2972 = vmatprep.subr.mxu0 0.0
        %2973 = vmatpush1.msra.mxu0 %v2943
        %2974 = vmatprep.subr.mxu0 0.0
        %2975 = vmatpush1.msra.mxu0 %v2944
        %2976 = vmatprep.subr.mxu0 0.0
        %2977 = vmatpush1.msra.mxu0 %v2945
        %2978 = vmatprep.subr.mxu0 0.0
        %2979 = vmatpush1.msra.mxu0 0.0
        %2980 = vmatprep.subr.mxu0 0.0
        %2981 = vmatpush1.msra.mxu0 0.0
        %2982 = vmatprep.subr.mxu0 0.0
        %2983 = vmatpush1.msra.mxu0 0.0
        %2984 = vmatprep.subr.mxu0 0.0
        %2985 = vmatpush1.msra.mxu0 0.0
        %2986 = vmatprep.subr.mxu0 0.0
        %2987 = vmatpush1.msra.mxu0 0.0
        %2988 = vmatprep.subr.mxu0 0.0
        %2989 = vmatpush1.msra.mxu0 0.0
        %2990 = vmatprep.subr.mxu0 0.0
        %2991 = vmatpush1.msra.mxu0 0.0
        %2992 = vmatprep.subr.mxu0 0.0
        %2993 = vmatpush1.msra.mxu0 0.0
        %2994 = vmatprep.subr.mxu0 0.0
        %2995 = vmatpush1.msra.mxu0 0.0
        %2996 = vmatprep.subr.mxu0 0.0
        %2997 = vmatpush1.msra.mxu0 0.0
        %2998 = vmatprep.subr.mxu0 0.0
        %2999 = vmatpush1.msra.mxu0 0.0
        %3000 = vmatprep.subr.mxu0 0.0
        %3001 = vmatpush1.msra.mxu0 0.0
        %3002 = vmatprep.subr.mxu0 0.0
        %3003 = vmatpush1.msra.mxu0 0.0
        %3004 = vmatprep.subr.mxu0 0.0
        %3005 = vmatpush1.msra.mxu0 0.0
        %3006 = vmatprep.subr.mxu0 0.0
        %3007 = vmatpush1.msra.mxu0 0.0
        %3008 = vmatprep.subr.mxu0 0.0
        %3009 = vmatpush1.msra.mxu0 0.0
        %3010 = vmatprep.mubr.f32.mxu0 0.0
        %3011 = vmatmul.mubr.f32.gmra.mrb[0].mxu0 %v2928
        %v3012 = vpop.f32.mrb[0].mxu0
        %v3013 = vadd.f32 0.0, %v3012
        %v3014 = vpop.f32.mrb[0].mxu0
        %3015 = vmatprep.mubr.f32.mxu0 0.0
        %3016 = vmatmul.mubr.f32.gmra.mrb[0].mxu0 %v2929
        %v3017 = vpop.f32.mrb[0].mxu0
        %v3018 = vadd.f32 0.0, %v3017
        %v3019 = vpop.f32.mrb[0].mxu0
        %3020 = vdwg.mxu0
        %v3021 = vadd.f32 %v2776, %v3013
        %v3022 = vadd.f32 %v2777, %v3018
        %v3023 = vld [vmem:[%s679] sm:$0x1]
        %v3025 = vlaneseq
        %v3026 = vshrl.u32 %v3025, 7
        %v3027 = vsub.s32 0, %v3026
        %v3028 = vrot.slane %v3023, %v3027
        %v3030 = vadd.f32 %v3021, %v3028
        %v3031 = vadd.f32 %v3022, %v3028
        %3032 = vst.msk [vmem:[#allocation3] sm:$0xff] %vm693, %v3030
        %3033 = vst.msk [vmem:[#allocation3 + $0x8] sm:$0xff] %vm693, %v3031
        %p3034 = scmp.eq.s32.totalorder %s28, 1
        // Predicated region
        $region89: #{text_encoder_forward.1} parent=83 // pred_check
          %p3035 = pneg %p3034
        $region90: #{text_encoder_forward.1} parent=83 // pred_check_branch
          %3037 = sbr.rel (%p3035) target = $region92
        $region91: #{text_encoder_forward.1} parent=83 // pred_region
          %v3038 = vld [vmem:[%s14] sm:$0x1]
          %v3039 = vld [vmem:[%s15] sm:$0x1]
          %v3040 = vsel %vm693, %v3030, 0.0
          %3041 = vadd.xlane.f32.xlu0 %v3040
          %v3042 = vpop.xlane.xlu0 %3041
          %v3043 = vsel %vm693, %v3031, 0.0
          %3044 = vadd.xlane.f32.xlu0 %v3043
          %v3045 = vpop.xlane.xlu0 %3044
          %v3046 = vmul.f32 %v3042, %v700
          %v3047 = vmul.f32 %v3045, %v700
          %v3048 = vsub.f32 %v3030, %v3046
          %v3049 = vsub.f32 %v3031, %v3047
          %v3050 = vmul.f32 %v3048, %v3048
          %v3051 = vmul.f32 %v3049, %v3049
          %v3052 = vsel %vm693, %v3050, 0.0
          %3053 = vadd.xlane.f32.xlu0 %v3052
          %v3054 = vpop.xlane.xlu0 %3053
          %v3055 = vsel %vm693, %v3051, 0.0
          %3056 = vadd.xlane.f32.xlu0 %v3055
          %v3057 = vpop.xlane.xlu0 %3056
          %v3058 = vmul.f32 %v3054, %v700
          %v3059 = vmul.f32 %v3057, %v700
          %v3060 = vadd.f32 %v3058, 1e-05
          %v3061 = vadd.f32 %v3059, 1e-05
          %v3062 = vrsqrt.pop %v3060
          %v3063 = vrsqrt.pop %v3061
          %v3064 = vmul.f32 %v3048, %v3062
          %v3065 = vmul.f32 %v3049, %v3063
          %v3067 = vlaneseq
          %v3068 = vshrl.u32 %v3067, 7
          %v3069 = vsub.s32 0, %v3068
          %v3070 = vrot.slane %v3038, %v3069
          %v3072 = vmul.f32 %v3064, %v3070
          %v3073 = vmul.f32 %v3065, %v3070
          %v3075 = vlaneseq
          %v3076 = vshrl.u32 %v3075, 7
          %v3077 = vsub.s32 0, %v3076
          %v3078 = vrot.slane %v3039, %v3077
          %v3080 = vadd.f32 %v3072, %v3078
          %v3081 = vadd.f32 %v3073, %v3078
          %3082 = vst.msk [vmem:[#allocation3] sm:$0xff] %vm693, %v3080
          %3083 = vst.msk [vmem:[#allocation3 + $0x8] sm:$0xff] %vm693, %v3081
        $region92: #{text_encoder_forward.1} parent=83 // pred_fallthru
          _
        // Predicated region
        $region93: #{text_encoder_forward.1} parent=83 // pred_check
          %p3084 = pneg %p437
        $region94: #{text_encoder_forward.1} parent=83 // pred_check_branch
          %3086 = sbr.rel (%p3084) target = $region96
        $region95: #{text_encoder_forward.1} parent=83 // pred_region
          %s3088 = ssub.s32 256, 256
          %3089 = vsyncadd [#allocation4], %s3088
          %s3090 = sshll.u32 [#allocation3], 4
          %s3091 = int_to_ptr.vmem [resolvable:$true] %s3090
          %3096 = dma.vmem_to_hbm [thread:$0]  %s3091, 256, %s16, [#allocation4], 128, 128, 8
        $region96: #{text_encoder_forward.1} parent=83 // pred_fallthru
          _
        // Predicated region
        $region97: #{text_encoder_forward.1} parent=83 // pred_check
          %p3097 = pneg %p437
        $region98: #{text_encoder_forward.1} parent=83 // pred_check_branch
          %3099 = sbr.rel (%p3097) target = $region100
        $region99: #{text_encoder_forward.1} parent=83 // pred_region
          %3100 = dma.done [#allocation4], 256
        $region100: #{text_encoder_forward.1} parent=83 // pred_fallthru
          _
      $region84: #{text_encoder_forward.1} parent=5 // pred_fallthru
        _
      %p3101 = scmp.le.s32.totalorder 2, %s23
      // Predicated region
      $region101: #{text_encoder_forward.1} parent=5 // pred_check
        %p3102 = pneg %p3101
      $region102: #{text_encoder_forward.1} parent=5 // pred_check_branch
        %3104 = sbr.rel (%p3102) target = $region104
      $region103: #{text_encoder_forward.1} parent=5 // pred_region
        %s3105 = ssub.s32 %s23, 2
      $region104: #{text_encoder_forward.1} parent=5 // pred_fallthru
        _
    $region6: #{text_encoder_forward.1} parent=1 // loop_footer
      %s27 = sadd.s32 1, %s23
    $region7: #{text_encoder_forward.1} parent=1 // loop_footer_branch
      %22 = sbr.rel target = $region3
    $region8: #{text_encoder_forward.1} parent=1 // loop_exit
      _
    %3106 = vsyncpa [#allocation4], 1
    %s3107 = scalar_lea.sflag [#allocation4], 1
    %3108 = vsyncpa %s3107, 1

</llo_original>
